<compile_context>
chip_gen: v5e
topology: v5e:2x2
jax: 0.10.0
libtpu: 0.0.40
codegen_flags: <defaults>
</compile_context>

<pallas_src>
import functools

import jax
import jax.numpy as jnp
from jax.experimental import pallas as pl
from jax.experimental.pallas import tpu as pltpu


# ----------------------------------------------------------------------------
# Small padding helpers (all zero-padding is mathematically exact, see above).
# ----------------------------------------------------------------------------
def _round_up(n, m):
    return ((n + m - 1) // m) * m


def _pad_axis(a, axis, new_size):
    if a.shape[axis] == new_size:
        return a
    pads = [(0, 0)] * a.ndim
    pads[axis] = (0, new_size - a.shape[axis])
    return jnp.pad(a, pads)


def _pad_gates(a, hid, hid_pad, axis=0):
    """`a` has 4*hid (PyTorch gate order i,f,g,o) along `axis`; pad each gate."""
    if hid == hid_pad:
        return a
    shp = list(a.shape)
    shp[axis:axis + 1] = [4, hid]
    a4 = a.reshape(shp)
    a4 = _pad_axis(a4, axis + 1, hid_pad)
    out_shp = list(a.shape)
    out_shp[axis] = 4 * hid_pad
    return a4.reshape(out_shp)


# ----------------------------------------------------------------------------
# Fused kernel: all LSTM layers + final fc, state resident in VMEM scratch.
# Grid: (batch_tiles [parallel], time_chunks [arbitrary/sequential]).
# ----------------------------------------------------------------------------
def _gate_nonlin(g, hid):
    """PyTorch gate order: i, f, g, o.  `hid` is the (128-aligned) padded H."""
    i = jax.nn.sigmoid(g[:, 0 * hid:1 * hid])
    f = jax.nn.sigmoid(g[:, 1 * hid:2 * hid])
    gg = jnp.tanh(g[:, 2 * hid:3 * hid])
    o = jax.nn.sigmoid(g[:, 3 * hid:4 * hid])
    return i, f, gg, o


def _fused_lstm_fc_kernel(num_layers, hid, t_chunk, seq_len, padded, *refs):
    if num_layers > 1:
        (xp_ref, whh1_ref, wih_d_ref, whh_d_ref, bd_ref,
         fcw_ref, fcb_ref, y_ref, h_scr, c_scr) = refs
    else:
        (xp_ref, whh1_ref, fcw_ref, fcb_ref, y_ref, h_scr, c_scr) = refs
        wih_d_ref = whh_d_ref = bd_ref = None

    c = pl.program_id(1)               # time-chunk index (sequential axis)

    @pl.when(c == 0)
    def _():                           # zero state at the start of each batch tile
        h_scr[...] = jnp.zeros_like(h_scr)
        c_scr[...] = jnp.zeros_like(c_scr)

    tb = h_scr.shape[1]

    # State lives in local values inside the unrolled loop; written back at end.
    hs = [h_scr[l] for l in range(num_layers)]
    cs = [c_scr[l] for l in range(num_layers)]

    # Perf review: hoist the deep-layer bias broadcast OUT of the time loop
    # (JAX does not CSE broadcast_in_dim -> one broadcast per grid step).
    bds = ([jnp.broadcast_to(bd_ref[l], (tb, bd_ref.shape[-1]))
            for l in range(num_layers - 1)] if num_layers > 1 else [])

    t0 = c * t_chunk

    # Static (fully unrolled) inner loop over timesteps of this chunk.
    # Invariant weights are read per use (spill-safe for large H).
    for tt in range(t_chunk):
        if padded:
            valid = (t0 + tt) < seq_len

        # Layer 0: input projection + biases precomputed in xp (hoisted);
        # only the recurrent Hp x 4Hp matmul remains per step.
        g = (xp_ref[:, tt, :].astype(jnp.float32)
             + jnp.dot(hs[0].astype(jnp.bfloat16), whh1_ref[...],
                       preferred_element_type=jnp.float32))
        i, f, gg, o = _gate_nonlin(g, hid)
        c_new = f * cs[0] + i * gg
        h_new = o * jnp.tanh(c_new)
        if padded:
            cs[0] = jnp.where(valid, c_new, cs[0])
            hs[0] = jnp.where(valid, h_new, hs[0])
        else:
            cs[0] = c_new
            hs[0] = h_new

        # Deeper layers: two dots accumulated into one gate tensor
        # (no per-step concatenate copy).
        for l in range(1, num_layers):
            g = (jnp.dot(hs[l - 1].astype(jnp.bfloat16), wih_d_ref[l - 1],
                         preferred_element_type=jnp.float32)
                 + jnp.dot(hs[l].astype(jnp.bfloat16), whh_d_ref[l - 1],
                           preferred_element_type=jnp.float32)
                 + bds[l - 1])
            i, f, gg, o = _gate_nonlin(g, hid)
            c_new = f * cs[l] + i * gg
            h_new = o * jnp.tanh(c_new)
            if padded:
                cs[l] = jnp.where(valid, c_new, cs[l])
                hs[l] = jnp.where(valid, h_new, hs[l])
            else:
                cs[l] = c_new
                hs[l] = h_new

    for l in range(num_layers):
        h_scr[l] = hs[l]
        c_scr[l] = cs[l]

    # Fused final projection: only the last hidden state is consumed, so emit
    # fc(h_n[-1]) once on the last time chunk.  Output is 128-lane padded so
    # the store is a full, unmasked vst.
    @pl.when(c == pl.num_programs(1) - 1)
    def _():
        y_ref[...] = (jnp.dot(hs[-1].astype(jnp.bfloat16), fcw_ref[...],
                              preferred_element_type=jnp.float32)
                      + fcb_ref[...])


def _pick_t_chunk(seq_len, cap=32):
    """Return (t_chunk, padded_seq_len).

    Prefers a multiple-of-8 chunk <= cap dividing seq_len; otherwise pads the
    sequence (masked in-kernel) instead of one giant chunk."""
    if seq_len <= cap:
        return seq_len, seq_len
    for t in range(cap - cap % 8, 7, -8):
        if seq_len % t == 0:
            return t, seq_len
    t = cap - cap % 8
    return t, _round_up(seq_len, t)


def _pick_batch_tile(batch):
    """Largest multiple of 8 dividing batch with >= 2 tiles (v7x megacore);
    otherwise the full batch (maximize per-step matmul M on 1-TC chips)."""
    best = None
    for tb in range(8, batch // 2 + 1, 8):
        if batch % tb == 0:
            best = tb
    return best if best is not None else batch


# ----------------------------------------------------------------------------
# Full module forward.
# ----------------------------------------------------------------------------
@functools.partial(jax.jit, static_argnames=("pred_len",))
def lstm_forward(x, params, pred_len):
    """x: (batch, seq_len, input_dim) -> (batch, pred_len, input_dim)."""
    batch, seq_len, _ = x.shape
    layers = params["lstm"]
    num_layers = len(layers)
    hid = layers[0]["w_hh"].shape[1]
    out_dim = params["fc_w"].shape[0]

    hid_pad = _round_up(hid, 128)        # lane-aligned gate slices (exact pad)
    out_pad = _round_up(out_dim, 128)    # lane-dense output store

    # --- Layer 0: hoisted input projection over ALL timesteps (one big
    #     matmul in XLA), both biases folded in.  Padded gate columns get a
    #     zero pre-activation, keeping padded h/c exactly zero.
    l0 = layers[0]
    w_ih0 = _pad_gates(l0["w_ih"], hid, hid_pad, axis=0)          # (4Hp, D)
    b0 = _pad_gates(l0["b_ih"] + l0["b_hh"], hid, hid_pad, axis=0)  # (4Hp,)
    xp = (jnp.einsum("bsd,gd->bsg", x, w_ih0,
                     preferred_element_type=jnp.float32) + b0)     # (B,S,4Hp)

    whh1_t = _pad_axis(_pad_gates(l0["w_hh"], hid, hid_pad, axis=0),
                       1, hid_pad).T.astype(jnp.bfloat16)          # (Hp,4Hp)

    fc_w_p = _pad_axis(_pad_axis(params["fc_w"], 1, hid_pad), 0, out_pad)
    fcw_t = fc_w_p.T.astype(jnp.bfloat16)                          # (Hp,outp)
    fcb = _pad_axis(params["fc_b"], 0, out_pad).reshape(1, out_pad)

    if num_layers > 1:
        wih_deep = jnp.stack([
            _pad_axis(_pad_gates(lyr["w_ih"], hid, hid_pad, axis=0), 1, hid_pad).T
            for lyr in layers[1:]]).astype(jnp.bfloat16)           # (L-1,Hp,4Hp)
        whh_deep = jnp.stack([
            _pad_axis(_pad_gates(lyr["w_hh"], hid, hid_pad, axis=0), 1, hid_pad).T
            for lyr in layers[1:]]).astype(jnp.bfloat16)           # (L-1,Hp,4Hp)
        b_deep = jnp.stack([
            _pad_gates(lyr["b_ih"] + lyr["b_hh"], hid, hid_pad,
                       axis=0).reshape(1, 4 * hid_pad)
            for lyr in layers[1:]])                                # (L-1,1,4Hp) f32

    # Time chunking (padded + masked if seq_len has no nice divisor).
    t_chunk, seq_pad = _pick_t_chunk(seq_len, cap=32)
    padded = seq_pad != seq_len
    if padded:
        xp = _pad_axis(xp, 1, seq_pad)
    num_chunks = seq_pad // t_chunk

    # bf16 xp stream: halves HBM DMA bytes for the dominant recurrent input
    # read (binding resource on v5e).  Accumulation stays f32 in-kernel.
    xp = xp.astype(jnp.bfloat16)

    tb = _pick_batch_tile(batch)
    nbt = batch // tb

    const2d = lambda bi, c: (0, 0)
    const3d = lambda bi, c: (0, 0, 0)

    # NOTE(v7x, large H): add pipeline_mode=pl.Buffered(1) to these
    # constant-index weight specs to drop the unused second buffer.
    in_specs = [
        pl.BlockSpec((tb, t_chunk, 4 * hid_pad), lambda bi, c: (bi, c, 0)),
        pl.BlockSpec((hid_pad, 4 * hid_pad), const2d),
    ]
    operands = [xp, whh1_t]
    if num_layers > 1:
        in_specs += [
            pl.BlockSpec((num_layers - 1, hid_pad, 4 * hid_pad), const3d),
            pl.BlockSpec((num_layers - 1, hid_pad, 4 * hid_pad), const3d),
            pl.BlockSpec((num_layers - 1, 1, 4 * hid_pad), const3d),
        ]
        operands += [wih_deep, whh_deep, b_deep]
    in_specs += [
        pl.BlockSpec((hid_pad, out_pad), const2d),
        pl.BlockSpec((1, out_pad), const2d),
    ]
    operands += [fcw_t, fcb]

    y = pl.pallas_call(
        functools.partial(_fused_lstm_fc_kernel, num_layers, hid_pad,
                          t_chunk, seq_len, padded),
        out_shape=jax.ShapeDtypeStruct((batch, out_pad), jnp.float32),
        grid_spec=pltpu.PrefetchScalarGridSpec(
            num_scalar_prefetch=0,
            grid=(nbt, num_chunks),
            in_specs=in_specs,
            out_specs=pl.BlockSpec((tb, out_pad), lambda bi, c: (bi, 0)),
            scratch_shapes=[
                pltpu.VMEM((num_layers, tb, hid_pad), jnp.float32),  # h state
                pltpu.VMEM((num_layers, tb, hid_pad), jnp.float32),  # c state
            ],
        ),
        compiler_params=pltpu.CompilerParams(
            dimension_semantics=("parallel", "arbitrary"),
            vmem_limit_bytes=64 * 1024 * 1024),
    )(*operands)                                              # (B, out_pad)

    y = y[:, :out_dim]
    # .view(B,1,H).repeat(1,pred_len,1) then fc  ==  fc once, then tile.
    return jnp.broadcast_to(y[:, None, :], (batch, pred_len, out_dim))


def init_params(key, input_dim, hidden_dim, num_layers):
    """Deterministic init mirroring nn.LSTM / nn.Linear shapes."""
    bound = 1.0 / jnp.sqrt(jnp.float32(hidden_dim))
    layers = []
    for l in range(num_layers):
        in_dim = input_dim if l == 0 else hidden_dim
        key, k1, k2, k3, k4 = jax.random.split(key, 5)
        layers.append({
            "w_ih": jax.random.uniform(k1, (4 * hidden_dim, in_dim),
                                       jnp.float32, -bound, bound),
            "w_hh": jax.random.uniform(k2, (4 * hidden_dim, hidden_dim),
                                       jnp.float32, -bound, bound),
            "b_ih": jax.random.uniform(k3, (4 * hidden_dim,),
                                       jnp.float32, -bound, bound),
            "b_hh": jax.random.uniform(k4, (4 * hidden_dim,),
                                       jnp.float32, -bound, bound),
        })
    key, k5, k6 = jax.random.split(key, 3)
    fc_bound = 1.0 / jnp.sqrt(jnp.float32(hidden_dim))
    return {
        "lstm": layers,
        "fc_w": jax.random.uniform(k5, (input_dim, hidden_dim),
                                   jnp.float32, -fc_bound, fc_bound),
        "fc_b": jax.random.uniform(k6, (input_dim,),
                                   jnp.float32, -fc_bound, fc_bound),
    }


# ----------------------------------------------------------------------------
# Pure-JAX f32 reference (for correctness check).
# ----------------------------------------------------------------------------
def lstm_forward_ref(x, params, pred_len):
    batch = x.shape[0]
    h_seq = x
    for layer in params["lstm"]:
        hid = layer["w_hh"].shape[1]
        h = jnp.zeros((batch, hid), jnp.float32)
        c = jnp.zeros((batch, hid), jnp.float32)
        outs = []
        for t in range(h_seq.shape[1]):
            gates = (h_seq[:, t] @ layer["w_ih"].T + layer["b_ih"]
                     + h @ layer["w_hh"].T + layer["b_hh"])
            i = jax.nn.sigmoid(gates[:, 0 * hid:1 * hid])
            f = jax.nn.sigmoid(gates[:, 1 * hid:2 * hid])
            g = jnp.tanh(gates[:, 2 * hid:3 * hid])
            o = jax.nn.sigmoid(gates[:, 3 * hid:4 * hid])
            c = f * c + i * g
            h = o * jnp.tanh(c)
            outs.append(h)
        h_seq = jnp.stack(outs, axis=1)
    h_last = h_seq[:, -1]
    y = h_last @ params["fc_w"].T + params["fc_b"]
    return jnp.broadcast_to(y[:, None, :], (batch, pred_len, y.shape[-1]))


if __name__ == "__main__":
    # Small shapes consistent with the module's forward.
    batch, seq_len, pred_len = 2, 8, 4
    input_dim, hidden_dim, num_layers = 4, 32, 2

    key = jax.random.PRNGKey(0)
    key, kx, kp = jax.random.split(key, 3)
    x = jax.random.normal(kx, (batch, seq_len, input_dim), jnp.float32)
    params = init_params(kp, input_dim, hidden_dim, num_layers)

    out = jax.block_until_ready(lstm_forward(x, params, pred_len))
    assert out.shape == (batch, pred_len, input_dim), out.shape

    ref = lstm_forward_ref(x, params, pred_len)
    # bf16 weights / xp stream (f32 accumulation) -> loosened tolerance.
    assert jnp.allclose(out, ref, atol=3e-2, rtol=3e-2), (
        "mismatch vs reference", float(jnp.abs(out - ref).max()))

    print("KERNEL_OK")
</pallas_src>

<mosaic_0001>
module attributes {stable_mosaic.version = 11 : i64} {
  func.func @_fused_lstm_fc_kernel(%arg0: i32, %arg1: i32, %arg2: memref<2x8x512xbf16, #tpu.memory_space<vmem>>, %arg3: memref<128x512xbf16, #tpu.memory_space<vmem>>, %arg4: memref<1x128x512xbf16, #tpu.memory_space<vmem>>, %arg5: memref<1x128x512xbf16, #tpu.memory_space<vmem>>, %arg6: memref<1x1x512xf32, #tpu.memory_space<vmem>>, %arg7: memref<128x128xbf16, #tpu.memory_space<vmem>>, %arg8: memref<1x128xf32, #tpu.memory_space<vmem>>, %arg9: memref<2x128xf32, #tpu.memory_space<vmem>>, %arg10: memref<2x2x128xf32, #tpu.memory_space<vmem>>, %arg11: memref<2x2x128xf32, #tpu.memory_space<vmem>>) attributes {dimension_semantics = [#tpu.dimension_semantics<parallel>, #tpu.dimension_semantics<arbitrary>], iteration_bounds = array<i64: 1, 1>, scalar_prefetch = 0 : i64, scratch_operands = 2 : i64, tpu.core_type = #tpu.core_type<tc>, window_params = [{transform_indices = @transform_0, window_bounds = array<i64: 2, 8, 512>}, {pipeline_mode = #tpu.pipeline_mode<synchronous>, transform_indices = @transform_1, window_bounds = array<i64: 128, 512>}, {pipeline_mode = #tpu.pipeline_mode<synchronous>, transform_indices = @transform_2, window_bounds = array<i64: 1, 128, 512>}, {pipeline_mode = #tpu.pipeline_mode<synchronous>, transform_indices = @transform_3, window_bounds = array<i64: 1, 128, 512>}, {pipeline_mode = #tpu.pipeline_mode<synchronous>, transform_indices = @transform_4, window_bounds = array<i64: 1, 1, 512>}, {pipeline_mode = #tpu.pipeline_mode<synchronous>, transform_indices = @transform_5, window_bounds = array<i64: 128, 128>}, {pipeline_mode = #tpu.pipeline_mode<synchronous>, transform_indices = @transform_6, window_bounds = array<i64: 1, 128>}, {transform_indices = @transform_7, window_bounds = array<i64: 2, 128>}]} {
    %c0_i32 = arith.constant 0 : i32
    %0 = arith.cmpi eq, %arg1, %c0_i32 : i32
    %1 = arith.extui %0 : i1 to i32
    %c0_i32_0 = arith.constant 0 : i32
    %2 = arith.cmpi ne, %1, %c0_i32_0 : i32
    scf.if %2 {
      %cst_181 = arith.constant 0.000000e+00 : f32
      %566 = vector.broadcast %cst_181 : f32 to vector<2x2x128xf32>
      %c0_182 = arith.constant 0 : index
      %c0_183 = arith.constant 0 : index
      %c0_184 = arith.constant 0 : index
      %567 = vector.load %arg10[%c0_182, %c0_183, %c0_184] : memref<2x2x128xf32, #tpu.memory_space<vmem>>, vector<2x2x128xf32>
      tpu.vector_store %arg10[%c0_182, %c0_183, %c0_184], %566 {strides = array<i32>} : memref<2x2x128xf32, #tpu.memory_space<vmem>>, vector<2x2x128xf32>,
      %cst_185 = arith.constant 0.000000e+00 : f32
      %568 = vector.broadcast %cst_185 : f32 to vector<2x2x128xf32>
      %c0_186 = arith.constant 0 : index
      %c0_187 = arith.constant 0 : index
      %c0_188 = arith.constant 0 : index
      %569 = vector.load %arg11[%c0_186, %c0_187, %c0_188] : memref<2x2x128xf32, #tpu.memory_space<vmem>>, vector<2x2x128xf32>
      tpu.vector_store %arg11[%c0_186, %c0_187, %c0_188], %568 {strides = array<i32>} : memref<2x2x128xf32, #tpu.memory_space<vmem>>, vector<2x2x128xf32>,
    } else {
    }
    %c0 = arith.constant 0 : index
    %c0_1 = arith.constant 0 : index
    %c0_2 = arith.constant 0 : index
    %3 = vector.load %arg10[%c0, %c0_1, %c0_2] : memref<2x2x128xf32, #tpu.memory_space<vmem>>, vector<1x2x128xf32>
    %4 = vector.shape_cast %3 : vector<1x2x128xf32> to vector<2x128xf32>
    %c1 = arith.constant 1 : index
    %c0_3 = arith.constant 0 : index
    %c0_4 = arith.constant 0 : index
    %5 = vector.load %arg10[%c1, %c0_3, %c0_4] : memref<2x2x128xf32, #tpu.memory_space<vmem>>, vector<1x2x128xf32>
    %6 = vector.shape_cast %5 : vector<1x2x128xf32> to vector<2x128xf32>
    %c0_5 = arith.constant 0 : index
    %c0_6 = arith.constant 0 : index
    %c0_7 = arith.constant 0 : index
    %7 = vector.load %arg11[%c0_5, %c0_6, %c0_7] : memref<2x2x128xf32, #tpu.memory_space<vmem>>, vector<1x2x128xf32>
    %8 = vector.shape_cast %7 : vector<1x2x128xf32> to vector<2x128xf32>
    %c1_8 = arith.constant 1 : index
    %c0_9 = arith.constant 0 : index
    %c0_10 = arith.constant 0 : index
    %9 = vector.load %arg11[%c1_8, %c0_9, %c0_10] : memref<2x2x128xf32, #tpu.memory_space<vmem>>, vector<1x2x128xf32>
    %10 = vector.shape_cast %9 : vector<1x2x128xf32> to vector<2x128xf32>
    %c0_11 = arith.constant 0 : index
    %c0_12 = arith.constant 0 : index
    %c0_13 = arith.constant 0 : index
    %11 = vector.load %arg6[%c0_11, %c0_12, %c0_13] : memref<1x1x512xf32, #tpu.memory_space<vmem>>, vector<1x1x512xf32>
    %12 = vector.shape_cast %11 : vector<1x1x512xf32> to vector<1x512xf32>
    %13 = vector.shape_cast %12 : vector<1x512xf32> to vector<1x512xf32>
    %14 = vector.broadcast %13 : vector<1x512xf32> to vector<2x512xf32>
    %c0_14 = arith.constant 0 : index
    %c0_15 = arith.constant 0 : index
    %c0_16 = arith.constant 0 : index
    %15 = vector.load %arg2[%c0_14, %c0_15, %c0_16] : memref<2x8x512xbf16, #tpu.memory_space<vmem>>, vector<2x1x512xbf16>
    %16 = vector.shape_cast %15 : vector<2x1x512xbf16> to vector<2x512xbf16>
    %17 = arith.extf %16 : vector<2x512xbf16> to vector<2x512xf32>
    %18 = arith.truncf %4 : vector<2x128xf32> to vector<2x128xbf16>
    %c0_17 = arith.constant 0 : index
    %c0_18 = arith.constant 0 : index
    %19 = vector.load %arg3[%c0_17, %c0_18] : memref<128x512xbf16, #tpu.memory_space<vmem>>, vector<128x512xbf16>
    %cst = arith.constant dense<0.000000e+00> : vector<2x512xf32>
    %20 = tpu.matmul %18, %19, %cst {dimension_numbers = #tpu.dot_dimension_numbers<[1], [0], [0], [1], [0, 0, 1, 1], [], []>} : vector<2x128xbf16>, vector<128x512xbf16>, vector<2x512xf32> -> vector<2x512xf32>
    %21 = arith.addf %17, %20 : vector<2x512xf32>
    %22 = vector.extract_strided_slice %21 {offsets = [0, 0], sizes = [2, 128], strides = [1, 1]} : vector<2x512xf32> to vector<2x128xf32>
    %23 = arith.negf %22 : vector<2x128xf32>
    %24 = math.exp %23 : vector<2x128xf32>
    %cst_19 = arith.constant 1.000000e+00 : f32
    %25 = vector.broadcast %cst_19 : f32 to vector<2x128xf32>
    %26 = arith.addf %25, %24 : vector<2x128xf32>
    %27 = arith.divf %25, %26 : vector<2x128xf32>
    %28 = vector.extract_strided_slice %21 {offsets = [0, 128], sizes = [2, 128], strides = [1, 1]} : vector<2x512xf32> to vector<2x128xf32>
    %29 = arith.negf %28 : vector<2x128xf32>
    %30 = math.exp %29 : vector<2x128xf32>
    %cst_20 = arith.constant 1.000000e+00 : f32
    %31 = vector.broadcast %cst_20 : f32 to vector<2x128xf32>
    %32 = arith.addf %31, %30 : vector<2x128xf32>
    %33 = arith.divf %31, %32 : vector<2x128xf32>
    %34 = vector.extract_strided_slice %21 {offsets = [0, 256], sizes = [2, 128], strides = [1, 1]} : vector<2x512xf32> to vector<2x128xf32>
    %35 = math.tanh %34 : vector<2x128xf32>
    %36 = vector.extract_strided_slice %21 {offsets = [0, 384], sizes = [2, 128], strides = [1, 1]} : vector<2x512xf32> to vector<2x128xf32>
    %37 = arith.negf %36 : vector<2x128xf32>
    %38 = math.exp %37 : vector<2x128xf32>
    %cst_21 = arith.constant 1.000000e+00 : f32
    %39 = vector.broadcast %cst_21 : f32 to vector<2x128xf32>
    %40 = arith.addf %39, %38 : vector<2x128xf32>
    %41 = arith.divf %39, %40 : vector<2x128xf32>
    %42 = arith.mulf %33, %8 : vector<2x128xf32>
    %43 = arith.mulf %27, %35 : vector<2x128xf32>
    %44 = arith.addf %42, %43 : vector<2x128xf32>
    %45 = math.tanh %44 : vector<2x128xf32>
    %46 = arith.mulf %41, %45 : vector<2x128xf32>
    %47 = arith.truncf %46 : vector<2x128xf32> to vector<2x128xbf16>
    %c0_22 = arith.constant 0 : index
    %c0_23 = arith.constant 0 : index
    %c0_24 = arith.constant 0 : index
    %48 = vector.load %arg4[%c0_22, %c0_23, %c0_24] : memref<1x128x512xbf16, #tpu.memory_space<vmem>>, vector<1x128x512xbf16>
    %49 = vector.shape_cast %48 : vector<1x128x512xbf16> to vector<128x512xbf16>
    %cst_25 = arith.constant dense<0.000000e+00> : vector<2x512xf32>
    %50 = tpu.matmul %47, %49, %cst_25 {dimension_numbers = #tpu.dot_dimension_numbers<[1], [0], [0], [1], [0, 0, 1, 1], [], []>} : vector<2x128xbf16>, vector<128x512xbf16>, vector<2x512xf32> -> vector<2x512xf32>
    %51 = arith.truncf %6 : vector<2x128xf32> to vector<2x128xbf16>
    %c0_26 = arith.constant 0 : index
    %c0_27 = arith.constant 0 : index
    %c0_28 = arith.constant 0 : index
    %52 = vector.load %arg5[%c0_26, %c0_27, %c0_28] : memref<1x128x512xbf16, #tpu.memory_space<vmem>>, vector<1x128x512xbf16>
    %53 = vector.shape_cast %52 : vector<1x128x512xbf16> to vector<128x512xbf16>
    %cst_29 = arith.constant dense<0.000000e+00> : vector<2x512xf32>
    %54 = tpu.matmul %51, %53, %cst_29 {dimension_numbers = #tpu.dot_dimension_numbers<[1], [0], [0], [1], [0, 0, 1, 1], [], []>} : vector<2x128xbf16>, vector<128x512xbf16>, vector<2x512xf32> -> vector<2x512xf32>
    %55 = arith.addf %50, %54 : vector<2x512xf32>
    %56 = arith.addf %55, %14 : vector<2x512xf32>
    %57 = vector.extract_strided_slice %56 {offsets = [0, 0], sizes = [2, 128], strides = [1, 1]} : vector<2x512xf32> to vector<2x128xf32>
    %58 = arith.negf %57 : vector<2x128xf32>
    %59 = math.exp %58 : vector<2x128xf32>
    %cst_30 = arith.constant 1.000000e+00 : f32
    %60 = vector.broadcast %cst_30 : f32 to vector<2x128xf32>
    %61 = arith.addf %60, %59 : vector<2x128xf32>
    %62 = arith.divf %60, %61 : vector<2x128xf32>
    %63 = vector.extract_strided_slice %56 {offsets = [0, 128], sizes = [2, 128], strides = [1, 1]} : vector<2x512xf32> to vector<2x128xf32>
    %64 = arith.negf %63 : vector<2x128xf32>
    %65 = math.exp %64 : vector<2x128xf32>
    %cst_31 = arith.constant 1.000000e+00 : f32
    %66 = vector.broadcast %cst_31 : f32 to vector<2x128xf32>
    %67 = arith.addf %66, %65 : vector<2x128xf32>
    %68 = arith.divf %66, %67 : vector<2x128xf32>
    %69 = vector.extract_strided_slice %56 {offsets = [0, 256], sizes = [2, 128], strides = [1, 1]} : vector<2x512xf32> to vector<2x128xf32>
    %70 = math.tanh %69 : vector<2x128xf32>
    %71 = vector.extract_strided_slice %56 {offsets = [0, 384], sizes = [2, 128], strides = [1, 1]} : vector<2x512xf32> to vector<2x128xf32>
    %72 = arith.negf %71 : vector<2x128xf32>
    %73 = math.exp %72 : vector<2x128xf32>
    %cst_32 = arith.constant 1.000000e+00 : f32
    %74 = vector.broadcast %cst_32 : f32 to vector<2x128xf32>
    %75 = arith.addf %74, %73 : vector<2x128xf32>
    %76 = arith.divf %74, %75 : vector<2x128xf32>
    %77 = arith.mulf %68, %10 : vector<2x128xf32>
    %78 = arith.mulf %62, %70 : vector<2x128xf32>
    %79 = arith.addf %77, %78 : vector<2x128xf32>
    %80 = math.tanh %79 : vector<2x128xf32>
    %81 = arith.mulf %76, %80 : vector<2x128xf32>
    %c0_33 = arith.constant 0 : index
    %c1_34 = arith.constant 1 : index
    %c0_35 = arith.constant 0 : index
    %82 = vector.load %arg2[%c0_33, %c1_34, %c0_35] : memref<2x8x512xbf16, #tpu.memory_space<vmem>>, vector<2x1x512xbf16>
    %83 = vector.shape_cast %82 : vector<2x1x512xbf16> to vector<2x512xbf16>
    %84 = arith.extf %83 : vector<2x512xbf16> to vector<2x512xf32>
    %85 = arith.truncf %46 : vector<2x128xf32> to vector<2x128xbf16>
    %c0_36 = arith.constant 0 : index
    %c0_37 = arith.constant 0 : index
    %86 = vector.load %arg3[%c0_36, %c0_37] : memref<128x512xbf16, #tpu.memory_space<vmem>>, vector<128x512xbf16>
    %cst_38 = arith.constant dense<0.000000e+00> : vector<2x512xf32>
    %87 = tpu.matmul %85, %86, %cst_38 {dimension_numbers = #tpu.dot_dimension_numbers<[1], [0], [0], [1], [0, 0, 1, 1], [], []>} : vector<2x128xbf16>, vector<128x512xbf16>, vector<2x512xf32> -> vector<2x512xf32>
    %88 = arith.addf %84, %87 : vector<2x512xf32>
    %89 = vector.extract_strided_slice %88 {offsets = [0, 0], sizes = [2, 128], strides = [1, 1]} : vector<2x512xf32> to vector<2x128xf32>
    %90 = arith.negf %89 : vector<2x128xf32>
    %91 = math.exp %90 : vector<2x128xf32>
    %cst_39 = arith.constant 1.000000e+00 : f32
    %92 = vector.broadcast %cst_39 : f32 to vector<2x128xf32>
    %93 = arith.addf %92, %91 : vector<2x128xf32>
    %94 = arith.divf %92, %93 : vector<2x128xf32>
    %95 = vector.extract_strided_slice %88 {offsets = [0, 128], sizes = [2, 128], strides = [1, 1]} : vector<2x512xf32> to vector<2x128xf32>
    %96 = arith.negf %95 : vector<2x128xf32>
    %97 = math.exp %96 : vector<2x128xf32>
    %cst_40 = arith.constant 1.000000e+00 : f32
    %98 = vector.broadcast %cst_40 : f32 to vector<2x128xf32>
    %99 = arith.addf %98, %97 : vector<2x128xf32>
    %100 = arith.divf %98, %99 : vector<2x128xf32>
    %101 = vector.extract_strided_slice %88 {offsets = [0, 256], sizes = [2, 128], strides = [1, 1]} : vector<2x512xf32> to vector<2x128xf32>
    %102 = math.tanh %101 : vector<2x128xf32>
    %103 = vector.extract_strided_slice %88 {offsets = [0, 384], sizes = [2, 128], strides = [1, 1]} : vector<2x512xf32> to vector<2x128xf32>
    %104 = arith.negf %103 : vector<2x128xf32>
    %105 = math.exp %104 : vector<2x128xf32>
    %cst_41 = arith.constant 1.000000e+00 : f32
    %106 = vector.broadcast %cst_41 : f32 to vector<2x128xf32>
    %107 = arith.addf %106, %105 : vector<2x128xf32>
    %108 = arith.divf %106, %107 : vector<2x128xf32>
    %109 = arith.mulf %100, %44 : vector<2x128xf32>
    %110 = arith.mulf %94, %102 : vector<2x128xf32>
    %111 = arith.addf %109, %110 : vector<2x128xf32>
    %112 = math.tanh %111 : vector<2x128xf32>
    %113 = arith.mulf %108, %112 : vector<2x128xf32>
    %114 = arith.truncf %113 : vector<2x128xf32> to vector<2x128xbf16>
    %c0_42 = arith.constant 0 : index
    %c0_43 = arith.constant 0 : index
    %c0_44 = arith.constant 0 : index
    %115 = vector.load %arg4[%c0_42, %c0_43, %c0_44] : memref<1x128x512xbf16, #tpu.memory_space<vmem>>, vector<1x128x512xbf16>
    %116 = vector.shape_cast %115 : vector<1x128x512xbf16> to vector<128x512xbf16>
    %cst_45 = arith.constant dense<0.000000e+00> : vector<2x512xf32>
    %117 = tpu.matmul %114, %116, %cst_45 {dimension_numbers = #tpu.dot_dimension_numbers<[1], [0], [0], [1], [0, 0, 1, 1], [], []>} : vector<2x128xbf16>, vector<128x512xbf16>, vector<2x512xf32> -> vector<2x512xf32>
    %118 = arith.truncf %81 : vector<2x128xf32> to vector<2x128xbf16>
    %c0_46 = arith.constant 0 : index
    %c0_47 = arith.constant 0 : index
    %c0_48 = arith.constant 0 : index
    %119 = vector.load %arg5[%c0_46, %c0_47, %c0_48] : memref<1x128x512xbf16, #tpu.memory_space<vmem>>, vector<1x128x512xbf16>
    %120 = vector.shape_cast %119 : vector<1x128x512xbf16> to vector<128x512xbf16>
    %cst_49 = arith.constant dense<0.000000e+00> : vector<2x512xf32>
    %121 = tpu.matmul %118, %120, %cst_49 {dimension_numbers = #tpu.dot_dimension_numbers<[1], [0], [0], [1], [0, 0, 1, 1], [], []>} : vector<2x128xbf16>, vector<128x512xbf16>, vector<2x512xf32> -> vector<2x512xf32>
    %122 = arith.addf %117, %121 : vector<2x512xf32>
    %123 = arith.addf %122, %14 : vector<2x512xf32>
    %124 = vector.extract_strided_slice %123 {offsets = [0, 0], sizes = [2, 128], strides = [1, 1]} : vector<2x512xf32> to vector<2x128xf32>
    %125 = arith.negf %124 : vector<2x128xf32>
    %126 = math.exp %125 : vector<2x128xf32>
    %cst_50 = arith.constant 1.000000e+00 : f32
    %127 = vector.broadcast %cst_50 : f32 to vector<2x128xf32>
    %128 = arith.addf %127, %126 : vector<2x128xf32>
    %129 = arith.divf %127, %128 : vector<2x128xf32>
    %130 = vector.extract_strided_slice %123 {offsets = [0, 128], sizes = [2, 128], strides = [1, 1]} : vector<2x512xf32> to vector<2x128xf32>
    %131 = arith.negf %130 : vector<2x128xf32>
    %132 = math.exp %131 : vector<2x128xf32>
    %cst_51 = arith.constant 1.000000e+00 : f32
    %133 = vector.broadcast %cst_51 : f32 to vector<2x128xf32>
    %134 = arith.addf %133, %132 : vector<2x128xf32>
    %135 = arith.divf %133, %134 : vector<2x128xf32>
    %136 = vector.extract_strided_slice %123 {offsets = [0, 256], sizes = [2, 128], strides = [1, 1]} : vector<2x512xf32> to vector<2x128xf32>
    %137 = math.tanh %136 : vector<2x128xf32>
    %138 = vector.extract_strided_slice %123 {offsets = [0, 384], sizes = [2, 128], strides = [1, 1]} : vector<2x512xf32> to vector<2x128xf32>
    %139 = arith.negf %138 : vector<2x128xf32>
    %140 = math.exp %139 : vector<2x128xf32>
    %cst_52 = arith.constant 1.000000e+00 : f32
    %141 = vector.broadcast %cst_52 : f32 to vector<2x128xf32>
    %142 = arith.addf %141, %140 : vector<2x128xf32>
    %143 = arith.divf %141, %142 : vector<2x128xf32>
    %144 = arith.mulf %135, %79 : vector<2x128xf32>
    %145 = arith.mulf %129, %137 : vector<2x128xf32>
    %146 = arith.addf %144, %145 : vector<2x128xf32>
    %147 = math.tanh %146 : vector<2x128xf32>
    %148 = arith.mulf %143, %147 : vector<2x128xf32>
    %c0_53 = arith.constant 0 : index
    %c2 = arith.constant 2 : index
    %c0_54 = arith.constant 0 : index
    %149 = vector.load %arg2[%c0_53, %c2, %c0_54] : memref<2x8x512xbf16, #tpu.memory_space<vmem>>, vector<2x1x512xbf16>
    %150 = vector.shape_cast %149 : vector<2x1x512xbf16> to vector<2x512xbf16>
    %151 = arith.extf %150 : vector<2x512xbf16> to vector<2x512xf32>
    %152 = arith.truncf %113 : vector<2x128xf32> to vector<2x128xbf16>
    %c0_55 = arith.constant 0 : index
    %c0_56 = arith.constant 0 : index
    %153 = vector.load %arg3[%c0_55, %c0_56] : memref<128x512xbf16, #tpu.memory_space<vmem>>, vector<128x512xbf16>
    %cst_57 = arith.constant dense<0.000000e+00> : vector<2x512xf32>
    %154 = tpu.matmul %152, %153, %cst_57 {dimension_numbers = #tpu.dot_dimension_numbers<[1], [0], [0], [1], [0, 0, 1, 1], [], []>} : vector<2x128xbf16>, vector<128x512xbf16>, vector<2x512xf32> -> vector<2x512xf32>
    %155 = arith.addf %151, %154 : vector<2x512xf32>
    %156 = vector.extract_strided_slice %155 {offsets = [0, 0], sizes = [2, 128], strides = [1, 1]} : vector<2x512xf32> to vector<2x128xf32>
    %157 = arith.negf %156 : vector<2x128xf32>
    %158 = math.exp %157 : vector<2x128xf32>
    %cst_58 = arith.constant 1.000000e+00 : f32
    %159 = vector.broadcast %cst_58 : f32 to vector<2x128xf32>
    %160 = arith.addf %159, %158 : vector<2x128xf32>
    %161 = arith.divf %159, %160 : vector<2x128xf32>
    %162 = vector.extract_strided_slice %155 {offsets = [0, 128], sizes = [2, 128], strides = [1, 1]} : vector<2x512xf32> to vector<2x128xf32>
    %163 = arith.negf %162 : vector<2x128xf32>
    %164 = math.exp %163 : vector<2x128xf32>
    %cst_59 = arith.constant 1.000000e+00 : f32
    %165 = vector.broadcast %cst_59 : f32 to vector<2x128xf32>
    %166 = arith.addf %165, %164 : vector<2x128xf32>
    %167 = arith.divf %165, %166 : vector<2x128xf32>
    %168 = vector.extract_strided_slice %155 {offsets = [0, 256], sizes = [2, 128], strides = [1, 1]} : vector<2x512xf32> to vector<2x128xf32>
    %169 = math.tanh %168 : vector<2x128xf32>
    %170 = vector.extract_strided_slice %155 {offsets = [0, 384], sizes = [2, 128], strides = [1, 1]} : vector<2x512xf32> to vector<2x128xf32>
    %171 = arith.negf %170 : vector<2x128xf32>
    %172 = math.exp %171 : vector<2x128xf32>
    %cst_60 = arith.constant 1.000000e+00 : f32
    %173 = vector.broadcast %cst_60 : f32 to vector<2x128xf32>
    %174 = arith.addf %173, %172 : vector<2x128xf32>
    %175 = arith.divf %173, %174 : vector<2x128xf32>
    %176 = arith.mulf %167, %111 : vector<2x128xf32>
    %177 = arith.mulf %161, %169 : vector<2x128xf32>
    %178 = arith.addf %176, %177 : vector<2x128xf32>
    %179 = math.tanh %178 : vector<2x128xf32>
    %180 = arith.mulf %175, %179 : vector<2x128xf32>
    %181 = arith.truncf %180 : vector<2x128xf32> to vector<2x128xbf16>
    %c0_61 = arith.constant 0 : index
    %c0_62 = arith.constant 0 : index
    %c0_63 = arith.constant 0 : index
    %182 = vector.load %arg4[%c0_61, %c0_62, %c0_63] : memref<1x128x512xbf16, #tpu.memory_space<vmem>>, vector<1x128x512xbf16>
    %183 = vector.shape_cast %182 : vector<1x128x512xbf16> to vector<128x512xbf16>
    %cst_64 = arith.constant dense<0.000000e+00> : vector<2x512xf32>
    %184 = tpu.matmul %181, %183, %cst_64 {dimension_numbers = #tpu.dot_dimension_numbers<[1], [0], [0], [1], [0, 0, 1, 1], [], []>} : vector<2x128xbf16>, vector<128x512xbf16>, vector<2x512xf32> -> vector<2x512xf32>
    %185 = arith.truncf %148 : vector<2x128xf32> to vector<2x128xbf16>
    %c0_65 = arith.constant 0 : index
    %c0_66 = arith.constant 0 : index
    %c0_67 = arith.constant 0 : index
    %186 = vector.load %arg5[%c0_65, %c0_66, %c0_67] : memref<1x128x512xbf16, #tpu.memory_space<vmem>>, vector<1x128x512xbf16>
    %187 = vector.shape_cast %186 : vector<1x128x512xbf16> to vector<128x512xbf16>
    %cst_68 = arith.constant dense<0.000000e+00> : vector<2x512xf32>
    %188 = tpu.matmul %185, %187, %cst_68 {dimension_numbers = #tpu.dot_dimension_numbers<[1], [0], [0], [1], [0, 0, 1, 1], [], []>} : vector<2x128xbf16>, vector<128x512xbf16>, vector<2x512xf32> -> vector<2x512xf32>
    %189 = arith.addf %184, %188 : vector<2x512xf32>
    %190 = arith.addf %189, %14 : vector<2x512xf32>
    %191 = vector.extract_strided_slice %190 {offsets = [0, 0], sizes = [2, 128], strides = [1, 1]} : vector<2x512xf32> to vector<2x128xf32>
    %192 = arith.negf %191 : vector<2x128xf32>
    %193 = math.exp %192 : vector<2x128xf32>
    %cst_69 = arith.constant 1.000000e+00 : f32
    %194 = vector.broadcast %cst_69 : f32 to vector<2x128xf32>
    %195 = arith.addf %194, %193 : vector<2x128xf32>
    %196 = arith.divf %194, %195 : vector<2x128xf32>
    %197 = vector.extract_strided_slice %190 {offsets = [0, 128], sizes = [2, 128], strides = [1, 1]} : vector<2x512xf32> to vector<2x128xf32>
    %198 = arith.negf %197 : vector<2x128xf32>
    %199 = math.exp %198 : vector<2x128xf32>
    %cst_70 = arith.constant 1.000000e+00 : f32
    %200 = vector.broadcast %cst_70 : f32 to vector<2x128xf32>
    %201 = arith.addf %200, %199 : vector<2x128xf32>
    %202 = arith.divf %200, %201 : vector<2x128xf32>
    %203 = vector.extract_strided_slice %190 {offsets = [0, 256], sizes = [2, 128], strides = [1, 1]} : vector<2x512xf32> to vector<2x128xf32>
    %204 = math.tanh %203 : vector<2x128xf32>
    %205 = vector.extract_strided_slice %190 {offsets = [0, 384], sizes = [2, 128], strides = [1, 1]} : vector<2x512xf32> to vector<2x128xf32>
    %206 = arith.negf %205 : vector<2x128xf32>
    %207 = math.exp %206 : vector<2x128xf32>
    %cst_71 = arith.constant 1.000000e+00 : f32
    %208 = vector.broadcast %cst_71 : f32 to vector<2x128xf32>
    %209 = arith.addf %208, %207 : vector<2x128xf32>
    %210 = arith.divf %208, %209 : vector<2x128xf32>
    %211 = arith.mulf %202, %146 : vector<2x128xf32>
    %212 = arith.mulf %196, %204 : vector<2x128xf32>
    %213 = arith.addf %211, %212 : vector<2x128xf32>
    %214 = math.tanh %213 : vector<2x128xf32>
    %215 = arith.mulf %210, %214 : vector<2x128xf32>
    %c0_72 = arith.constant 0 : index
    %c3 = arith.constant 3 : index
    %c0_73 = arith.constant 0 : index
    %216 = vector.load %arg2[%c0_72, %c3, %c0_73] : memref<2x8x512xbf16, #tpu.memory_space<vmem>>, vector<2x1x512xbf16>
    %217 = vector.shape_cast %216 : vector<2x1x512xbf16> to vector<2x512xbf16>
    %218 = arith.extf %217 : vector<2x512xbf16> to vector<2x512xf32>
    %219 = arith.truncf %180 : vector<2x128xf32> to vector<2x128xbf16>
    %c0_74 = arith.constant 0 : index
    %c0_75 = arith.constant 0 : index
    %220 = vector.load %arg3[%c0_74, %c0_75] : memref<128x512xbf16, #tpu.memory_space<vmem>>, vector<128x512xbf16>
    %cst_76 = arith.constant dense<0.000000e+00> : vector<2x512xf32>
    %221 = tpu.matmul %219, %220, %cst_76 {dimension_numbers = #tpu.dot_dimension_numbers<[1], [0], [0], [1], [0, 0, 1, 1], [], []>} : vector<2x128xbf16>, vector<128x512xbf16>, vector<2x512xf32> -> vector<2x512xf32>
    %222 = arith.addf %218, %221 : vector<2x512xf32>
    %223 = vector.extract_strided_slice %222 {offsets = [0, 0], sizes = [2, 128], strides = [1, 1]} : vector<2x512xf32> to vector<2x128xf32>
    %224 = arith.negf %223 : vector<2x128xf32>
    %225 = math.exp %224 : vector<2x128xf32>
    %cst_77 = arith.constant 1.000000e+00 : f32
    %226 = vector.broadcast %cst_77 : f32 to vector<2x128xf32>
    %227 = arith.addf %226, %225 : vector<2x128xf32>
    %228 = arith.divf %226, %227 : vector<2x128xf32>
    %229 = vector.extract_strided_slice %222 {offsets = [0, 128], sizes = [2, 128], strides = [1, 1]} : vector<2x512xf32> to vector<2x128xf32>
    %230 = arith.negf %229 : vector<2x128xf32>
    %231 = math.exp %230 : vector<2x128xf32>
    %cst_78 = arith.constant 1.000000e+00 : f32
    %232 = vector.broadcast %cst_78 : f32 to vector<2x128xf32>
    %233 = arith.addf %232, %231 : vector<2x128xf32>
    %234 = arith.divf %232, %233 : vector<2x128xf32>
    %235 = vector.extract_strided_slice %222 {offsets = [0, 256], sizes = [2, 128], strides = [1, 1]} : vector<2x512xf32> to vector<2x128xf32>
    %236 = math.tanh %235 : vector<2x128xf32>
    %237 = vector.extract_strided_slice %222 {offsets = [0, 384], sizes = [2, 128], strides = [1, 1]} : vector<2x512xf32> to vector<2x128xf32>
    %238 = arith.negf %237 : vector<2x128xf32>
    %239 = math.exp %238 : vector<2x128xf32>
    %cst_79 = arith.constant 1.000000e+00 : f32
    %240 = vector.broadcast %cst_79 : f32 to vector<2x128xf32>
    %241 = arith.addf %240, %239 : vector<2x128xf32>
    %242 = arith.divf %240, %241 : vector<2x128xf32>
    %243 = arith.mulf %234, %178 : vector<2x128xf32>
    %244 = arith.mulf %228, %236 : vector<2x128xf32>
    %245 = arith.addf %243, %244 : vector<2x128xf32>
    %246 = math.tanh %245 : vector<2x128xf32>
    %247 = arith.mulf %242, %246 : vector<2x128xf32>
    %248 = arith.truncf %247 : vector<2x128xf32> to vector<2x128xbf16>
    %c0_80 = arith.constant 0 : index
    %c0_81 = arith.constant 0 : index
    %c0_82 = arith.constant 0 : index
    %249 = vector.load %arg4[%c0_80, %c0_81, %c0_82] : memref<1x128x512xbf16, #tpu.memory_space<vmem>>, vector<1x128x512xbf16>
    %250 = vector.shape_cast %249 : vector<1x128x512xbf16> to vector<128x512xbf16>
    %cst_83 = arith.constant dense<0.000000e+00> : vector<2x512xf32>
    %251 = tpu.matmul %248, %250, %cst_83 {dimension_numbers = #tpu.dot_dimension_numbers<[1], [0], [0], [1], [0, 0, 1, 1], [], []>} : vector<2x128xbf16>, vector<128x512xbf16>, vector<2x512xf32> -> vector<2x512xf32>
    %252 = arith.truncf %215 : vector<2x128xf32> to vector<2x128xbf16>
    %c0_84 = arith.constant 0 : index
    %c0_85 = arith.constant 0 : index
    %c0_86 = arith.constant 0 : index
    %253 = vector.load %arg5[%c0_84, %c0_85, %c0_86] : memref<1x128x512xbf16, #tpu.memory_space<vmem>>, vector<1x128x512xbf16>
    %254 = vector.shape_cast %253 : vector<1x128x512xbf16> to vector<128x512xbf16>
    %cst_87 = arith.constant dense<0.000000e+00> : vector<2x512xf32>
    %255 = tpu.matmul %252, %254, %cst_87 {dimension_numbers = #tpu.dot_dimension_numbers<[1], [0], [0], [1], [0, 0, 1, 1], [], []>} : vector<2x128xbf16>, vector<128x512xbf16>, vector<2x512xf32> -> vector<2x512xf32>
    %256 = arith.addf %251, %255 : vector<2x512xf32>
    %257 = arith.addf %256, %14 : vector<2x512xf32>
    %258 = vector.extract_strided_slice %257 {offsets = [0, 0], sizes = [2, 128], strides = [1, 1]} : vector<2x512xf32> to vector<2x128xf32>
    %259 = arith.negf %258 : vector<2x128xf32>
    %260 = math.exp %259 : vector<2x128xf32>
    %cst_88 = arith.constant 1.000000e+00 : f32
    %261 = vector.broadcast %cst_88 : f32 to vector<2x128xf32>
    %262 = arith.addf %261, %260 : vector<2x128xf32>
    %263 = arith.divf %261, %262 : vector<2x128xf32>
    %264 = vector.extract_strided_slice %257 {offsets = [0, 128], sizes = [2, 128], strides = [1, 1]} : vector<2x512xf32> to vector<2x128xf32>
    %265 = arith.negf %264 : vector<2x128xf32>
    %266 = math.exp %265 : vector<2x128xf32>
    %cst_89 = arith.constant 1.000000e+00 : f32
    %267 = vector.broadcast %cst_89 : f32 to vector<2x128xf32>
    %268 = arith.addf %267, %266 : vector<2x128xf32>
    %269 = arith.divf %267, %268 : vector<2x128xf32>
    %270 = vector.extract_strided_slice %257 {offsets = [0, 256], sizes = [2, 128], strides = [1, 1]} : vector<2x512xf32> to vector<2x128xf32>
    %271 = math.tanh %270 : vector<2x128xf32>
    %272 = vector.extract_strided_slice %257 {offsets = [0, 384], sizes = [2, 128], strides = [1, 1]} : vector<2x512xf32> to vector<2x128xf32>
    %273 = arith.negf %272 : vector<2x128xf32>
    %274 = math.exp %273 : vector<2x128xf32>
    %cst_90 = arith.constant 1.000000e+00 : f32
    %275 = vector.broadcast %cst_90 : f32 to vector<2x128xf32>
    %276 = arith.addf %275, %274 : vector<2x128xf32>
    %277 = arith.divf %275, %276 : vector<2x128xf32>
    %278 = arith.mulf %269, %213 : vector<2x128xf32>
    %279 = arith.mulf %263, %271 : vector<2x128xf32>
    %280 = arith.addf %278, %279 : vector<2x128xf32>
    %281 = math.tanh %280 : vector<2x128xf32>
    %282 = arith.mulf %277, %281 : vector<2x128xf32>
    %c0_91 = arith.constant 0 : index
    %c4 = arith.constant 4 : index
    %c0_92 = arith.constant 0 : index
    %283 = vector.load %arg2[%c0_91, %c4, %c0_92] : memref<2x8x512xbf16, #tpu.memory_space<vmem>>, vector<2x1x512xbf16>
    %284 = vector.shape_cast %283 : vector<2x1x512xbf16> to vector<2x512xbf16>
    %285 = arith.extf %284 : vector<2x512xbf16> to vector<2x512xf32>
    %286 = arith.truncf %247 : vector<2x128xf32> to vector<2x128xbf16>
    %c0_93 = arith.constant 0 : index
    %c0_94 = arith.constant 0 : index
    %287 = vector.load %arg3[%c0_93, %c0_94] : memref<128x512xbf16, #tpu.memory_space<vmem>>, vector<128x512xbf16>
    %cst_95 = arith.constant dense<0.000000e+00> : vector<2x512xf32>
    %288 = tpu.matmul %286, %287, %cst_95 {dimension_numbers = #tpu.dot_dimension_numbers<[1], [0], [0], [1], [0, 0, 1, 1], [], []>} : vector<2x128xbf16>, vector<128x512xbf16>, vector<2x512xf32> -> vector<2x512xf32>
    %289 = arith.addf %285, %288 : vector<2x512xf32>
    %290 = vector.extract_strided_slice %289 {offsets = [0, 0], sizes = [2, 128], strides = [1, 1]} : vector<2x512xf32> to vector<2x128xf32>
    %291 = arith.negf %290 : vector<2x128xf32>
    %292 = math.exp %291 : vector<2x128xf32>
    %cst_96 = arith.constant 1.000000e+00 : f32
    %293 = vector.broadcast %cst_96 : f32 to vector<2x128xf32>
    %294 = arith.addf %293, %292 : vector<2x128xf32>
    %295 = arith.divf %293, %294 : vector<2x128xf32>
    %296 = vector.extract_strided_slice %289 {offsets = [0, 128], sizes = [2, 128], strides = [1, 1]} : vector<2x512xf32> to vector<2x128xf32>
    %297 = arith.negf %296 : vector<2x128xf32>
    %298 = math.exp %297 : vector<2x128xf32>
    %cst_97 = arith.constant 1.000000e+00 : f32
    %299 = vector.broadcast %cst_97 : f32 to vector<2x128xf32>
    %300 = arith.addf %299, %298 : vector<2x128xf32>
    %301 = arith.divf %299, %300 : vector<2x128xf32>
    %302 = vector.extract_strided_slice %289 {offsets = [0, 256], sizes = [2, 128], strides = [1, 1]} : vector<2x512xf32> to vector<2x128xf32>
    %303 = math.tanh %302 : vector<2x128xf32>
    %304 = vector.extract_strided_slice %289 {offsets = [0, 384], sizes = [2, 128], strides = [1, 1]} : vector<2x512xf32> to vector<2x128xf32>
    %305 = arith.negf %304 : vector<2x128xf32>
    %306 = math.exp %305 : vector<2x128xf32>
    %cst_98 = arith.constant 1.000000e+00 : f32
    %307 = vector.broadcast %cst_98 : f32 to vector<2x128xf32>
    %308 = arith.addf %307, %306 : vector<2x128xf32>
    %309 = arith.divf %307, %308 : vector<2x128xf32>
    %310 = arith.mulf %301, %245 : vector<2x128xf32>
    %311 = arith.mulf %295, %303 : vector<2x128xf32>
    %312 = arith.addf %310, %311 : vector<2x128xf32>
    %313 = math.tanh %312 : vector<2x128xf32>
    %314 = arith.mulf %309, %313 : vector<2x128xf32>
    %315 = arith.truncf %314 : vector<2x128xf32> to vector<2x128xbf16>
    %c0_99 = arith.constant 0 : index
    %c0_100 = arith.constant 0 : index
    %c0_101 = arith.constant 0 : index
    %316 = vector.load %arg4[%c0_99, %c0_100, %c0_101] : memref<1x128x512xbf16, #tpu.memory_space<vmem>>, vector<1x128x512xbf16>
    %317 = vector.shape_cast %316 : vector<1x128x512xbf16> to vector<128x512xbf16>
    %cst_102 = arith.constant dense<0.000000e+00> : vector<2x512xf32>
    %318 = tpu.matmul %315, %317, %cst_102 {dimension_numbers = #tpu.dot_dimension_numbers<[1], [0], [0], [1], [0, 0, 1, 1], [], []>} : vector<2x128xbf16>, vector<128x512xbf16>, vector<2x512xf32> -> vector<2x512xf32>
    %319 = arith.truncf %282 : vector<2x128xf32> to vector<2x128xbf16>
    %c0_103 = arith.constant 0 : index
    %c0_104 = arith.constant 0 : index
    %c0_105 = arith.constant 0 : index
    %320 = vector.load %arg5[%c0_103, %c0_104, %c0_105] : memref<1x128x512xbf16, #tpu.memory_space<vmem>>, vector<1x128x512xbf16>
    %321 = vector.shape_cast %320 : vector<1x128x512xbf16> to vector<128x512xbf16>
    %cst_106 = arith.constant dense<0.000000e+00> : vector<2x512xf32>
    %322 = tpu.matmul %319, %321, %cst_106 {dimension_numbers = #tpu.dot_dimension_numbers<[1], [0], [0], [1], [0, 0, 1, 1], [], []>} : vector<2x128xbf16>, vector<128x512xbf16>, vector<2x512xf32> -> vector<2x512xf32>
    %323 = arith.addf %318, %322 : vector<2x512xf32>
    %324 = arith.addf %323, %14 : vector<2x512xf32>
    %325 = vector.extract_strided_slice %324 {offsets = [0, 0], sizes = [2, 128], strides = [1, 1]} : vector<2x512xf32> to vector<2x128xf32>
    %326 = arith.negf %325 : vector<2x128xf32>
    %327 = math.exp %326 : vector<2x128xf32>
    %cst_107 = arith.constant 1.000000e+00 : f32
    %328 = vector.broadcast %cst_107 : f32 to vector<2x128xf32>
    %329 = arith.addf %328, %327 : vector<2x128xf32>
    %330 = arith.divf %328, %329 : vector<2x128xf32>
    %331 = vector.extract_strided_slice %324 {offsets = [0, 128], sizes = [2, 128], strides = [1, 1]} : vector<2x512xf32> to vector<2x128xf32>
    %332 = arith.negf %331 : vector<2x128xf32>
    %333 = math.exp %332 : vector<2x128xf32>
    %cst_108 = arith.constant 1.000000e+00 : f32
    %334 = vector.broadcast %cst_108 : f32 to vector<2x128xf32>
    %335 = arith.addf %334, %333 : vector<2x128xf32>
    %336 = arith.divf %334, %335 : vector<2x128xf32>
    %337 = vector.extract_strided_slice %324 {offsets = [0, 256], sizes = [2, 128], strides = [1, 1]} : vector<2x512xf32> to vector<2x128xf32>
    %338 = math.tanh %337 : vector<2x128xf32>
    %339 = vector.extract_strided_slice %324 {offsets = [0, 384], sizes = [2, 128], strides = [1, 1]} : vector<2x512xf32> to vector<2x128xf32>
    %340 = arith.negf %339 : vector<2x128xf32>
    %341 = math.exp %340 : vector<2x128xf32>
    %cst_109 = arith.constant 1.000000e+00 : f32
    %342 = vector.broadcast %cst_109 : f32 to vector<2x128xf32>
    %343 = arith.addf %342, %341 : vector<2x128xf32>
    %344 = arith.divf %342, %343 : vector<2x128xf32>
    %345 = arith.mulf %336, %280 : vector<2x128xf32>
    %346 = arith.mulf %330, %338 : vector<2x128xf32>
    %347 = arith.addf %345, %346 : vector<2x128xf32>
    %348 = math.tanh %347 : vector<2x128xf32>
    %349 = arith.mulf %344, %348 : vector<2x128xf32>
    %c0_110 = arith.constant 0 : index
    %c5 = arith.constant 5 : index
    %c0_111 = arith.constant 0 : index
    %350 = vector.load %arg2[%c0_110, %c5, %c0_111] : memref<2x8x512xbf16, #tpu.memory_space<vmem>>, vector<2x1x512xbf16>
    %351 = vector.shape_cast %350 : vector<2x1x512xbf16> to vector<2x512xbf16>
    %352 = arith.extf %351 : vector<2x512xbf16> to vector<2x512xf32>
    %353 = arith.truncf %314 : vector<2x128xf32> to vector<2x128xbf16>
    %c0_112 = arith.constant 0 : index
    %c0_113 = arith.constant 0 : index
    %354 = vector.load %arg3[%c0_112, %c0_113] : memref<128x512xbf16, #tpu.memory_space<vmem>>, vector<128x512xbf16>
    %cst_114 = arith.constant dense<0.000000e+00> : vector<2x512xf32>
    %355 = tpu.matmul %353, %354, %cst_114 {dimension_numbers = #tpu.dot_dimension_numbers<[1], [0], [0], [1], [0, 0, 1, 1], [], []>} : vector<2x128xbf16>, vector<128x512xbf16>, vector<2x512xf32> -> vector<2x512xf32>
    %356 = arith.addf %352, %355 : vector<2x512xf32>
    %357 = vector.extract_strided_slice %356 {offsets = [0, 0], sizes = [2, 128], strides = [1, 1]} : vector<2x512xf32> to vector<2x128xf32>
    %358 = arith.negf %357 : vector<2x128xf32>
    %359 = math.exp %358 : vector<2x128xf32>
    %cst_115 = arith.constant 1.000000e+00 : f32
    %360 = vector.broadcast %cst_115 : f32 to vector<2x128xf32>
    %361 = arith.addf %360, %359 : vector<2x128xf32>
    %362 = arith.divf %360, %361 : vector<2x128xf32>
    %363 = vector.extract_strided_slice %356 {offsets = [0, 128], sizes = [2, 128], strides = [1, 1]} : vector<2x512xf32> to vector<2x128xf32>
    %364 = arith.negf %363 : vector<2x128xf32>
    %365 = math.exp %364 : vector<2x128xf32>
    %cst_116 = arith.constant 1.000000e+00 : f32
    %366 = vector.broadcast %cst_116 : f32 to vector<2x128xf32>
    %367 = arith.addf %366, %365 : vector<2x128xf32>
    %368 = arith.divf %366, %367 : vector<2x128xf32>
    %369 = vector.extract_strided_slice %356 {offsets = [0, 256], sizes = [2, 128], strides = [1, 1]} : vector<2x512xf32> to vector<2x128xf32>
    %370 = math.tanh %369 : vector<2x128xf32>
    %371 = vector.extract_strided_slice %356 {offsets = [0, 384], sizes = [2, 128], strides = [1, 1]} : vector<2x512xf32> to vector<2x128xf32>
    %372 = arith.negf %371 : vector<2x128xf32>
    %373 = math.exp %372 : vector<2x128xf32>
    %cst_117 = arith.constant 1.000000e+00 : f32
    %374 = vector.broadcast %cst_117 : f32 to vector<2x128xf32>
    %375 = arith.addf %374, %373 : vector<2x128xf32>
    %376 = arith.divf %374, %375 : vector<2x128xf32>
    %377 = arith.mulf %368, %312 : vector<2x128xf32>
    %378 = arith.mulf %362, %370 : vector<2x128xf32>
    %379 = arith.addf %377, %378 : vector<2x128xf32>
    %380 = math.tanh %379 : vector<2x128xf32>
    %381 = arith.mulf %376, %380 : vector<2x128xf32>
    %382 = arith.truncf %381 : vector<2x128xf32> to vector<2x128xbf16>
    %c0_118 = arith.constant 0 : index
    %c0_119 = arith.constant 0 : index
    %c0_120 = arith.constant 0 : index
    %383 = vector.load %arg4[%c0_118, %c0_119, %c0_120] : memref<1x128x512xbf16, #tpu.memory_space<vmem>>, vector<1x128x512xbf16>
    %384 = vector.shape_cast %383 : vector<1x128x512xbf16> to vector<128x512xbf16>
    %cst_121 = arith.constant dense<0.000000e+00> : vector<2x512xf32>
    %385 = tpu.matmul %382, %384, %cst_121 {dimension_numbers = #tpu.dot_dimension_numbers<[1], [0], [0], [1], [0, 0, 1, 1], [], []>} : vector<2x128xbf16>, vector<128x512xbf16>, vector<2x512xf32> -> vector<2x512xf32>
    %386 = arith.truncf %349 : vector<2x128xf32> to vector<2x128xbf16>
    %c0_122 = arith.constant 0 : index
    %c0_123 = arith.constant 0 : index
    %c0_124 = arith.constant 0 : index
    %387 = vector.load %arg5[%c0_122, %c0_123, %c0_124] : memref<1x128x512xbf16, #tpu.memory_space<vmem>>, vector<1x128x512xbf16>
    %388 = vector.shape_cast %387 : vector<1x128x512xbf16> to vector<128x512xbf16>
    %cst_125 = arith.constant dense<0.000000e+00> : vector<2x512xf32>
    %389 = tpu.matmul %386, %388, %cst_125 {dimension_numbers = #tpu.dot_dimension_numbers<[1], [0], [0], [1], [0, 0, 1, 1], [], []>} : vector<2x128xbf16>, vector<128x512xbf16>, vector<2x512xf32> -> vector<2x512xf32>
    %390 = arith.addf %385, %389 : vector<2x512xf32>
    %391 = arith.addf %390, %14 : vector<2x512xf32>
    %392 = vector.extract_strided_slice %391 {offsets = [0, 0], sizes = [2, 128], strides = [1, 1]} : vector<2x512xf32> to vector<2x128xf32>
    %393 = arith.negf %392 : vector<2x128xf32>
    %394 = math.exp %393 : vector<2x128xf32>
    %cst_126 = arith.constant 1.000000e+00 : f32
    %395 = vector.broadcast %cst_126 : f32 to vector<2x128xf32>
    %396 = arith.addf %395, %394 : vector<2x128xf32>
    %397 = arith.divf %395, %396 : vector<2x128xf32>
    %398 = vector.extract_strided_slice %391 {offsets = [0, 128], sizes = [2, 128], strides = [1, 1]} : vector<2x512xf32> to vector<2x128xf32>
    %399 = arith.negf %398 : vector<2x128xf32>
    %400 = math.exp %399 : vector<2x128xf32>
    %cst_127 = arith.constant 1.000000e+00 : f32
    %401 = vector.broadcast %cst_127 : f32 to vector<2x128xf32>
    %402 = arith.addf %401, %400 : vector<2x128xf32>
    %403 = arith.divf %401, %402 : vector<2x128xf32>
    %404 = vector.extract_strided_slice %391 {offsets = [0, 256], sizes = [2, 128], strides = [1, 1]} : vector<2x512xf32> to vector<2x128xf32>
    %405 = math.tanh %404 : vector<2x128xf32>
    %406 = vector.extract_strided_slice %391 {offsets = [0, 384], sizes = [2, 128], strides = [1, 1]} : vector<2x512xf32> to vector<2x128xf32>
    %407 = arith.negf %406 : vector<2x128xf32>
    %408 = math.exp %407 : vector<2x128xf32>
    %cst_128 = arith.constant 1.000000e+00 : f32
    %409 = vector.broadcast %cst_128 : f32 to vector<2x128xf32>
    %410 = arith.addf %409, %408 : vector<2x128xf32>
    %411 = arith.divf %409, %410 : vector<2x128xf32>
    %412 = arith.mulf %403, %347 : vector<2x128xf32>
    %413 = arith.mulf %397, %405 : vector<2x128xf32>
    %414 = arith.addf %412, %413 : vector<2x128xf32>
    %415 = math.tanh %414 : vector<2x128xf32>
    %416 = arith.mulf %411, %415 : vector<2x128xf32>
    %c0_129 = arith.constant 0 : index
    %c6 = arith.constant 6 : index
    %c0_130 = arith.constant 0 : index
    %417 = vector.load %arg2[%c0_129, %c6, %c0_130] : memref<2x8x512xbf16, #tpu.memory_space<vmem>>, vector<2x1x512xbf16>
    %418 = vector.shape_cast %417 : vector<2x1x512xbf16> to vector<2x512xbf16>
    %419 = arith.extf %418 : vector<2x512xbf16> to vector<2x512xf32>
    %420 = arith.truncf %381 : vector<2x128xf32> to vector<2x128xbf16>
    %c0_131 = arith.constant 0 : index
    %c0_132 = arith.constant 0 : index
    %421 = vector.load %arg3[%c0_131, %c0_132] : memref<128x512xbf16, #tpu.memory_space<vmem>>, vector<128x512xbf16>
    %cst_133 = arith.constant dense<0.000000e+00> : vector<2x512xf32>
    %422 = tpu.matmul %420, %421, %cst_133 {dimension_numbers = #tpu.dot_dimension_numbers<[1], [0], [0], [1], [0, 0, 1, 1], [], []>} : vector<2x128xbf16>, vector<128x512xbf16>, vector<2x512xf32> -> vector<2x512xf32>
    %423 = arith.addf %419, %422 : vector<2x512xf32>
    %424 = vector.extract_strided_slice %423 {offsets = [0, 0], sizes = [2, 128], strides = [1, 1]} : vector<2x512xf32> to vector<2x128xf32>
    %425 = arith.negf %424 : vector<2x128xf32>
    %426 = math.exp %425 : vector<2x128xf32>
    %cst_134 = arith.constant 1.000000e+00 : f32
    %427 = vector.broadcast %cst_134 : f32 to vector<2x128xf32>
    %428 = arith.addf %427, %426 : vector<2x128xf32>
    %429 = arith.divf %427, %428 : vector<2x128xf32>
    %430 = vector.extract_strided_slice %423 {offsets = [0, 128], sizes = [2, 128], strides = [1, 1]} : vector<2x512xf32> to vector<2x128xf32>
    %431 = arith.negf %430 : vector<2x128xf32>
    %432 = math.exp %431 : vector<2x128xf32>
    %cst_135 = arith.constant 1.000000e+00 : f32
    %433 = vector.broadcast %cst_135 : f32 to vector<2x128xf32>
    %434 = arith.addf %433, %432 : vector<2x128xf32>
    %435 = arith.divf %433, %434 : vector<2x128xf32>
    %436 = vector.extract_strided_slice %423 {offsets = [0, 256], sizes = [2, 128], strides = [1, 1]} : vector<2x512xf32> to vector<2x128xf32>
    %437 = math.tanh %436 : vector<2x128xf32>
    %438 = vector.extract_strided_slice %423 {offsets = [0, 384], sizes = [2, 128], strides = [1, 1]} : vector<2x512xf32> to vector<2x128xf32>
    %439 = arith.negf %438 : vector<2x128xf32>
    %440 = math.exp %439 : vector<2x128xf32>
    %cst_136 = arith.constant 1.000000e+00 : f32
    %441 = vector.broadcast %cst_136 : f32 to vector<2x128xf32>
    %442 = arith.addf %441, %440 : vector<2x128xf32>
    %443 = arith.divf %441, %442 : vector<2x128xf32>
    %444 = arith.mulf %435, %379 : vector<2x128xf32>
    %445 = arith.mulf %429, %437 : vector<2x128xf32>
    %446 = arith.addf %444, %445 : vector<2x128xf32>
    %447 = math.tanh %446 : vector<2x128xf32>
    %448 = arith.mulf %443, %447 : vector<2x128xf32>
    %449 = arith.truncf %448 : vector<2x128xf32> to vector<2x128xbf16>
    %c0_137 = arith.constant 0 : index
    %c0_138 = arith.constant 0 : index
    %c0_139 = arith.constant 0 : index
    %450 = vector.load %arg4[%c0_137, %c0_138, %c0_139] : memref<1x128x512xbf16, #tpu.memory_space<vmem>>, vector<1x128x512xbf16>
    %451 = vector.shape_cast %450 : vector<1x128x512xbf16> to vector<128x512xbf16>
    %cst_140 = arith.constant dense<0.000000e+00> : vector<2x512xf32>
    %452 = tpu.matmul %449, %451, %cst_140 {dimension_numbers = #tpu.dot_dimension_numbers<[1], [0], [0], [1], [0, 0, 1, 1], [], []>} : vector<2x128xbf16>, vector<128x512xbf16>, vector<2x512xf32> -> vector<2x512xf32>
    %453 = arith.truncf %416 : vector<2x128xf32> to vector<2x128xbf16>
    %c0_141 = arith.constant 0 : index
    %c0_142 = arith.constant 0 : index
    %c0_143 = arith.constant 0 : index
    %454 = vector.load %arg5[%c0_141, %c0_142, %c0_143] : memref<1x128x512xbf16, #tpu.memory_space<vmem>>, vector<1x128x512xbf16>
    %455 = vector.shape_cast %454 : vector<1x128x512xbf16> to vector<128x512xbf16>
    %cst_144 = arith.constant dense<0.000000e+00> : vector<2x512xf32>
    %456 = tpu.matmul %453, %455, %cst_144 {dimension_numbers = #tpu.dot_dimension_numbers<[1], [0], [0], [1], [0, 0, 1, 1], [], []>} : vector<2x128xbf16>, vector<128x512xbf16>, vector<2x512xf32> -> vector<2x512xf32>
    %457 = arith.addf %452, %456 : vector<2x512xf32>
    %458 = arith.addf %457, %14 : vector<2x512xf32>
    %459 = vector.extract_strided_slice %458 {offsets = [0, 0], sizes = [2, 128], strides = [1, 1]} : vector<2x512xf32> to vector<2x128xf32>
    %460 = arith.negf %459 : vector<2x128xf32>
    %461 = math.exp %460 : vector<2x128xf32>
    %cst_145 = arith.constant 1.000000e+00 : f32
    %462 = vector.broadcast %cst_145 : f32 to vector<2x128xf32>
    %463 = arith.addf %462, %461 : vector<2x128xf32>
    %464 = arith.divf %462, %463 : vector<2x128xf32>
    %465 = vector.extract_strided_slice %458 {offsets = [0, 128], sizes = [2, 128], strides = [1, 1]} : vector<2x512xf32> to vector<2x128xf32>
    %466 = arith.negf %465 : vector<2x128xf32>
    %467 = math.exp %466 : vector<2x128xf32>
    %cst_146 = arith.constant 1.000000e+00 : f32
    %468 = vector.broadcast %cst_146 : f32 to vector<2x128xf32>
    %469 = arith.addf %468, %467 : vector<2x128xf32>
    %470 = arith.divf %468, %469 : vector<2x128xf32>
    %471 = vector.extract_strided_slice %458 {offsets = [0, 256], sizes = [2, 128], strides = [1, 1]} : vector<2x512xf32> to vector<2x128xf32>
    %472 = math.tanh %471 : vector<2x128xf32>
    %473 = vector.extract_strided_slice %458 {offsets = [0, 384], sizes = [2, 128], strides = [1, 1]} : vector<2x512xf32> to vector<2x128xf32>
    %474 = arith.negf %473 : vector<2x128xf32>
    %475 = math.exp %474 : vector<2x128xf32>
    %cst_147 = arith.constant 1.000000e+00 : f32
    %476 = vector.broadcast %cst_147 : f32 to vector<2x128xf32>
    %477 = arith.addf %476, %475 : vector<2x128xf32>
    %478 = arith.divf %476, %477 : vector<2x128xf32>
    %479 = arith.mulf %470, %414 : vector<2x128xf32>
    %480 = arith.mulf %464, %472 : vector<2x128xf32>
    %481 = arith.addf %479, %480 : vector<2x128xf32>
    %482 = math.tanh %481 : vector<2x128xf32>
    %483 = arith.mulf %478, %482 : vector<2x128xf32>
    %c0_148 = arith.constant 0 : index
    %c7 = arith.constant 7 : index
    %c0_149 = arith.constant 0 : index
    %484 = vector.load %arg2[%c0_148, %c7, %c0_149] : memref<2x8x512xbf16, #tpu.memory_space<vmem>>, vector<2x1x512xbf16>
    %485 = vector.shape_cast %484 : vector<2x1x512xbf16> to vector<2x512xbf16>
    %486 = arith.extf %485 : vector<2x512xbf16> to vector<2x512xf32>
    %487 = arith.truncf %448 : vector<2x128xf32> to vector<2x128xbf16>
    %c0_150 = arith.constant 0 : index
    %c0_151 = arith.constant 0 : index
    %488 = vector.load %arg3[%c0_150, %c0_151] : memref<128x512xbf16, #tpu.memory_space<vmem>>, vector<128x512xbf16>
    %cst_152 = arith.constant dense<0.000000e+00> : vector<2x512xf32>
    %489 = tpu.matmul %487, %488, %cst_152 {dimension_numbers = #tpu.dot_dimension_numbers<[1], [0], [0], [1], [0, 0, 1, 1], [], []>} : vector<2x128xbf16>, vector<128x512xbf16>, vector<2x512xf32> -> vector<2x512xf32>
    %490 = arith.addf %486, %489 : vector<2x512xf32>
    %491 = vector.extract_strided_slice %490 {offsets = [0, 0], sizes = [2, 128], strides = [1, 1]} : vector<2x512xf32> to vector<2x128xf32>
    %492 = arith.negf %491 : vector<2x128xf32>
    %493 = math.exp %492 : vector<2x128xf32>
    %cst_153 = arith.constant 1.000000e+00 : f32
    %494 = vector.broadcast %cst_153 : f32 to vector<2x128xf32>
    %495 = arith.addf %494, %493 : vector<2x128xf32>
    %496 = arith.divf %494, %495 : vector<2x128xf32>
    %497 = vector.extract_strided_slice %490 {offsets = [0, 128], sizes = [2, 128], strides = [1, 1]} : vector<2x512xf32> to vector<2x128xf32>
    %498 = arith.negf %497 : vector<2x128xf32>
    %499 = math.exp %498 : vector<2x128xf32>
    %cst_154 = arith.constant 1.000000e+00 : f32
    %500 = vector.broadcast %cst_154 : f32 to vector<2x128xf32>
    %501 = arith.addf %500, %499 : vector<2x128xf32>
    %502 = arith.divf %500, %501 : vector<2x128xf32>
    %503 = vector.extract_strided_slice %490 {offsets = [0, 256], sizes = [2, 128], strides = [1, 1]} : vector<2x512xf32> to vector<2x128xf32>
    %504 = math.tanh %503 : vector<2x128xf32>
    %505 = vector.extract_strided_slice %490 {offsets = [0, 384], sizes = [2, 128], strides = [1, 1]} : vector<2x512xf32> to vector<2x128xf32>
    %506 = arith.negf %505 : vector<2x128xf32>
    %507 = math.exp %506 : vector<2x128xf32>
    %cst_155 = arith.constant 1.000000e+00 : f32
    %508 = vector.broadcast %cst_155 : f32 to vector<2x128xf32>
    %509 = arith.addf %508, %507 : vector<2x128xf32>
    %510 = arith.divf %508, %509 : vector<2x128xf32>
    %511 = arith.mulf %502, %446 : vector<2x128xf32>
    %512 = arith.mulf %496, %504 : vector<2x128xf32>
    %513 = arith.addf %511, %512 : vector<2x128xf32>
    %514 = math.tanh %513 : vector<2x128xf32>
    %515 = arith.mulf %510, %514 : vector<2x128xf32>
    %516 = arith.truncf %515 : vector<2x128xf32> to vector<2x128xbf16>
    %c0_156 = arith.constant 0 : index
    %c0_157 = arith.constant 0 : index
    %c0_158 = arith.constant 0 : index
    %517 = vector.load %arg4[%c0_156, %c0_157, %c0_158] : memref<1x128x512xbf16, #tpu.memory_space<vmem>>, vector<1x128x512xbf16>
    %518 = vector.shape_cast %517 : vector<1x128x512xbf16> to vector<128x512xbf16>
    %cst_159 = arith.constant dense<0.000000e+00> : vector<2x512xf32>
    %519 = tpu.matmul %516, %518, %cst_159 {dimension_numbers = #tpu.dot_dimension_numbers<[1], [0], [0], [1], [0, 0, 1, 1], [], []>} : vector<2x128xbf16>, vector<128x512xbf16>, vector<2x512xf32> -> vector<2x512xf32>
    %520 = arith.truncf %483 : vector<2x128xf32> to vector<2x128xbf16>
    %c0_160 = arith.constant 0 : index
    %c0_161 = arith.constant 0 : index
    %c0_162 = arith.constant 0 : index
    %521 = vector.load %arg5[%c0_160, %c0_161, %c0_162] : memref<1x128x512xbf16, #tpu.memory_space<vmem>>, vector<1x128x512xbf16>
    %522 = vector.shape_cast %521 : vector<1x128x512xbf16> to vector<128x512xbf16>
    %cst_163 = arith.constant dense<0.000000e+00> : vector<2x512xf32>
    %523 = tpu.matmul %520, %522, %cst_163 {dimension_numbers = #tpu.dot_dimension_numbers<[1], [0], [0], [1], [0, 0, 1, 1], [], []>} : vector<2x128xbf16>, vector<128x512xbf16>, vector<2x512xf32> -> vector<2x512xf32>
    %524 = arith.addf %519, %523 : vector<2x512xf32>
    %525 = arith.addf %524, %14 : vector<2x512xf32>
    %526 = vector.extract_strided_slice %525 {offsets = [0, 0], sizes = [2, 128], strides = [1, 1]} : vector<2x512xf32> to vector<2x128xf32>
    %527 = arith.negf %526 : vector<2x128xf32>
    %528 = math.exp %527 : vector<2x128xf32>
    %cst_164 = arith.constant 1.000000e+00 : f32
    %529 = vector.broadcast %cst_164 : f32 to vector<2x128xf32>
    %530 = arith.addf %529, %528 : vector<2x128xf32>
    %531 = arith.divf %529, %530 : vector<2x128xf32>
    %532 = vector.extract_strided_slice %525 {offsets = [0, 128], sizes = [2, 128], strides = [1, 1]} : vector<2x512xf32> to vector<2x128xf32>
    %533 = arith.negf %532 : vector<2x128xf32>
    %534 = math.exp %533 : vector<2x128xf32>
    %cst_165 = arith.constant 1.000000e+00 : f32
    %535 = vector.broadcast %cst_165 : f32 to vector<2x128xf32>
    %536 = arith.addf %535, %534 : vector<2x128xf32>
    %537 = arith.divf %535, %536 : vector<2x128xf32>
    %538 = vector.extract_strided_slice %525 {offsets = [0, 256], sizes = [2, 128], strides = [1, 1]} : vector<2x512xf32> to vector<2x128xf32>
    %539 = math.tanh %538 : vector<2x128xf32>
    %540 = vector.extract_strided_slice %525 {offsets = [0, 384], sizes = [2, 128], strides = [1, 1]} : vector<2x512xf32> to vector<2x128xf32>
    %541 = arith.negf %540 : vector<2x128xf32>
    %542 = math.exp %541 : vector<2x128xf32>
    %cst_166 = arith.constant 1.000000e+00 : f32
    %543 = vector.broadcast %cst_166 : f32 to vector<2x128xf32>
    %544 = arith.addf %543, %542 : vector<2x128xf32>
    %545 = arith.divf %543, %544 : vector<2x128xf32>
    %546 = arith.mulf %537, %481 : vector<2x128xf32>
    %547 = arith.mulf %531, %539 : vector<2x128xf32>
    %548 = arith.addf %546, %547 : vector<2x128xf32>
    %549 = math.tanh %548 : vector<2x128xf32>
    %550 = arith.mulf %545, %549 : vector<2x128xf32>
    %c0_167 = arith.constant 0 : index
    %c0_168 = arith.constant 0 : index
    %c0_169 = arith.constant 0 : index
    %551 = vector.load %arg10[%c0_167, %c0_168, %c0_169] : memref<2x2x128xf32, #tpu.memory_space<vmem>>, vector<1x2x128xf32>
    %552 = vector.shape_cast %551 : vector<1x2x128xf32> to vector<2x128xf32>
    %553 = vector.shape_cast %515 : vector<2x128xf32> to vector<1x2x128xf32>
    tpu.vector_store %arg10[%c0_167, %c0_168, %c0_169], %553 {strides = array<i32>} : memref<2x2x128xf32, #tpu.memory_space<vmem>>, vector<1x2x128xf32>,
    %c0_170 = arith.constant 0 : index
    %c0_171 = arith.constant 0 : index
    %c0_172 = arith.constant 0 : index
    %554 = vector.load %arg11[%c0_170, %c0_171, %c0_172] : memref<2x2x128xf32, #tpu.memory_space<vmem>>, vector<1x2x128xf32>
    %555 = vector.shape_cast %554 : vector<1x2x128xf32> to vector<2x128xf32>
    %556 = vector.shape_cast %513 : vector<2x128xf32> to vector<1x2x128xf32>
    tpu.vector_store %arg11[%c0_170, %c0_171, %c0_172], %556 {strides = array<i32>} : memref<2x2x128xf32, #tpu.memory_space<vmem>>, vector<1x2x128xf32>,
    %c1_173 = arith.constant 1 : index
    %c0_174 = arith.constant 0 : index
    %c0_175 = arith.constant 0 : index
    %557 = vector.load %arg10[%c1_173, %c0_174, %c0_175] : memref<2x2x128xf32, #tpu.memory_space<vmem>>, vector<1x2x128xf32>
    %558 = vector.shape_cast %557 : vector<1x2x128xf32> to vector<2x128xf32>
    %559 = vector.shape_cast %550 : vector<2x128xf32> to vector<1x2x128xf32>
    tpu.vector_store %arg10[%c1_173, %c0_174, %c0_175], %559 {strides = array<i32>} : memref<2x2x128xf32, #tpu.memory_space<vmem>>, vector<1x2x128xf32>,
    %c1_176 = arith.constant 1 : index
    %c0_177 = arith.constant 0 : index
    %c0_178 = arith.constant 0 : index
    %560 = vector.load %arg11[%c1_176, %c0_177, %c0_178] : memref<2x2x128xf32, #tpu.memory_space<vmem>>, vector<1x2x128xf32>
    %561 = vector.shape_cast %560 : vector<1x2x128xf32> to vector<2x128xf32>
    %562 = vector.shape_cast %548 : vector<2x128xf32> to vector<1x2x128xf32>
    tpu.vector_store %arg11[%c1_176, %c0_177, %c0_178], %562 {strides = array<i32>} : memref<2x2x128xf32, #tpu.memory_space<vmem>>, vector<1x2x128xf32>,
    %c0_i32_179 = arith.constant 0 : i32
    %563 = arith.cmpi eq, %arg1, %c0_i32_179 : i32
    %564 = arith.extui %563 : i1 to i32
    %c0_i32_180 = arith.constant 0 : i32
    %565 = arith.cmpi ne, %564, %c0_i32_180 : i32
    scf.if %565 {
      %566 = arith.truncf %550 : vector<2x128xf32> to vector<2x128xbf16>
      %c0_181 = arith.constant 0 : index
      %c0_182 = arith.constant 0 : index
      %567 = vector.load %arg7[%c0_181, %c0_182] : memref<128x128xbf16, #tpu.memory_space<vmem>>, vector<128x128xbf16>
      %cst_183 = arith.constant dense<0.000000e+00> : vector<2x128xf32>
      %568 = tpu.matmul %566, %567, %cst_183 {dimension_numbers = #tpu.dot_dimension_numbers<[1], [0], [0], [1], [0, 0, 1, 1], [], []>} : vector<2x128xbf16>, vector<128x128xbf16>, vector<2x128xf32> -> vector<2x128xf32>
      %c0_184 = arith.constant 0 : index
      %c0_185 = arith.constant 0 : index
      %569 = vector.load %arg8[%c0_184, %c0_185] : memref<1x128xf32, #tpu.memory_space<vmem>>, vector<1x128xf32>
      %570 = vector.broadcast %569 : vector<1x128xf32> to vector<2x128xf32>
      %571 = arith.addf %568, %570 : vector<2x128xf32>
      %c0_186 = arith.constant 0 : index
      %c0_187 = arith.constant 0 : index
      %572 = vector.load %arg9[%c0_186, %c0_187] : memref<2x128xf32, #tpu.memory_space<vmem>>, vector<2x128xf32>
      tpu.vector_store %arg9[%c0_186, %c0_187], %571 {strides = array<i32>} : memref<2x128xf32, #tpu.memory_space<vmem>>, vector<2x128xf32>,
    } else {
    }
    return
  }
  func.func @transform_0(%arg0: i32, %arg1: i32) -> (i32, i32, i32) {
    %c0_i32 = arith.constant 0 : i32
    %c0_i32_0 = arith.constant 0 : i32
    return %arg0, %arg1, %c0_i32 : i32, i32, i32
  }
  func.func @transform_1(%arg0: i32, %arg1: i32) -> (i32, i32) {
    %c0_i32 = arith.constant 0 : i32
    %c0_i32_0 = arith.constant 0 : i32
    %c0_i32_1 = arith.constant 0 : i32
    return %c0_i32, %c0_i32_0 : i32, i32
  }
  func.func @transform_2(%arg0: i32, %arg1: i32) -> (i32, i32, i32) {
    %c0_i32 = arith.constant 0 : i32
    %c0_i32_0 = arith.constant 0 : i32
    %c0_i32_1 = arith.constant 0 : i32
    %c0_i32_2 = arith.constant 0 : i32
    return %c0_i32, %c0_i32_0, %c0_i32_1 : i32, i32, i32
  }
  func.func @transform_3(%arg0: i32, %arg1: i32) -> (i32, i32, i32) {
    %c0_i32 = arith.constant 0 : i32
    %c0_i32_0 = arith.constant 0 : i32
    %c0_i32_1 = arith.constant 0 : i32
    %c0_i32_2 = arith.constant 0 : i32
    return %c0_i32, %c0_i32_0, %c0_i32_1 : i32, i32, i32
  }
  func.func @transform_4(%arg0: i32, %arg1: i32) -> (i32, i32, i32) {
    %c0_i32 = arith.constant 0 : i32
    %c0_i32_0 = arith.constant 0 : i32
    %c0_i32_1 = arith.constant 0 : i32
    %c0_i32_2 = arith.constant 0 : i32
    return %c0_i32, %c0_i32_0, %c0_i32_1 : i32, i32, i32
  }
  func.func @transform_5(%arg0: i32, %arg1: i32) -> (i32, i32) {
    %c0_i32 = arith.constant 0 : i32
    %c0_i32_0 = arith.constant 0 : i32
    %c0_i32_1 = arith.constant 0 : i32
    return %c0_i32, %c0_i32_0 : i32, i32
  }
  func.func @transform_6(%arg0: i32, %arg1: i32) -> (i32, i32) {
    %c0_i32 = arith.constant 0 : i32
    %c0_i32_0 = arith.constant 0 : i32
    %c0_i32_1 = arith.constant 0 : i32
    return %c0_i32, %c0_i32_0 : i32, i32
  }
  func.func @transform_7(%arg0: i32, %arg1: i32) -> (i32, i32) {
    %c0_i32 = arith.constant 0 : i32
    %c0_i32_0 = arith.constant 0 : i32
    return %arg0, %c0_i32 : i32, i32
  }
}

</mosaic_0001>

<llo_original>
// kernel: lstm_forward.1
$region0: #{lstm_forward.1}
  #allocation0 [shape = 'u32[]', space=smem, size = 0x4, offset = 0x4, fixed_abs, tag = 'smem constant byte address 0x4 - core index']
  #allocation1 [shape = 'u32[72,128]{1,0:T(1,128)}', space=vmem, size = 0x9000, scoped, tag = 'internal scratch']
  #allocation2 [shape = 'f32[2,2,128]{2,1,0:T(2,128)}', space=vmem, size = 0x800, scoped, tag = 'scratch operand']
  #allocation3 [shape = 'f32[2,2,128]{2,1,0:T(2,128)}', space=vmem, size = 0x800, scoped, tag = 'scratch operand']
  %s0 = inlined_call_operand.vmem [shape: bf16[2,8,512], index: 0, kind: input, shape index: {}]
  %s1 = inlined_call_operand.vmem [shape: bf16[128,512], index: 1, kind: input, shape index: {}]
  %s2 = inlined_call_operand.vmem [shape: bf16[1,128,512], index: 2, kind: input, shape index: {}]
  %s3 = inlined_call_operand.vmem [shape: bf16[1,128,512], index: 3, kind: input, shape index: {}]
  %s4 = inlined_call_operand.vmem [shape: f32[1,1,512], index: 4, kind: input, shape index: {}]
  %s5 = inlined_call_operand.vmem [shape: bf16[128,128], index: 5, kind: input, shape index: {}]
  %s6 = inlined_call_operand.vmem [shape: f32[1,128], index: 6, kind: input, shape index: {}]
  %s7 = inlined_call_operand.vmem [shape: f32[2,128], index: 7, kind: output, shape index: {}]
  %s8 = sld [smem:[#allocation0]]
  $region46: #{lstm_forward.1} parent=0
    _
  %s10 = ssub.s32 1, %s8
  %s11 = scalar_select 0, %s10, %s8
  // Predicated region
  $region2: #{lstm_forward.1} parent=0 // pred_check
    _
  $region3: #{lstm_forward.1} parent=0 // pred_check_branch
    %13 = sbr.rel (0) target = $region5
  $region4: #{lstm_forward.1} parent=0 // pred_region
    _
  $region5: #{lstm_forward.1} parent=0 // pred_fallthru
    _
  // Predicated region
  $region6: #{lstm_forward.1} parent=0 // pred_check
    _
  $region7: #{lstm_forward.1} parent=0 // pred_check_branch
    %15 = sbr.rel (0) target = $region9
  $region8: #{lstm_forward.1} parent=0 // pred_region
    _
  $region9: #{lstm_forward.1} parent=0 // pred_fallthru
    _
  // Predicated region
  $region10: #{lstm_forward.1} parent=0 // pred_check
    _
  $region11: #{lstm_forward.1} parent=0 // pred_check_branch
    %17 = sbr.rel (0) target = $region13
  $region12: #{lstm_forward.1} parent=0 // pred_region
    _
  $region13: #{lstm_forward.1} parent=0 // pred_fallthru
    _
  // Predicated region
  $region14: #{lstm_forward.1} parent=0 // pred_check
    _
  $region15: #{lstm_forward.1} parent=0 // pred_check_branch
    %19 = sbr.rel (0) target = $region17
  $region16: #{lstm_forward.1} parent=0 // pred_region
    _
  $region17: #{lstm_forward.1} parent=0 // pred_fallthru
    _
  // Predicated region
  $region18: #{lstm_forward.1} parent=0 // pred_check
    _
  $region19: #{lstm_forward.1} parent=0 // pred_check_branch
    %21 = sbr.rel (0) target = $region21
  $region20: #{lstm_forward.1} parent=0 // pred_region
    _
  $region21: #{lstm_forward.1} parent=0 // pred_fallthru
    _
  // Predicated region
  $region22: #{lstm_forward.1} parent=0 // pred_check
    _
  $region23: #{lstm_forward.1} parent=0 // pred_check_branch
    %23 = sbr.rel (0) target = $region25
  $region24: #{lstm_forward.1} parent=0 // pred_region
    _
  $region25: #{lstm_forward.1} parent=0 // pred_fallthru
    _
  // Predicated region
  $region26: #{lstm_forward.1} parent=0 // pred_check
    _
  $region27: #{lstm_forward.1} parent=0 // pred_check_branch
    %25 = sbr.rel (0) target = $region29
  $region28: #{lstm_forward.1} parent=0 // pred_region
    _
  $region29: #{lstm_forward.1} parent=0 // pred_fallthru
    _
  %p26 = scmp.eq.s32.totalorder 0, 0
  // Predicated region
  $region30: #{lstm_forward.1} parent=0 // pred_check
    %p27 = pneg %p26
  $region31: #{lstm_forward.1} parent=0 // pred_check_branch
    %29 = sbr.rel (%p27) target = $region33
  $region32: #{lstm_forward.1} parent=0 // pred_region
    %30 = vst [vmem:[#allocation2] sm:$0x3] 0.0
    %31 = vst [vmem:[#allocation2 + $0x2] sm:$0x3] 0.0
    %32 = vst [vmem:[#allocation3] sm:$0x3] 0.0
    %33 = vst [vmem:[#allocation3 + $0x2] sm:$0x3] 0.0
  $region33: #{lstm_forward.1} parent=0 // pred_fallthru
    _
  %v34 = vld [vmem:[#allocation2] sm:$0x3]
  %s35 = scalar_lea.vmem [#allocation2], 2
  %v36 = vld [vmem:[%s35] sm:$0x3]
  %v37 = vld [vmem:[#allocation3] sm:$0x3]
  %s38 = scalar_lea.vmem [#allocation3], 2
  %v39 = vld [vmem:[%s38] sm:$0x3]
  %v40 = vld [vmem:[%s4] sm:$0xf]
  %v42 = vperm.slane %v40, 0
  %v43 = vperm.slane %v40, 1
  %v44 = vperm.slane %v40, 2
  %v45 = vperm.slane %v40, 3
  %v50 = vld [vmem:[%s0] sm:$0x11]
  %v51 = vld [vmem:[%s0 + $0x8] sm:$0x11]
  %v52 = vld [vmem:[%s0 + $0x10] sm:$0x11]
  %v53 = vld [vmem:[%s0 + $0x18] sm:$0x11]
  %v54 = vunpack.c.l.bf16 %v50
  %v55 = vunpack.c.h.bf16 %v50
  %v56 = vunpack.c.l.bf16 %v51
  %v57 = vunpack.c.h.bf16 %v51
  %v58 = vunpack.c.l.bf16 %v52
  %v59 = vunpack.c.h.bf16 %v52
  %v60 = vunpack.c.l.bf16 %v53
  %v61 = vunpack.c.h.bf16 %v53
  %v62 = vpack.c.bf16 %v34, %v34
  %v63 = vld [vmem:[%s1] sm:$0xff]
  %v64 = vld [vmem:[%s1 + $0x8] sm:$0xff]
  %v65 = vld [vmem:[%s1 + $0x10] sm:$0xff]
  %v66 = vld [vmem:[%s1 + $0x18] sm:$0xff]
  %v67 = vld [vmem:[%s1 + $0x20] sm:$0xff]
  %v68 = vld [vmem:[%s1 + $0x28] sm:$0xff]
  %v69 = vld [vmem:[%s1 + $0x30] sm:$0xff]
  %v70 = vld [vmem:[%s1 + $0x38] sm:$0xff]
  %v71 = vld [vmem:[%s1 + $0x40] sm:$0xff]
  %v72 = vld [vmem:[%s1 + $0x48] sm:$0xff]
  %v73 = vld [vmem:[%s1 + $0x50] sm:$0xff]
  %v74 = vld [vmem:[%s1 + $0x58] sm:$0xff]
  %v75 = vld [vmem:[%s1 + $0x60] sm:$0xff]
  %v76 = vld [vmem:[%s1 + $0x68] sm:$0xff]
  %v77 = vld [vmem:[%s1 + $0x70] sm:$0xff]
  %v78 = vld [vmem:[%s1 + $0x78] sm:$0xff]
  %v79 = vld [vmem:[%s1 + $0x80] sm:$0xff]
  %v80 = vld [vmem:[%s1 + $0x88] sm:$0xff]
  %v81 = vld [vmem:[%s1 + $0x90] sm:$0xff]
  %v82 = vld [vmem:[%s1 + $0x98] sm:$0xff]
  %v83 = vld [vmem:[%s1 + $0xa0] sm:$0xff]
  %v84 = vld [vmem:[%s1 + $0xa8] sm:$0xff]
  %v85 = vld [vmem:[%s1 + $0xb0] sm:$0xff]
  %v86 = vld [vmem:[%s1 + $0xb8] sm:$0xff]
  %v87 = vld [vmem:[%s1 + $0xc0] sm:$0xff]
  %v88 = vld [vmem:[%s1 + $0xc8] sm:$0xff]
  %v89 = vld [vmem:[%s1 + $0xd0] sm:$0xff]
  %v90 = vld [vmem:[%s1 + $0xd8] sm:$0xff]
  %v91 = vld [vmem:[%s1 + $0xe0] sm:$0xff]
  %v92 = vld [vmem:[%s1 + $0xe8] sm:$0xff]
  %v93 = vld [vmem:[%s1 + $0xf0] sm:$0xff]
  %v94 = vld [vmem:[%s1 + $0xf8] sm:$0xff]
  %v127 = vunpack.c.l.b16 %v63
  %v128 = vunpack.c.h.b16 %v63
  %v129 = vunpack.c.l.b16 %v64
  %v130 = vunpack.c.h.b16 %v64
  %v131 = vunpack.c.l.b16 %v65
  %v132 = vunpack.c.h.b16 %v65
  %v133 = vunpack.c.l.b16 %v66
  %v134 = vunpack.c.h.b16 %v66
  %v135 = vunpack.c.l.b16 %v67
  %v136 = vunpack.c.h.b16 %v67
  %v137 = vunpack.c.l.b16 %v68
  %v138 = vunpack.c.h.b16 %v68
  %v139 = vunpack.c.l.b16 %v69
  %v140 = vunpack.c.h.b16 %v69
  %v141 = vunpack.c.l.b16 %v70
  %v142 = vunpack.c.h.b16 %v70
  %v143 = vunpack.c.l.b16 %v71
  %v144 = vunpack.c.h.b16 %v71
  %v145 = vunpack.c.l.b16 %v72
  %v146 = vunpack.c.h.b16 %v72
  %v147 = vunpack.c.l.b16 %v73
  %v148 = vunpack.c.h.b16 %v73
  %v149 = vunpack.c.l.b16 %v74
  %v150 = vunpack.c.h.b16 %v74
  %v151 = vunpack.c.l.b16 %v75
  %v152 = vunpack.c.h.b16 %v75
  %v153 = vunpack.c.l.b16 %v76
  %v154 = vunpack.c.h.b16 %v76
  %v155 = vunpack.c.l.b16 %v77
  %v156 = vunpack.c.h.b16 %v77
  %v157 = vunpack.c.l.b16 %v78
  %v158 = vunpack.c.h.b16 %v78
  %v159 = vunpack.c.l.b16 %v79
  %v160 = vunpack.c.h.b16 %v79
  %v161 = vunpack.c.l.b16 %v80
  %v162 = vunpack.c.h.b16 %v80
  %v163 = vunpack.c.l.b16 %v81
  %v164 = vunpack.c.h.b16 %v81
  %v165 = vunpack.c.l.b16 %v82
  %v166 = vunpack.c.h.b16 %v82
  %v167 = vunpack.c.l.b16 %v83
  %v168 = vunpack.c.h.b16 %v83
  %v169 = vunpack.c.l.b16 %v84
  %v170 = vunpack.c.h.b16 %v84
  %v171 = vunpack.c.l.b16 %v85
  %v172 = vunpack.c.h.b16 %v85
  %v173 = vunpack.c.l.b16 %v86
  %v174 = vunpack.c.h.b16 %v86
  %v175 = vunpack.c.l.b16 %v87
  %v176 = vunpack.c.h.b16 %v87
  %v177 = vunpack.c.l.b16 %v88
  %v178 = vunpack.c.h.b16 %v88
  %v179 = vunpack.c.l.b16 %v89
  %v180 = vunpack.c.h.b16 %v89
  %v181 = vunpack.c.l.b16 %v90
  %v182 = vunpack.c.h.b16 %v90
  %v183 = vunpack.c.l.b16 %v91
  %v184 = vunpack.c.h.b16 %v91
  %v185 = vunpack.c.l.b16 %v92
  %v186 = vunpack.c.h.b16 %v92
  %v187 = vunpack.c.l.b16 %v93
  %v188 = vunpack.c.h.b16 %v93
  %v189 = vunpack.c.l.b16 %v94
  %v190 = vunpack.c.h.b16 %v94
  %v191 = vpack.c.b16 %v131, %v127
  %v192 = vpack.c.b16 %v132, %v128
  %v193 = vpack.c.b16 %v133, %v129
  %v194 = vpack.c.b16 %v134, %v130
  %v195 = vpack.c.b16 %v139, %v135
  %v196 = vpack.c.b16 %v140, %v136
  %v197 = vpack.c.b16 %v141, %v137
  %v198 = vpack.c.b16 %v142, %v138
  %v199 = vpack.c.b16 %v147, %v143
  %v200 = vpack.c.b16 %v148, %v144
  %v201 = vpack.c.b16 %v149, %v145
  %v202 = vpack.c.b16 %v150, %v146
  %v203 = vpack.c.b16 %v155, %v151
  %v204 = vpack.c.b16 %v156, %v152
  %v205 = vpack.c.b16 %v157, %v153
  %v206 = vpack.c.b16 %v158, %v154
  %v207 = vpack.c.b16 %v163, %v159
  %v208 = vpack.c.b16 %v164, %v160
  %v209 = vpack.c.b16 %v165, %v161
  %v210 = vpack.c.b16 %v166, %v162
  %v211 = vpack.c.b16 %v171, %v167
  %v212 = vpack.c.b16 %v172, %v168
  %v213 = vpack.c.b16 %v173, %v169
  %v214 = vpack.c.b16 %v174, %v170
  %v215 = vpack.c.b16 %v179, %v175
  %v216 = vpack.c.b16 %v180, %v176
  %v217 = vpack.c.b16 %v181, %v177
  %v218 = vpack.c.b16 %v182, %v178
  %v219 = vpack.c.b16 %v187, %v183
  %v220 = vpack.c.b16 %v188, %v184
  %v221 = vpack.c.b16 %v189, %v185
  %v222 = vpack.c.b16 %v190, %v186
  %255 = vmatpush.bf16.msra.mxu0 %v219
  %256 = vmatpush.bf16.msra.mxu0 %v215
  %257 = vmatpush.bf16.msra.mxu0 %v211
  %258 = vmatpush.bf16.msra.mxu0 %v207
  %259 = vmatpush.bf16.msra.mxu0 %v203
  %260 = vmatpush.bf16.msra.mxu0 %v199
  %261 = vmatpush.bf16.msra.mxu0 %v195
  %262 = vmatpush.bf16.msra.mxu0 %v191
  %263 = vmatmul.bf16.gmra.mxu0 %v62
  %v264 = vpop.f32.mrf.mxu0
  %v265 = vadd.f32 0.0, %v264
  %v266 = vpop.f32.mrf.mxu0
  %267 = vdwg.mxu0
  %268 = vmatpush.bf16.msra.mxu0 %v220
  %269 = vmatpush.bf16.msra.mxu0 %v216
  %270 = vmatpush.bf16.msra.mxu0 %v212
  %271 = vmatpush.bf16.msra.mxu0 %v208
  %272 = vmatpush.bf16.msra.mxu0 %v204
  %273 = vmatpush.bf16.msra.mxu0 %v200
  %274 = vmatpush.bf16.msra.mxu0 %v196
  %275 = vmatpush.bf16.msra.mxu0 %v192
  %276 = vmatmul.bf16.gmra.mxu0 %v62
  %v277 = vpop.f32.mrf.mxu0
  %v278 = vadd.f32 0.0, %v277
  %v279 = vpop.f32.mrf.mxu0
  %280 = vdwg.mxu0
  %281 = vmatpush.bf16.msra.mxu0 %v221
  %282 = vmatpush.bf16.msra.mxu0 %v217
  %283 = vmatpush.bf16.msra.mxu0 %v213
  %284 = vmatpush.bf16.msra.mxu0 %v209
  %285 = vmatpush.bf16.msra.mxu0 %v205
  %286 = vmatpush.bf16.msra.mxu0 %v201
  %287 = vmatpush.bf16.msra.mxu0 %v197
  %288 = vmatpush.bf16.msra.mxu0 %v193
  %289 = vmatmul.bf16.gmra.mxu0 %v62
  %v290 = vpop.f32.mrf.mxu0
  %v291 = vadd.f32 0.0, %v290
  %v292 = vpop.f32.mrf.mxu0
  %293 = vdwg.mxu0
  %294 = vmatpush.bf16.msra.mxu0 %v222
  %295 = vmatpush.bf16.msra.mxu0 %v218
  %296 = vmatpush.bf16.msra.mxu0 %v214
  %297 = vmatpush.bf16.msra.mxu0 %v210
  %298 = vmatpush.bf16.msra.mxu0 %v206
  %299 = vmatpush.bf16.msra.mxu0 %v202
  %300 = vmatpush.bf16.msra.mxu0 %v198
  %301 = vmatpush.bf16.msra.mxu0 %v194
  %302 = vmatmul.bf16.gmra.mxu0 %v62
  %v303 = vpop.f32.mrf.mxu0
  %v304 = vadd.f32 0.0, %v303
  %v305 = vpop.f32.mrf.mxu0
  %306 = vdwg.mxu0
  %v311 = vrot.slane %v265, 1
  %v312 = vrot.slane %v278, 1
  %v313 = vrot.slane %v291, 1
  %v314 = vrot.slane %v304, 1
  %v323 = vadd.f32 %v54, %v265
  %v324 = vadd.f32 %v55, %v278
  %v325 = vadd.f32 %v56, %v291
  %v326 = vadd.f32 %v57, %v304
  %v327 = vadd.f32 %v58, %v311
  %v328 = vadd.f32 %v59, %v312
  %v329 = vadd.f32 %v60, %v313
  %v330 = vadd.f32 %v61, %v314
  %v331 = vxor.u32 %v323, 2147483648
  %v332 = vxor.u32 %v327, 2147483648
  %v333 = vmul.f32 %v331, 1.442695
  %v334 = vpow.pop %v333
  %v335 = vmul.f32 %v332, 1.442695
  %v336 = vpow.pop %v335
  %v337 = vadd.f32 %v334, 1.0
  %v338 = vadd.f32 %v336, 1.0
  %v339 = vrcp.pop %v337
  %v340 = vmul.f32 %v337, %v339
  %v341 = vsub.f32 1.0, %v340
  %v342 = vmul.f32 %v339, %v341
  %v343 = vadd.f32 %v339, %v342
  %vm344 = vweird.f32 %v337
  %vm345 = vweird.f32 %v339
  %vm346 = vmor %vm344, %vm345
  %v347 = vsel %vm346, %v339, %v343
  %v348 = vand.u32 2147483647, %v337
  %vm349 = vcmp.eq.f32.partialorder %v348, 8.507059e+37
  %v350 = vand.u32 %v337, 2147483648
  %v351 = vor.u32 1.1754944e-38, %v350
  %v352 = vsel %vm349, %v351, %v347
  %v353 = vmul.f32 1.0, %v352
  %v354 = vrcp.pop %v338
  %v355 = vmul.f32 %v338, %v354
  %v356 = vsub.f32 1.0, %v355
  %v357 = vmul.f32 %v354, %v356
  %v358 = vadd.f32 %v354, %v357
  %vm359 = vweird.f32 %v338
  %vm360 = vweird.f32 %v354
  %vm361 = vmor %vm359, %vm360
  %v362 = vsel %vm361, %v354, %v358
  %v363 = vand.u32 2147483647, %v338
  %vm364 = vcmp.eq.f32.partialorder %v363, 8.507059e+37
  %v365 = vand.u32 %v338, 2147483648
  %v366 = vor.u32 1.1754944e-38, %v365
  %v367 = vsel %vm364, %v366, %v362
  %v368 = vmul.f32 1.0, %v367
  %v369 = vxor.u32 %v324, 2147483648
  %v370 = vxor.u32 %v328, 2147483648
  %v371 = vmul.f32 %v369, 1.442695
  %v372 = vpow.pop %v371
  %v373 = vmul.f32 %v370, 1.442695
  %v374 = vpow.pop %v373
  %v375 = vadd.f32 %v372, 1.0
  %v376 = vadd.f32 %v374, 1.0
  %v377 = vrcp.pop %v375
  %v378 = vmul.f32 %v375, %v377
  %v379 = vsub.f32 1.0, %v378
  %v380 = vmul.f32 %v377, %v379
  %v381 = vadd.f32 %v377, %v380
  %vm382 = vweird.f32 %v375
  %vm383 = vweird.f32 %v377
  %vm384 = vmor %vm382, %vm383
  %v385 = vsel %vm384, %v377, %v381
  %v386 = vand.u32 2147483647, %v375
  %vm387 = vcmp.eq.f32.partialorder %v386, 8.507059e+37
  %v388 = vand.u32 %v375, 2147483648
  %v389 = vor.u32 1.1754944e-38, %v388
  %v390 = vsel %vm387, %v389, %v385
  %v391 = vmul.f32 1.0, %v390
  %v392 = vrcp.pop %v376
  %v393 = vmul.f32 %v376, %v392
  %v394 = vsub.f32 1.0, %v393
  %v395 = vmul.f32 %v392, %v394
  %v396 = vadd.f32 %v392, %v395
  %vm397 = vweird.f32 %v376
  %vm398 = vweird.f32 %v392
  %vm399 = vmor %vm397, %vm398
  %v400 = vsel %vm399, %v392, %v396
  %v401 = vand.u32 2147483647, %v376
  %vm402 = vcmp.eq.f32.partialorder %v401, 8.507059e+37
  %v403 = vand.u32 %v376, 2147483648
  %v404 = vor.u32 1.1754944e-38, %v403
  %v405 = vsel %vm402, %v404, %v400
  %v406 = vmul.f32 1.0, %v405
  %v407 = vtanh.pop %v325
  %v408 = vtanh.pop %v329
  %v409 = vxor.u32 %v326, 2147483648
  %v410 = vxor.u32 %v330, 2147483648
  %v411 = vmul.f32 %v409, 1.442695
  %v412 = vpow.pop %v411
  %v413 = vmul.f32 %v410, 1.442695
  %v414 = vpow.pop %v413
  %v415 = vadd.f32 %v412, 1.0
  %v416 = vadd.f32 %v414, 1.0
  %v417 = vrcp.pop %v415
  %v418 = vmul.f32 %v415, %v417
  %v419 = vsub.f32 1.0, %v418
  %v420 = vmul.f32 %v417, %v419
  %v421 = vadd.f32 %v417, %v420
  %vm422 = vweird.f32 %v415
  %vm423 = vweird.f32 %v417
  %vm424 = vmor %vm422, %vm423
  %v425 = vsel %vm424, %v417, %v421
  %v426 = vand.u32 2147483647, %v415
  %vm427 = vcmp.eq.f32.partialorder %v426, 8.507059e+37
  %v428 = vand.u32 %v415, 2147483648
  %v429 = vor.u32 1.1754944e-38, %v428
  %v430 = vsel %vm427, %v429, %v425
  %v431 = vmul.f32 1.0, %v430
  %v432 = vrcp.pop %v416
  %v433 = vmul.f32 %v416, %v432
  %v434 = vsub.f32 1.0, %v433
  %v435 = vmul.f32 %v432, %v434
  %v436 = vadd.f32 %v432, %v435
  %vm437 = vweird.f32 %v416
  %vm438 = vweird.f32 %v432
  %vm439 = vmor %vm437, %vm438
  %v440 = vsel %vm439, %v432, %v436
  %v441 = vand.u32 2147483647, %v416
  %vm442 = vcmp.eq.f32.partialorder %v441, 8.507059e+37
  %v443 = vand.u32 %v416, 2147483648
  %v444 = vor.u32 1.1754944e-38, %v443
  %v445 = vsel %vm442, %v444, %v440
  %v446 = vmul.f32 1.0, %v445
  %v448 = vrot.slane %v37, 1
  %v451 = vmul.f32 %v391, %v37
  %v452 = vmul.f32 %v406, %v448
  %v453 = vmul.f32 %v353, %v407
  %v454 = vmul.f32 %v368, %v408
  %v455 = vadd.f32 %v451, %v453
  %v456 = vadd.f32 %v452, %v454
  %v457 = vtanh.pop %v455
  %v458 = vtanh.pop %v456
  %v459 = vmul.f32 %v431, %v457
  %v460 = vmul.f32 %v446, %v458
  %v461 = vpack.c.bf16 %v459, %v459
  %v462 = vpack.c.bf16 %v460, %v460
  %v463 = vld [vmem:[%s2] sm:$0xff]
  %v464 = vld [vmem:[%s2 + $0x8] sm:$0xff]
  %v465 = vld [vmem:[%s2 + $0x10] sm:$0xff]
  %v466 = vld [vmem:[%s2 + $0x18] sm:$0xff]
  %v467 = vld [vmem:[%s2 + $0x20] sm:$0xff]
  %v468 = vld [vmem:[%s2 + $0x28] sm:$0xff]
  %v469 = vld [vmem:[%s2 + $0x30] sm:$0xff]
  %v470 = vld [vmem:[%s2 + $0x38] sm:$0xff]
  %v471 = vld [vmem:[%s2 + $0x40] sm:$0xff]
  %v472 = vld [vmem:[%s2 + $0x48] sm:$0xff]
  %v473 = vld [vmem:[%s2 + $0x50] sm:$0xff]
  %v474 = vld [vmem:[%s2 + $0x58] sm:$0xff]
  %v475 = vld [vmem:[%s2 + $0x60] sm:$0xff]
  %v476 = vld [vmem:[%s2 + $0x68] sm:$0xff]
  %v477 = vld [vmem:[%s2 + $0x70] sm:$0xff]
  %v478 = vld [vmem:[%s2 + $0x78] sm:$0xff]
  %v479 = vld [vmem:[%s2 + $0x80] sm:$0xff]
  %v480 = vld [vmem:[%s2 + $0x88] sm:$0xff]
  %v481 = vld [vmem:[%s2 + $0x90] sm:$0xff]
  %v482 = vld [vmem:[%s2 + $0x98] sm:$0xff]
  %v483 = vld [vmem:[%s2 + $0xa0] sm:$0xff]
  %v484 = vld [vmem:[%s2 + $0xa8] sm:$0xff]
  %v485 = vld [vmem:[%s2 + $0xb0] sm:$0xff]
  %v486 = vld [vmem:[%s2 + $0xb8] sm:$0xff]
  %v487 = vld [vmem:[%s2 + $0xc0] sm:$0xff]
  %v488 = vld [vmem:[%s2 + $0xc8] sm:$0xff]
  %v489 = vld [vmem:[%s2 + $0xd0] sm:$0xff]
  %v490 = vld [vmem:[%s2 + $0xd8] sm:$0xff]
  %v491 = vld [vmem:[%s2 + $0xe0] sm:$0xff]
  %v492 = vld [vmem:[%s2 + $0xe8] sm:$0xff]
  %v493 = vld [vmem:[%s2 + $0xf0] sm:$0xff]
  %v494 = vld [vmem:[%s2 + $0xf8] sm:$0xff]
  %v495 = vpack.c.bf16 %v36, %v36
  %v496 = vld [vmem:[%s3] sm:$0xff]
  %v497 = vld [vmem:[%s3 + $0x8] sm:$0xff]
  %v498 = vld [vmem:[%s3 + $0x10] sm:$0xff]
  %v499 = vld [vmem:[%s3 + $0x18] sm:$0xff]
  %v500 = vld [vmem:[%s3 + $0x20] sm:$0xff]
  %v501 = vld [vmem:[%s3 + $0x28] sm:$0xff]
  %v502 = vld [vmem:[%s3 + $0x30] sm:$0xff]
  %v503 = vld [vmem:[%s3 + $0x38] sm:$0xff]
  %v504 = vld [vmem:[%s3 + $0x40] sm:$0xff]
  %v505 = vld [vmem:[%s3 + $0x48] sm:$0xff]
  %v506 = vld [vmem:[%s3 + $0x50] sm:$0xff]
  %v507 = vld [vmem:[%s3 + $0x58] sm:$0xff]
  %v508 = vld [vmem:[%s3 + $0x60] sm:$0xff]
  %v509 = vld [vmem:[%s3 + $0x68] sm:$0xff]
  %v510 = vld [vmem:[%s3 + $0x70] sm:$0xff]
  %v511 = vld [vmem:[%s3 + $0x78] sm:$0xff]
  %v512 = vld [vmem:[%s3 + $0x80] sm:$0xff]
  %v513 = vld [vmem:[%s3 + $0x88] sm:$0xff]
  %v514 = vld [vmem:[%s3 + $0x90] sm:$0xff]
  %v515 = vld [vmem:[%s3 + $0x98] sm:$0xff]
  %v516 = vld [vmem:[%s3 + $0xa0] sm:$0xff]
  %v517 = vld [vmem:[%s3 + $0xa8] sm:$0xff]
  %v518 = vld [vmem:[%s3 + $0xb0] sm:$0xff]
  %v519 = vld [vmem:[%s3 + $0xb8] sm:$0xff]
  %v520 = vld [vmem:[%s3 + $0xc0] sm:$0xff]
  %v521 = vld [vmem:[%s3 + $0xc8] sm:$0xff]
  %v522 = vld [vmem:[%s3 + $0xd0] sm:$0xff]
  %v523 = vld [vmem:[%s3 + $0xd8] sm:$0xff]
  %v524 = vld [vmem:[%s3 + $0xe0] sm:$0xff]
  %v525 = vld [vmem:[%s3 + $0xe8] sm:$0xff]
  %v526 = vld [vmem:[%s3 + $0xf0] sm:$0xff]
  %v527 = vld [vmem:[%s3 + $0xf8] sm:$0xff]
  %v560 = vunpack.c.l.b16 %v496
  %v561 = vunpack.c.h.b16 %v496
  %v562 = vunpack.c.l.b16 %v497
  %v563 = vunpack.c.h.b16 %v497
  %v564 = vunpack.c.l.b16 %v498
  %v565 = vunpack.c.h.b16 %v498
  %v566 = vunpack.c.l.b16 %v499
  %v567 = vunpack.c.h.b16 %v499
  %v568 = vunpack.c.l.b16 %v500
  %v569 = vunpack.c.h.b16 %v500
  %v570 = vunpack.c.l.b16 %v501
  %v571 = vunpack.c.h.b16 %v501
  %v572 = vunpack.c.l.b16 %v502
  %v573 = vunpack.c.h.b16 %v502
  %v574 = vunpack.c.l.b16 %v503
  %v575 = vunpack.c.h.b16 %v503
  %v576 = vunpack.c.l.b16 %v504
  %v577 = vunpack.c.h.b16 %v504
  %v578 = vunpack.c.l.b16 %v505
  %v579 = vunpack.c.h.b16 %v505
  %v580 = vunpack.c.l.b16 %v506
  %v581 = vunpack.c.h.b16 %v506
  %v582 = vunpack.c.l.b16 %v507
  %v583 = vunpack.c.h.b16 %v507
  %v584 = vunpack.c.l.b16 %v508
  %v585 = vunpack.c.h.b16 %v508
  %v586 = vunpack.c.l.b16 %v509
  %v587 = vunpack.c.h.b16 %v509
  %v588 = vunpack.c.l.b16 %v510
  %v589 = vunpack.c.h.b16 %v510
  %v590 = vunpack.c.l.b16 %v511
  %v591 = vunpack.c.h.b16 %v511
  %v592 = vunpack.c.l.b16 %v512
  %v593 = vunpack.c.h.b16 %v512
  %v594 = vunpack.c.l.b16 %v513
  %v595 = vunpack.c.h.b16 %v513
  %v596 = vunpack.c.l.b16 %v514
  %v597 = vunpack.c.h.b16 %v514
  %v598 = vunpack.c.l.b16 %v515
  %v599 = vunpack.c.h.b16 %v515
  %v600 = vunpack.c.l.b16 %v516
  %v601 = vunpack.c.h.b16 %v516
  %v602 = vunpack.c.l.b16 %v517
  %v603 = vunpack.c.h.b16 %v517
  %v604 = vunpack.c.l.b16 %v518
  %v605 = vunpack.c.h.b16 %v518
  %v606 = vunpack.c.l.b16 %v519
  %v607 = vunpack.c.h.b16 %v519
  %v608 = vunpack.c.l.b16 %v520
  %v609 = vunpack.c.h.b16 %v520
  %v610 = vunpack.c.l.b16 %v521
  %v611 = vunpack.c.h.b16 %v521
  %v612 = vunpack.c.l.b16 %v522
  %v613 = vunpack.c.h.b16 %v522
  %v614 = vunpack.c.l.b16 %v523
  %v615 = vunpack.c.h.b16 %v523
  %v616 = vunpack.c.l.b16 %v524
  %v617 = vunpack.c.h.b16 %v524
  %v618 = vunpack.c.l.b16 %v525
  %v619 = vunpack.c.h.b16 %v525
  %v620 = vunpack.c.l.b16 %v526
  %v621 = vunpack.c.h.b16 %v526
  %v622 = vunpack.c.l.b16 %v527
  %v623 = vunpack.c.h.b16 %v527
  %v624 = vpack.c.b16 %v564, %v560
  %v625 = vpack.c.b16 %v565, %v561
  %v626 = vpack.c.b16 %v566, %v562
  %v627 = vpack.c.b16 %v567, %v563
  %v628 = vpack.c.b16 %v572, %v568
  %v629 = vpack.c.b16 %v573, %v569
  %v630 = vpack.c.b16 %v574, %v570
  %v631 = vpack.c.b16 %v575, %v571
  %v632 = vpack.c.b16 %v580, %v576
  %v633 = vpack.c.b16 %v581, %v577
  %v634 = vpack.c.b16 %v582, %v578
  %v635 = vpack.c.b16 %v583, %v579
  %v636 = vpack.c.b16 %v588, %v584
  %v637 = vpack.c.b16 %v589, %v585
  %v638 = vpack.c.b16 %v590, %v586
  %v639 = vpack.c.b16 %v591, %v587
  %v640 = vpack.c.b16 %v596, %v592
  %v641 = vpack.c.b16 %v597, %v593
  %v642 = vpack.c.b16 %v598, %v594
  %v643 = vpack.c.b16 %v599, %v595
  %v644 = vpack.c.b16 %v604, %v600
  %v645 = vpack.c.b16 %v605, %v601
  %v646 = vpack.c.b16 %v606, %v602
  %v647 = vpack.c.b16 %v607, %v603
  %v648 = vpack.c.b16 %v612, %v608
  %v649 = vpack.c.b16 %v613, %v609
  %v650 = vpack.c.b16 %v614, %v610
  %v651 = vpack.c.b16 %v615, %v611
  %v652 = vpack.c.b16 %v620, %v616
  %v653 = vpack.c.b16 %v621, %v617
  %v654 = vpack.c.b16 %v622, %v618
  %v655 = vpack.c.b16 %v623, %v619
  %688 = vmatpush.bf16.msra.mxu0 %v652
  %689 = vmatpush.bf16.msra.mxu0 %v648
  %690 = vmatpush.bf16.msra.mxu0 %v644
  %691 = vmatpush.bf16.msra.mxu0 %v640
  %692 = vmatpush.bf16.msra.mxu0 %v636
  %693 = vmatpush.bf16.msra.mxu0 %v632
  %694 = vmatpush.bf16.msra.mxu0 %v628
  %695 = vmatpush.bf16.msra.mxu0 %v624
  %696 = vmatmul.bf16.gmra.mxu0 %v495
  %v697 = vpop.f32.mrf.mxu0
  %v698 = vadd.f32 0.0, %v697
  %v699 = vpop.f32.mrf.mxu0
  %700 = vdwg.mxu0
  %701 = vmatpush.bf16.msra.mxu0 %v653
  %702 = vmatpush.bf16.msra.mxu0 %v649
  %703 = vmatpush.bf16.msra.mxu0 %v645
  %704 = vmatpush.bf16.msra.mxu0 %v641
  %705 = vmatpush.bf16.msra.mxu0 %v637
  %706 = vmatpush.bf16.msra.mxu0 %v633
  %707 = vmatpush.bf16.msra.mxu0 %v629
  %708 = vmatpush.bf16.msra.mxu0 %v625
  %709 = vmatmul.bf16.gmra.mxu0 %v495
  %v710 = vpop.f32.mrf.mxu0
  %v711 = vadd.f32 0.0, %v710
  %v712 = vpop.f32.mrf.mxu0
  %713 = vdwg.mxu0
  %714 = vmatpush.bf16.msra.mxu0 %v654
  %715 = vmatpush.bf16.msra.mxu0 %v650
  %716 = vmatpush.bf16.msra.mxu0 %v646
  %717 = vmatpush.bf16.msra.mxu0 %v642
  %718 = vmatpush.bf16.msra.mxu0 %v638
  %719 = vmatpush.bf16.msra.mxu0 %v634
  %720 = vmatpush.bf16.msra.mxu0 %v630
  %721 = vmatpush.bf16.msra.mxu0 %v626
  %722 = vmatmul.bf16.gmra.mxu0 %v495
  %v723 = vpop.f32.mrf.mxu0
  %v724 = vadd.f32 0.0, %v723
  %v725 = vpop.f32.mrf.mxu0
  %726 = vdwg.mxu0
  %727 = vmatpush.bf16.msra.mxu0 %v655
  %728 = vmatpush.bf16.msra.mxu0 %v651
  %729 = vmatpush.bf16.msra.mxu0 %v647
  %730 = vmatpush.bf16.msra.mxu0 %v643
  %731 = vmatpush.bf16.msra.mxu0 %v639
  %732 = vmatpush.bf16.msra.mxu0 %v635
  %733 = vmatpush.bf16.msra.mxu0 %v631
  %734 = vmatpush.bf16.msra.mxu0 %v627
  %735 = vmatmul.bf16.gmra.mxu0 %v495
  %v736 = vpop.f32.mrf.mxu0
  %v737 = vadd.f32 0.0, %v736
  %v738 = vpop.f32.mrf.mxu0
  %739 = vdwg.mxu0
  %v742 = vunpack.c.l.b16 %v461
  %v743 = vunpack.c.l.b16 %v462
  %v744 = vrot.slane %v743, 7
  %vm745 = vcmask 1041409
  %v746 = vsel %vm745, %v744, %v742
  %v747 = vpack.c.b16 %v746, %v746
  %v781 = vunpack.c.l.b16 %v463
  %v782 = vunpack.c.h.b16 %v463
  %v783 = vunpack.c.l.b16 %v464
  %v784 = vunpack.c.h.b16 %v464
  %v785 = vunpack.c.l.b16 %v465
  %v786 = vunpack.c.h.b16 %v465
  %v787 = vunpack.c.l.b16 %v466
  %v788 = vunpack.c.h.b16 %v466
  %v789 = vunpack.c.l.b16 %v467
  %v790 = vunpack.c.h.b16 %v467
  %v791 = vunpack.c.l.b16 %v468
  %v792 = vunpack.c.h.b16 %v468
  %v793 = vunpack.c.l.b16 %v469
  %v794 = vunpack.c.h.b16 %v469
  %v795 = vunpack.c.l.b16 %v470
  %v796 = vunpack.c.h.b16 %v470
  %v797 = vunpack.c.l.b16 %v471
  %v798 = vunpack.c.h.b16 %v471
  %v799 = vunpack.c.l.b16 %v472
  %v800 = vunpack.c.h.b16 %v472
  %v801 = vunpack.c.l.b16 %v473
  %v802 = vunpack.c.h.b16 %v473
  %v803 = vunpack.c.l.b16 %v474
  %v804 = vunpack.c.h.b16 %v474
  %v805 = vunpack.c.l.b16 %v475
  %v806 = vunpack.c.h.b16 %v475
  %v807 = vunpack.c.l.b16 %v476
  %v808 = vunpack.c.h.b16 %v476
  %v809 = vunpack.c.l.b16 %v477
  %v810 = vunpack.c.h.b16 %v477
  %v811 = vunpack.c.l.b16 %v478
  %v812 = vunpack.c.h.b16 %v478
  %v813 = vunpack.c.l.b16 %v479
  %v814 = vunpack.c.h.b16 %v479
  %v815 = vunpack.c.l.b16 %v480
  %v816 = vunpack.c.h.b16 %v480
  %v817 = vunpack.c.l.b16 %v481
  %v818 = vunpack.c.h.b16 %v481
  %v819 = vunpack.c.l.b16 %v482
  %v820 = vunpack.c.h.b16 %v482
  %v821 = vunpack.c.l.b16 %v483
  %v822 = vunpack.c.h.b16 %v483
  %v823 = vunpack.c.l.b16 %v484
  %v824 = vunpack.c.h.b16 %v484
  %v825 = vunpack.c.l.b16 %v485
  %v826 = vunpack.c.h.b16 %v485
  %v827 = vunpack.c.l.b16 %v486
  %v828 = vunpack.c.h.b16 %v486
  %v829 = vunpack.c.l.b16 %v487
  %v830 = vunpack.c.h.b16 %v487
  %v831 = vunpack.c.l.b16 %v488
  %v832 = vunpack.c.h.b16 %v488
  %v833 = vunpack.c.l.b16 %v489
  %v834 = vunpack.c.h.b16 %v489
  %v835 = vunpack.c.l.b16 %v490
  %v836 = vunpack.c.h.b16 %v490
  %v837 = vunpack.c.l.b16 %v491
  %v838 = vunpack.c.h.b16 %v491
  %v839 = vunpack.c.l.b16 %v492
  %v840 = vunpack.c.h.b16 %v492
  %v841 = vunpack.c.l.b16 %v493
  %v842 = vunpack.c.h.b16 %v493
  %v843 = vunpack.c.l.b16 %v494
  %v844 = vunpack.c.h.b16 %v494
  %v845 = vpack.c.b16 %v785, %v781
  %v846 = vpack.c.b16 %v786, %v782
  %v847 = vpack.c.b16 %v787, %v783
  %v848 = vpack.c.b16 %v788, %v784
  %v849 = vpack.c.b16 %v793, %v789
  %v850 = vpack.c.b16 %v794, %v790
  %v851 = vpack.c.b16 %v795, %v791
  %v852 = vpack.c.b16 %v796, %v792
  %v853 = vpack.c.b16 %v801, %v797
  %v854 = vpack.c.b16 %v802, %v798
  %v855 = vpack.c.b16 %v803, %v799
  %v856 = vpack.c.b16 %v804, %v800
  %v857 = vpack.c.b16 %v809, %v805
  %v858 = vpack.c.b16 %v810, %v806
  %v859 = vpack.c.b16 %v811, %v807
  %v860 = vpack.c.b16 %v812, %v808
  %v861 = vpack.c.b16 %v817, %v813
  %v862 = vpack.c.b16 %v818, %v814
  %v863 = vpack.c.b16 %v819, %v815
  %v864 = vpack.c.b16 %v820, %v816
  %v865 = vpack.c.b16 %v825, %v821
  %v866 = vpack.c.b16 %v826, %v822
  %v867 = vpack.c.b16 %v827, %v823
  %v868 = vpack.c.b16 %v828, %v824
  %v869 = vpack.c.b16 %v833, %v829
  %v870 = vpack.c.b16 %v834, %v830
  %v871 = vpack.c.b16 %v835, %v831
  %v872 = vpack.c.b16 %v836, %v832
  %v873 = vpack.c.b16 %v841, %v837
  %v874 = vpack.c.b16 %v842, %v838
  %v875 = vpack.c.b16 %v843, %v839
  %v876 = vpack.c.b16 %v844, %v840
  %909 = vmatpush.bf16.msra.mxu0 %v873
  %910 = vmatpush.bf16.msra.mxu0 %v869
  %911 = vmatpush.bf16.msra.mxu0 %v865
  %912 = vmatpush.bf16.msra.mxu0 %v861
  %913 = vmatpush.bf16.msra.mxu0 %v857
  %914 = vmatpush.bf16.msra.mxu0 %v853
  %915 = vmatpush.bf16.msra.mxu0 %v849
  %916 = vmatpush.bf16.msra.mxu0 %v845
  %917 = vmatmul.bf16.gmra.mxu0 %v747
  %v918 = vpop.f32.mrf.mxu0
  %v919 = vadd.f32 %v698, %v918
  %v920 = vpop.f32.mrf.mxu0
  %921 = vdwg.mxu0
  %922 = vmatpush.bf16.msra.mxu0 %v874
  %923 = vmatpush.bf16.msra.mxu0 %v870
  %924 = vmatpush.bf16.msra.mxu0 %v866
  %925 = vmatpush.bf16.msra.mxu0 %v862
  %926 = vmatpush.bf16.msra.mxu0 %v858
  %927 = vmatpush.bf16.msra.mxu0 %v854
  %928 = vmatpush.bf16.msra.mxu0 %v850
  %929 = vmatpush.bf16.msra.mxu0 %v846
  %930 = vmatmul.bf16.gmra.mxu0 %v747
  %v931 = vpop.f32.mrf.mxu0
  %v932 = vadd.f32 %v711, %v931
  %v933 = vpop.f32.mrf.mxu0
  %934 = vdwg.mxu0
  %935 = vmatpush.bf16.msra.mxu0 %v875
  %936 = vmatpush.bf16.msra.mxu0 %v871
  %937 = vmatpush.bf16.msra.mxu0 %v867
  %938 = vmatpush.bf16.msra.mxu0 %v863
  %939 = vmatpush.bf16.msra.mxu0 %v859
  %940 = vmatpush.bf16.msra.mxu0 %v855
  %941 = vmatpush.bf16.msra.mxu0 %v851
  %942 = vmatpush.bf16.msra.mxu0 %v847
  %943 = vmatmul.bf16.gmra.mxu0 %v747
  %v944 = vpop.f32.mrf.mxu0
  %v945 = vadd.f32 %v724, %v944
  %v946 = vpop.f32.mrf.mxu0
  %947 = vdwg.mxu0
  %948 = vmatpush.bf16.msra.mxu0 %v876
  %949 = vmatpush.bf16.msra.mxu0 %v872
  %950 = vmatpush.bf16.msra.mxu0 %v868
  %951 = vmatpush.bf16.msra.mxu0 %v864
  %952 = vmatpush.bf16.msra.mxu0 %v860
  %953 = vmatpush.bf16.msra.mxu0 %v856
  %954 = vmatpush.bf16.msra.mxu0 %v852
  %955 = vmatpush.bf16.msra.mxu0 %v848
  %956 = vmatmul.bf16.gmra.mxu0 %v747
  %v957 = vpop.f32.mrf.mxu0
  %v958 = vadd.f32 %v737, %v957
  %v959 = vpop.f32.mrf.mxu0
  %960 = vdwg.mxu0
  %v961 = vadd.f32 %v919, %v42
  %v962 = vadd.f32 %v932, %v43
  %v963 = vadd.f32 %v945, %v44
  %v964 = vadd.f32 %v958, %v45
  %v965 = vxor.u32 %v961, 2147483648
  %v966 = vmul.f32 %v965, 1.442695
  %v967 = vpow.pop %v966
  %v968 = vadd.f32 %v967, 1.0
  %v969 = vrcp.pop %v968
  %v970 = vmul.f32 %v968, %v969
  %v971 = vsub.f32 1.0, %v970
  %v972 = vmul.f32 %v969, %v971
  %v973 = vadd.f32 %v969, %v972
  %vm974 = vweird.f32 %v968
  %vm975 = vweird.f32 %v969
  %vm976 = vmor %vm974, %vm975
  %v977 = vsel %vm976, %v969, %v973
  %v978 = vand.u32 2147483647, %v968
  %vm979 = vcmp.eq.f32.partialorder %v978, 8.507059e+37
  %v980 = vand.u32 %v968, 2147483648
  %v981 = vor.u32 1.1754944e-38, %v980
  %v982 = vsel %vm979, %v981, %v977
  %v983 = vmul.f32 1.0, %v982
  %v984 = vxor.u32 %v962, 2147483648
  %v985 = vmul.f32 %v984, 1.442695
  %v986 = vpow.pop %v985
  %v987 = vadd.f32 %v986, 1.0
  %v988 = vrcp.pop %v987
  %v989 = vmul.f32 %v987, %v988
  %v990 = vsub.f32 1.0, %v989
  %v991 = vmul.f32 %v988, %v990
  %v992 = vadd.f32 %v988, %v991
  %vm993 = vweird.f32 %v987
  %vm994 = vweird.f32 %v988
  %vm995 = vmor %vm993, %vm994
  %v996 = vsel %vm995, %v988, %v992
  %v997 = vand.u32 2147483647, %v987
  %vm998 = vcmp.eq.f32.partialorder %v997, 8.507059e+37
  %v999 = vand.u32 %v987, 2147483648
  %v1000 = vor.u32 1.1754944e-38, %v999
  %v1001 = vsel %vm998, %v1000, %v996
  %v1002 = vmul.f32 1.0, %v1001
  %v1003 = vtanh.pop %v963
  %v1004 = vxor.u32 %v964, 2147483648
  %v1005 = vmul.f32 %v1004, 1.442695
  %v1006 = vpow.pop %v1005
  %v1007 = vadd.f32 %v1006, 1.0
  %v1008 = vrcp.pop %v1007
  %v1009 = vmul.f32 %v1007, %v1008
  %v1010 = vsub.f32 1.0, %v1009
  %v1011 = vmul.f32 %v1008, %v1010
  %v1012 = vadd.f32 %v1008, %v1011
  %vm1013 = vweird.f32 %v1007
  %vm1014 = vweird.f32 %v1008
  %vm1015 = vmor %vm1013, %vm1014
  %v1016 = vsel %vm1015, %v1008, %v1012
  %v1017 = vand.u32 2147483647, %v1007
  %vm1018 = vcmp.eq.f32.partialorder %v1017, 8.507059e+37
  %v1019 = vand.u32 %v1007, 2147483648
  %v1020 = vor.u32 1.1754944e-38, %v1019
  %v1021 = vsel %vm1018, %v1020, %v1016
  %v1022 = vmul.f32 1.0, %v1021
  %v1023 = vmul.f32 %v1002, %v39
  %v1024 = vmul.f32 %v983, %v1003
  %v1025 = vadd.f32 %v1023, %v1024
  %v1026 = vtanh.pop %v1025
  %v1027 = vmul.f32 %v1022, %v1026
  %1028 = vmatpush.bf16.msra.mxu0 %v219
  %1029 = vmatpush.bf16.msra.mxu0 %v215
  %1030 = vmatpush.bf16.msra.mxu0 %v211
  %1031 = vmatpush.bf16.msra.mxu0 %v207
  %1032 = vmatpush.bf16.msra.mxu0 %v203
  %1033 = vmatpush.bf16.msra.mxu0 %v199
  %1034 = vmatpush.bf16.msra.mxu0 %v195
  %1035 = vmatpush.bf16.msra.mxu0 %v191
  %1036 = vmatmul.bf16.gmra.mxu0 %v747
  %v1037 = vpop.f32.mrf.mxu0
  %v1038 = vadd.f32 0.0, %v1037
  %v1039 = vpop.f32.mrf.mxu0
  %1040 = vdwg.mxu0
  %1041 = vmatpush.bf16.msra.mxu0 %v220
  %1042 = vmatpush.bf16.msra.mxu0 %v216
  %1043 = vmatpush.bf16.msra.mxu0 %v212
  %1044 = vmatpush.bf16.msra.mxu0 %v208
  %1045 = vmatpush.bf16.msra.mxu0 %v204
  %1046 = vmatpush.bf16.msra.mxu0 %v200
  %1047 = vmatpush.bf16.msra.mxu0 %v196
  %1048 = vmatpush.bf16.msra.mxu0 %v192
  %1049 = vmatmul.bf16.gmra.mxu0 %v747
  %v1050 = vpop.f32.mrf.mxu0
  %v1051 = vadd.f32 0.0, %v1050
  %v1052 = vpop.f32.mrf.mxu0
  %1053 = vdwg.mxu0
  %1054 = vmatpush.bf16.msra.mxu0 %v221
  %1055 = vmatpush.bf16.msra.mxu0 %v217
  %1056 = vmatpush.bf16.msra.mxu0 %v213
  %1057 = vmatpush.bf16.msra.mxu0 %v209
  %1058 = vmatpush.bf16.msra.mxu0 %v205
  %1059 = vmatpush.bf16.msra.mxu0 %v201
  %1060 = vmatpush.bf16.msra.mxu0 %v197
  %1061 = vmatpush.bf16.msra.mxu0 %v193
  %1062 = vmatmul.bf16.gmra.mxu0 %v747
  %v1063 = vpop.f32.mrf.mxu0
  %v1064 = vadd.f32 0.0, %v1063
  %v1065 = vpop.f32.mrf.mxu0
  %1066 = vdwg.mxu0
  %1067 = vmatpush.bf16.msra.mxu0 %v222
  %1068 = vmatpush.bf16.msra.mxu0 %v218
  %1069 = vmatpush.bf16.msra.mxu0 %v214
  %1070 = vmatpush.bf16.msra.mxu0 %v210
  %1071 = vmatpush.bf16.msra.mxu0 %v206
  %1072 = vmatpush.bf16.msra.mxu0 %v202
  %1073 = vmatpush.bf16.msra.mxu0 %v198
  %1074 = vmatpush.bf16.msra.mxu0 %v194
  %1075 = vmatmul.bf16.gmra.mxu0 %v747
  %v1076 = vpop.f32.mrf.mxu0
  %v1077 = vadd.f32 0.0, %v1076
  %v1078 = vpop.f32.mrf.mxu0
  %1079 = vdwg.mxu0
  %v1084 = vrot.slane %v1038, 7
  %v1085 = vrot.slane %v1051, 7
  %v1086 = vrot.slane %v1064, 7
  %v1087 = vrot.slane %v1077, 7
  %v1096 = vadd.f32 %v54, %v1084
  %v1097 = vadd.f32 %v55, %v1085
  %v1098 = vadd.f32 %v56, %v1086
  %v1099 = vadd.f32 %v57, %v1087
  %v1100 = vadd.f32 %v58, %v1038
  %v1101 = vadd.f32 %v59, %v1051
  %v1102 = vadd.f32 %v60, %v1064
  %v1103 = vadd.f32 %v61, %v1077
  %v1104 = vxor.u32 %v1096, 2147483648
  %v1105 = vxor.u32 %v1100, 2147483648
  %v1106 = vmul.f32 %v1104, 1.442695
  %v1107 = vpow.pop %v1106
  %v1108 = vmul.f32 %v1105, 1.442695
  %v1109 = vpow.pop %v1108
  %v1110 = vadd.f32 %v1107, 1.0
  %v1111 = vadd.f32 %v1109, 1.0
  %v1112 = vrcp.pop %v1110
  %v1113 = vmul.f32 %v1110, %v1112
  %v1114 = vsub.f32 1.0, %v1113
  %v1115 = vmul.f32 %v1112, %v1114
  %v1116 = vadd.f32 %v1112, %v1115
  %vm1117 = vweird.f32 %v1110
  %vm1118 = vweird.f32 %v1112
  %vm1119 = vmor %vm1117, %vm1118
  %v1120 = vsel %vm1119, %v1112, %v1116
  %v1121 = vand.u32 2147483647, %v1110
  %vm1122 = vcmp.eq.f32.partialorder %v1121, 8.507059e+37
  %v1123 = vand.u32 %v1110, 2147483648
  %v1124 = vor.u32 1.1754944e-38, %v1123
  %v1125 = vsel %vm1122, %v1124, %v1120
  %v1126 = vmul.f32 1.0, %v1125
  %v1127 = vrcp.pop %v1111
  %v1128 = vmul.f32 %v1111, %v1127
  %v1129 = vsub.f32 1.0, %v1128
  %v1130 = vmul.f32 %v1127, %v1129
  %v1131 = vadd.f32 %v1127, %v1130
  %vm1132 = vweird.f32 %v1111
  %vm1133 = vweird.f32 %v1127
  %vm1134 = vmor %vm1132, %vm1133
  %v1135 = vsel %vm1134, %v1127, %v1131
  %v1136 = vand.u32 2147483647, %v1111
  %vm1137 = vcmp.eq.f32.partialorder %v1136, 8.507059e+37
  %v1138 = vand.u32 %v1111, 2147483648
  %v1139 = vor.u32 1.1754944e-38, %v1138
  %v1140 = vsel %vm1137, %v1139, %v1135
  %v1141 = vmul.f32 1.0, %v1140
  %v1142 = vxor.u32 %v1097, 2147483648
  %v1143 = vxor.u32 %v1101, 2147483648
  %v1144 = vmul.f32 %v1142, 1.442695
  %v1145 = vpow.pop %v1144
  %v1146 = vmul.f32 %v1143, 1.442695
  %v1147 = vpow.pop %v1146
  %v1148 = vadd.f32 %v1145, 1.0
  %v1149 = vadd.f32 %v1147, 1.0
  %v1150 = vrcp.pop %v1148
  %v1151 = vmul.f32 %v1148, %v1150
  %v1152 = vsub.f32 1.0, %v1151
  %v1153 = vmul.f32 %v1150, %v1152
  %v1154 = vadd.f32 %v1150, %v1153
  %vm1155 = vweird.f32 %v1148
  %vm1156 = vweird.f32 %v1150
  %vm1157 = vmor %vm1155, %vm1156
  %v1158 = vsel %vm1157, %v1150, %v1154
  %v1159 = vand.u32 2147483647, %v1148
  %vm1160 = vcmp.eq.f32.partialorder %v1159, 8.507059e+37
  %v1161 = vand.u32 %v1148, 2147483648
  %v1162 = vor.u32 1.1754944e-38, %v1161
  %v1163 = vsel %vm1160, %v1162, %v1158
  %v1164 = vmul.f32 1.0, %v1163
  %v1165 = vrcp.pop %v1149
  %v1166 = vmul.f32 %v1149, %v1165
  %v1167 = vsub.f32 1.0, %v1166
  %v1168 = vmul.f32 %v1165, %v1167
  %v1169 = vadd.f32 %v1165, %v1168
  %vm1170 = vweird.f32 %v1149
  %vm1171 = vweird.f32 %v1165
  %vm1172 = vmor %vm1170, %vm1171
  %v1173 = vsel %vm1172, %v1165, %v1169
  %v1174 = vand.u32 2147483647, %v1149
  %vm1175 = vcmp.eq.f32.partialorder %v1174, 8.507059e+37
  %v1176 = vand.u32 %v1149, 2147483648
  %v1177 = vor.u32 1.1754944e-38, %v1176
  %v1178 = vsel %vm1175, %v1177, %v1173
  %v1179 = vmul.f32 1.0, %v1178
  %v1180 = vtanh.pop %v1098
  %v1181 = vtanh.pop %v1102
  %v1182 = vxor.u32 %v1099, 2147483648
  %v1183 = vxor.u32 %v1103, 2147483648
  %v1184 = vmul.f32 %v1182, 1.442695
  %v1185 = vpow.pop %v1184
  %v1186 = vmul.f32 %v1183, 1.442695
  %v1187 = vpow.pop %v1186
  %v1188 = vadd.f32 %v1185, 1.0
  %v1189 = vadd.f32 %v1187, 1.0
  %v1190 = vrcp.pop %v1188
  %v1191 = vmul.f32 %v1188, %v1190
  %v1192 = vsub.f32 1.0, %v1191
  %v1193 = vmul.f32 %v1190, %v1192
  %v1194 = vadd.f32 %v1190, %v1193
  %vm1195 = vweird.f32 %v1188
  %vm1196 = vweird.f32 %v1190
  %vm1197 = vmor %vm1195, %vm1196
  %v1198 = vsel %vm1197, %v1190, %v1194
  %v1199 = vand.u32 2147483647, %v1188
  %vm1200 = vcmp.eq.f32.partialorder %v1199, 8.507059e+37
  %v1201 = vand.u32 %v1188, 2147483648
  %v1202 = vor.u32 1.1754944e-38, %v1201
  %v1203 = vsel %vm1200, %v1202, %v1198
  %v1204 = vmul.f32 1.0, %v1203
  %v1205 = vrcp.pop %v1189
  %v1206 = vmul.f32 %v1189, %v1205
  %v1207 = vsub.f32 1.0, %v1206
  %v1208 = vmul.f32 %v1205, %v1207
  %v1209 = vadd.f32 %v1205, %v1208
  %vm1210 = vweird.f32 %v1189
  %vm1211 = vweird.f32 %v1205
  %vm1212 = vmor %vm1210, %vm1211
  %v1213 = vsel %vm1212, %v1205, %v1209
  %v1214 = vand.u32 2147483647, %v1189
  %vm1215 = vcmp.eq.f32.partialorder %v1214, 8.507059e+37
  %v1216 = vand.u32 %v1189, 2147483648
  %v1217 = vor.u32 1.1754944e-38, %v1216
  %v1218 = vsel %vm1215, %v1217, %v1213
  %v1219 = vmul.f32 1.0, %v1218
  %v1222 = vrot.slane %v455, 7
  %v1223 = vrot.slane %v456, 7
  %v1226 = vmul.f32 %v1164, %v1222
  %v1227 = vmul.f32 %v1179, %v1223
  %v1228 = vmul.f32 %v1126, %v1180
  %v1229 = vmul.f32 %v1141, %v1181
  %v1230 = vadd.f32 %v1226, %v1228
  %v1231 = vadd.f32 %v1227, %v1229
  %v1232 = vtanh.pop %v1230
  %v1233 = vtanh.pop %v1231
  %v1234 = vmul.f32 %v1204, %v1232
  %v1235 = vmul.f32 %v1219, %v1233
  %v1236 = vpack.c.bf16 %v1234, %v1234
  %v1237 = vpack.c.bf16 %v1235, %v1235
  %v1238 = vpack.c.bf16 %v1027, %v1027
  %1239 = vmatpush.bf16.msra.mxu0 %v652
  %1240 = vmatpush.bf16.msra.mxu0 %v648
  %1241 = vmatpush.bf16.msra.mxu0 %v644
  %1242 = vmatpush.bf16.msra.mxu0 %v640
  %1243 = vmatpush.bf16.msra.mxu0 %v636
  %1244 = vmatpush.bf16.msra.mxu0 %v632
  %1245 = vmatpush.bf16.msra.mxu0 %v628
  %1246 = vmatpush.bf16.msra.mxu0 %v624
  %1247 = vmatmul.bf16.gmra.mxu0 %v1238
  %v1248 = vpop.f32.mrf.mxu0
  %v1249 = vadd.f32 0.0, %v1248
  %v1250 = vpop.f32.mrf.mxu0
  %1251 = vdwg.mxu0
  %1252 = vmatpush.bf16.msra.mxu0 %v653
  %1253 = vmatpush.bf16.msra.mxu0 %v649
  %1254 = vmatpush.bf16.msra.mxu0 %v645
  %1255 = vmatpush.bf16.msra.mxu0 %v641
  %1256 = vmatpush.bf16.msra.mxu0 %v637
  %1257 = vmatpush.bf16.msra.mxu0 %v633
  %1258 = vmatpush.bf16.msra.mxu0 %v629
  %1259 = vmatpush.bf16.msra.mxu0 %v625
  %1260 = vmatmul.bf16.gmra.mxu0 %v1238
  %v1261 = vpop.f32.mrf.mxu0
  %v1262 = vadd.f32 0.0, %v1261
  %v1263 = vpop.f32.mrf.mxu0
  %1264 = vdwg.mxu0
  %1265 = vmatpush.bf16.msra.mxu0 %v654
  %1266 = vmatpush.bf16.msra.mxu0 %v650
  %1267 = vmatpush.bf16.msra.mxu0 %v646
  %1268 = vmatpush.bf16.msra.mxu0 %v642
  %1269 = vmatpush.bf16.msra.mxu0 %v638
  %1270 = vmatpush.bf16.msra.mxu0 %v634
  %1271 = vmatpush.bf16.msra.mxu0 %v630
  %1272 = vmatpush.bf16.msra.mxu0 %v626
  %1273 = vmatmul.bf16.gmra.mxu0 %v1238
  %v1274 = vpop.f32.mrf.mxu0
  %v1275 = vadd.f32 0.0, %v1274
  %v1276 = vpop.f32.mrf.mxu0
  %1277 = vdwg.mxu0
  %1278 = vmatpush.bf16.msra.mxu0 %v655
  %1279 = vmatpush.bf16.msra.mxu0 %v651
  %1280 = vmatpush.bf16.msra.mxu0 %v647
  %1281 = vmatpush.bf16.msra.mxu0 %v643
  %1282 = vmatpush.bf16.msra.mxu0 %v639
  %1283 = vmatpush.bf16.msra.mxu0 %v635
  %1284 = vmatpush.bf16.msra.mxu0 %v631
  %1285 = vmatpush.bf16.msra.mxu0 %v627
  %1286 = vmatmul.bf16.gmra.mxu0 %v1238
  %v1287 = vpop.f32.mrf.mxu0
  %v1288 = vadd.f32 0.0, %v1287
  %v1289 = vpop.f32.mrf.mxu0
  %1290 = vdwg.mxu0
  %v1293 = vunpack.c.l.b16 %v1236
  %v1294 = vunpack.c.l.b16 %v1237
  %v1295 = vrot.slane %v1293, 1
  %v1296 = vsel %vm745, %v1294, %v1295
  %v1297 = vpack.c.b16 %v1296, %v1296
  %1299 = vmatpush.bf16.msra.mxu0 %v873
  %1300 = vmatpush.bf16.msra.mxu0 %v869
  %1301 = vmatpush.bf16.msra.mxu0 %v865
  %1302 = vmatpush.bf16.msra.mxu0 %v861
  %1303 = vmatpush.bf16.msra.mxu0 %v857
  %1304 = vmatpush.bf16.msra.mxu0 %v853
  %1305 = vmatpush.bf16.msra.mxu0 %v849
  %1306 = vmatpush.bf16.msra.mxu0 %v845
  %1307 = vmatmul.bf16.gmra.mxu0 %v1297
  %v1308 = vpop.f32.mrf.mxu0
  %v1309 = vadd.f32 %v1249, %v1308
  %v1310 = vpop.f32.mrf.mxu0
  %1311 = vdwg.mxu0
  %1312 = vmatpush.bf16.msra.mxu0 %v874
  %1313 = vmatpush.bf16.msra.mxu0 %v870
  %1314 = vmatpush.bf16.msra.mxu0 %v866
  %1315 = vmatpush.bf16.msra.mxu0 %v862
  %1316 = vmatpush.bf16.msra.mxu0 %v858
  %1317 = vmatpush.bf16.msra.mxu0 %v854
  %1318 = vmatpush.bf16.msra.mxu0 %v850
  %1319 = vmatpush.bf16.msra.mxu0 %v846
  %1320 = vmatmul.bf16.gmra.mxu0 %v1297
  %v1321 = vpop.f32.mrf.mxu0
  %v1322 = vadd.f32 %v1262, %v1321
  %v1323 = vpop.f32.mrf.mxu0
  %1324 = vdwg.mxu0
  %1325 = vmatpush.bf16.msra.mxu0 %v875
  %1326 = vmatpush.bf16.msra.mxu0 %v871
  %1327 = vmatpush.bf16.msra.mxu0 %v867
  %1328 = vmatpush.bf16.msra.mxu0 %v863
  %1329 = vmatpush.bf16.msra.mxu0 %v859
  %1330 = vmatpush.bf16.msra.mxu0 %v855
  %1331 = vmatpush.bf16.msra.mxu0 %v851
  %1332 = vmatpush.bf16.msra.mxu0 %v847
  %1333 = vmatmul.bf16.gmra.mxu0 %v1297
  %v1334 = vpop.f32.mrf.mxu0
  %v1335 = vadd.f32 %v1275, %v1334
  %v1336 = vpop.f32.mrf.mxu0
  %1337 = vdwg.mxu0
  %1338 = vmatpush.bf16.msra.mxu0 %v876
  %1339 = vmatpush.bf16.msra.mxu0 %v872
  %1340 = vmatpush.bf16.msra.mxu0 %v868
  %1341 = vmatpush.bf16.msra.mxu0 %v864
  %1342 = vmatpush.bf16.msra.mxu0 %v860
  %1343 = vmatpush.bf16.msra.mxu0 %v856
  %1344 = vmatpush.bf16.msra.mxu0 %v852
  %1345 = vmatpush.bf16.msra.mxu0 %v848
  %1346 = vmatmul.bf16.gmra.mxu0 %v1297
  %v1347 = vpop.f32.mrf.mxu0
  %v1348 = vadd.f32 %v1288, %v1347
  %v1349 = vpop.f32.mrf.mxu0
  %1350 = vdwg.mxu0
  %v1351 = vadd.f32 %v1309, %v42
  %v1352 = vadd.f32 %v1322, %v43
  %v1353 = vadd.f32 %v1335, %v44
  %v1354 = vadd.f32 %v1348, %v45
  %v1355 = vxor.u32 %v1351, 2147483648
  %v1356 = vmul.f32 %v1355, 1.442695
  %v1357 = vpow.pop %v1356
  %v1358 = vadd.f32 %v1357, 1.0
  %v1359 = vrcp.pop %v1358
  %v1360 = vmul.f32 %v1358, %v1359
  %v1361 = vsub.f32 1.0, %v1360
  %v1362 = vmul.f32 %v1359, %v1361
  %v1363 = vadd.f32 %v1359, %v1362
  %vm1364 = vweird.f32 %v1358
  %vm1365 = vweird.f32 %v1359
  %vm1366 = vmor %vm1364, %vm1365
  %v1367 = vsel %vm1366, %v1359, %v1363
  %v1368 = vand.u32 2147483647, %v1358
  %vm1369 = vcmp.eq.f32.partialorder %v1368, 8.507059e+37
  %v1370 = vand.u32 %v1358, 2147483648
  %v1371 = vor.u32 1.1754944e-38, %v1370
  %v1372 = vsel %vm1369, %v1371, %v1367
  %v1373 = vmul.f32 1.0, %v1372
  %v1374 = vxor.u32 %v1352, 2147483648
  %v1375 = vmul.f32 %v1374, 1.442695
  %v1376 = vpow.pop %v1375
  %v1377 = vadd.f32 %v1376, 1.0
  %v1378 = vrcp.pop %v1377
  %v1379 = vmul.f32 %v1377, %v1378
  %v1380 = vsub.f32 1.0, %v1379
  %v1381 = vmul.f32 %v1378, %v1380
  %v1382 = vadd.f32 %v1378, %v1381
  %vm1383 = vweird.f32 %v1377
  %vm1384 = vweird.f32 %v1378
  %vm1385 = vmor %vm1383, %vm1384
  %v1386 = vsel %vm1385, %v1378, %v1382
  %v1387 = vand.u32 2147483647, %v1377
  %vm1388 = vcmp.eq.f32.partialorder %v1387, 8.507059e+37
  %v1389 = vand.u32 %v1377, 2147483648
  %v1390 = vor.u32 1.1754944e-38, %v1389
  %v1391 = vsel %vm1388, %v1390, %v1386
  %v1392 = vmul.f32 1.0, %v1391
  %v1393 = vtanh.pop %v1353
  %v1394 = vxor.u32 %v1354, 2147483648
  %v1395 = vmul.f32 %v1394, 1.442695
  %v1396 = vpow.pop %v1395
  %v1397 = vadd.f32 %v1396, 1.0
  %v1398 = vrcp.pop %v1397
  %v1399 = vmul.f32 %v1397, %v1398
  %v1400 = vsub.f32 1.0, %v1399
  %v1401 = vmul.f32 %v1398, %v1400
  %v1402 = vadd.f32 %v1398, %v1401
  %vm1403 = vweird.f32 %v1397
  %vm1404 = vweird.f32 %v1398
  %vm1405 = vmor %vm1403, %vm1404
  %v1406 = vsel %vm1405, %v1398, %v1402
  %v1407 = vand.u32 2147483647, %v1397
  %vm1408 = vcmp.eq.f32.partialorder %v1407, 8.507059e+37
  %v1409 = vand.u32 %v1397, 2147483648
  %v1410 = vor.u32 1.1754944e-38, %v1409
  %v1411 = vsel %vm1408, %v1410, %v1406
  %v1412 = vmul.f32 1.0, %v1411
  %v1413 = vmul.f32 %v1392, %v1025
  %v1414 = vmul.f32 %v1373, %v1393
  %v1415 = vadd.f32 %v1413, %v1414
  %v1416 = vtanh.pop %v1415
  %v1417 = vmul.f32 %v1412, %v1416
  %v1418 = vld [vmem:[%s0] sm:$0x22]
  %v1419 = vld [vmem:[%s0 + $0x8] sm:$0x22]
  %v1420 = vld [vmem:[%s0 + $0x10] sm:$0x22]
  %v1421 = vld [vmem:[%s0 + $0x18] sm:$0x22]
  %v1422 = vunpack.c.l.bf16 %v1418
  %v1423 = vunpack.c.h.bf16 %v1418
  %v1424 = vunpack.c.l.bf16 %v1419
  %v1425 = vunpack.c.h.bf16 %v1419
  %v1426 = vunpack.c.l.bf16 %v1420
  %v1427 = vunpack.c.h.bf16 %v1420
  %v1428 = vunpack.c.l.bf16 %v1421
  %v1429 = vunpack.c.h.bf16 %v1421
  %1430 = vmatpush.bf16.msra.mxu0 %v219
  %1431 = vmatpush.bf16.msra.mxu0 %v215
  %1432 = vmatpush.bf16.msra.mxu0 %v211
  %1433 = vmatpush.bf16.msra.mxu0 %v207
  %1434 = vmatpush.bf16.msra.mxu0 %v203
  %1435 = vmatpush.bf16.msra.mxu0 %v199
  %1436 = vmatpush.bf16.msra.mxu0 %v195
  %1437 = vmatpush.bf16.msra.mxu0 %v191
  %1438 = vmatmul.bf16.gmra.mxu0 %v1297
  %v1439 = vpop.f32.mrf.mxu0
  %v1440 = vadd.f32 0.0, %v1439
  %v1441 = vpop.f32.mrf.mxu0
  %1442 = vdwg.mxu0
  %1443 = vmatpush.bf16.msra.mxu0 %v220
  %1444 = vmatpush.bf16.msra.mxu0 %v216
  %1445 = vmatpush.bf16.msra.mxu0 %v212
  %1446 = vmatpush.bf16.msra.mxu0 %v208
  %1447 = vmatpush.bf16.msra.mxu0 %v204
  %1448 = vmatpush.bf16.msra.mxu0 %v200
  %1449 = vmatpush.bf16.msra.mxu0 %v196
  %1450 = vmatpush.bf16.msra.mxu0 %v192
  %1451 = vmatmul.bf16.gmra.mxu0 %v1297
  %v1452 = vpop.f32.mrf.mxu0
  %v1453 = vadd.f32 0.0, %v1452
  %v1454 = vpop.f32.mrf.mxu0
  %1455 = vdwg.mxu0
  %1456 = vmatpush.bf16.msra.mxu0 %v221
  %1457 = vmatpush.bf16.msra.mxu0 %v217
  %1458 = vmatpush.bf16.msra.mxu0 %v213
  %1459 = vmatpush.bf16.msra.mxu0 %v209
  %1460 = vmatpush.bf16.msra.mxu0 %v205
  %1461 = vmatpush.bf16.msra.mxu0 %v201
  %1462 = vmatpush.bf16.msra.mxu0 %v197
  %1463 = vmatpush.bf16.msra.mxu0 %v193
  %1464 = vmatmul.bf16.gmra.mxu0 %v1297
  %v1465 = vpop.f32.mrf.mxu0
  %v1466 = vadd.f32 0.0, %v1465
  %v1467 = vpop.f32.mrf.mxu0
  %1468 = vdwg.mxu0
  %1469 = vmatpush.bf16.msra.mxu0 %v222
  %1470 = vmatpush.bf16.msra.mxu0 %v218
  %1471 = vmatpush.bf16.msra.mxu0 %v214
  %1472 = vmatpush.bf16.msra.mxu0 %v210
  %1473 = vmatpush.bf16.msra.mxu0 %v206
  %1474 = vmatpush.bf16.msra.mxu0 %v202
  %1475 = vmatpush.bf16.msra.mxu0 %v198
  %1476 = vmatpush.bf16.msra.mxu0 %v194
  %1477 = vmatmul.bf16.gmra.mxu0 %v1297
  %v1478 = vpop.f32.mrf.mxu0
  %v1479 = vadd.f32 0.0, %v1478
  %v1480 = vpop.f32.mrf.mxu0
  %1481 = vdwg.mxu0
  %v1486 = vrot.slane %v1440, 6
  %v1487 = vrot.slane %v1453, 6
  %v1488 = vrot.slane %v1466, 6
  %v1489 = vrot.slane %v1479, 6
  %v1490 = vrot.slane %v1440, 7
  %v1491 = vrot.slane %v1453, 7
  %v1492 = vrot.slane %v1466, 7
  %v1493 = vrot.slane %v1479, 7
  %v1502 = vadd.f32 %v1422, %v1486
  %v1503 = vadd.f32 %v1423, %v1487
  %v1504 = vadd.f32 %v1424, %v1488
  %v1505 = vadd.f32 %v1425, %v1489
  %v1506 = vadd.f32 %v1426, %v1490
  %v1507 = vadd.f32 %v1427, %v1491
  %v1508 = vadd.f32 %v1428, %v1492
  %v1509 = vadd.f32 %v1429, %v1493
  %v1510 = vxor.u32 %v1502, 2147483648
  %v1511 = vxor.u32 %v1506, 2147483648
  %v1512 = vmul.f32 %v1510, 1.442695
  %v1513 = vpow.pop %v1512
  %v1514 = vmul.f32 %v1511, 1.442695
  %v1515 = vpow.pop %v1514
  %v1516 = vadd.f32 %v1513, 1.0
  %v1517 = vadd.f32 %v1515, 1.0
  %v1518 = vrcp.pop %v1516
  %v1519 = vmul.f32 %v1516, %v1518
  %v1520 = vsub.f32 1.0, %v1519
  %v1521 = vmul.f32 %v1518, %v1520
  %v1522 = vadd.f32 %v1518, %v1521
  %vm1523 = vweird.f32 %v1516
  %vm1524 = vweird.f32 %v1518
  %vm1525 = vmor %vm1523, %vm1524
  %v1526 = vsel %vm1525, %v1518, %v1522
  %v1527 = vand.u32 2147483647, %v1516
  %vm1528 = vcmp.eq.f32.partialorder %v1527, 8.507059e+37
  %v1529 = vand.u32 %v1516, 2147483648
  %v1530 = vor.u32 1.1754944e-38, %v1529
  %v1531 = vsel %vm1528, %v1530, %v1526
  %v1532 = vmul.f32 1.0, %v1531
  %v1533 = vrcp.pop %v1517
  %v1534 = vmul.f32 %v1517, %v1533
  %v1535 = vsub.f32 1.0, %v1534
  %v1536 = vmul.f32 %v1533, %v1535
  %v1537 = vadd.f32 %v1533, %v1536
  %vm1538 = vweird.f32 %v1517
  %vm1539 = vweird.f32 %v1533
  %vm1540 = vmor %vm1538, %vm1539
  %v1541 = vsel %vm1540, %v1533, %v1537
  %v1542 = vand.u32 2147483647, %v1517
  %vm1543 = vcmp.eq.f32.partialorder %v1542, 8.507059e+37
  %v1544 = vand.u32 %v1517, 2147483648
  %v1545 = vor.u32 1.1754944e-38, %v1544
  %v1546 = vsel %vm1543, %v1545, %v1541
  %v1547 = vmul.f32 1.0, %v1546
  %v1548 = vxor.u32 %v1503, 2147483648
  %v1549 = vxor.u32 %v1507, 2147483648
  %v1550 = vmul.f32 %v1548, 1.442695
  %v1551 = vpow.pop %v1550
  %v1552 = vmul.f32 %v1549, 1.442695
  %v1553 = vpow.pop %v1552
  %v1554 = vadd.f32 %v1551, 1.0
  %v1555 = vadd.f32 %v1553, 1.0
  %v1556 = vrcp.pop %v1554
  %v1557 = vmul.f32 %v1554, %v1556
  %v1558 = vsub.f32 1.0, %v1557
  %v1559 = vmul.f32 %v1556, %v1558
  %v1560 = vadd.f32 %v1556, %v1559
  %vm1561 = vweird.f32 %v1554
  %vm1562 = vweird.f32 %v1556
  %vm1563 = vmor %vm1561, %vm1562
  %v1564 = vsel %vm1563, %v1556, %v1560
  %v1565 = vand.u32 2147483647, %v1554
  %vm1566 = vcmp.eq.f32.partialorder %v1565, 8.507059e+37
  %v1567 = vand.u32 %v1554, 2147483648
  %v1568 = vor.u32 1.1754944e-38, %v1567
  %v1569 = vsel %vm1566, %v1568, %v1564
  %v1570 = vmul.f32 1.0, %v1569
  %v1571 = vrcp.pop %v1555
  %v1572 = vmul.f32 %v1555, %v1571
  %v1573 = vsub.f32 1.0, %v1572
  %v1574 = vmul.f32 %v1571, %v1573
  %v1575 = vadd.f32 %v1571, %v1574
  %vm1576 = vweird.f32 %v1555
  %vm1577 = vweird.f32 %v1571
  %vm1578 = vmor %vm1576, %vm1577
  %v1579 = vsel %vm1578, %v1571, %v1575
  %v1580 = vand.u32 2147483647, %v1555
  %vm1581 = vcmp.eq.f32.partialorder %v1580, 8.507059e+37
  %v1582 = vand.u32 %v1555, 2147483648
  %v1583 = vor.u32 1.1754944e-38, %v1582
  %v1584 = vsel %vm1581, %v1583, %v1579
  %v1585 = vmul.f32 1.0, %v1584
  %v1586 = vtanh.pop %v1504
  %v1587 = vtanh.pop %v1508
  %v1588 = vxor.u32 %v1505, 2147483648
  %v1589 = vxor.u32 %v1509, 2147483648
  %v1590 = vmul.f32 %v1588, 1.442695
  %v1591 = vpow.pop %v1590
  %v1592 = vmul.f32 %v1589, 1.442695
  %v1593 = vpow.pop %v1592
  %v1594 = vadd.f32 %v1591, 1.0
  %v1595 = vadd.f32 %v1593, 1.0
  %v1596 = vrcp.pop %v1594
  %v1597 = vmul.f32 %v1594, %v1596
  %v1598 = vsub.f32 1.0, %v1597
  %v1599 = vmul.f32 %v1596, %v1598
  %v1600 = vadd.f32 %v1596, %v1599
  %vm1601 = vweird.f32 %v1594
  %vm1602 = vweird.f32 %v1596
  %vm1603 = vmor %vm1601, %vm1602
  %v1604 = vsel %vm1603, %v1596, %v1600
  %v1605 = vand.u32 2147483647, %v1594
  %vm1606 = vcmp.eq.f32.partialorder %v1605, 8.507059e+37
  %v1607 = vand.u32 %v1594, 2147483648
  %v1608 = vor.u32 1.1754944e-38, %v1607
  %v1609 = vsel %vm1606, %v1608, %v1604
  %v1610 = vmul.f32 1.0, %v1609
  %v1611 = vrcp.pop %v1595
  %v1612 = vmul.f32 %v1595, %v1611
  %v1613 = vsub.f32 1.0, %v1612
  %v1614 = vmul.f32 %v1611, %v1613
  %v1615 = vadd.f32 %v1611, %v1614
  %vm1616 = vweird.f32 %v1595
  %vm1617 = vweird.f32 %v1611
  %vm1618 = vmor %vm1616, %vm1617
  %v1619 = vsel %vm1618, %v1611, %v1615
  %v1620 = vand.u32 2147483647, %v1595
  %vm1621 = vcmp.eq.f32.partialorder %v1620, 8.507059e+37
  %v1622 = vand.u32 %v1595, 2147483648
  %v1623 = vor.u32 1.1754944e-38, %v1622
  %v1624 = vsel %vm1621, %v1623, %v1619
  %v1625 = vmul.f32 1.0, %v1624
  %v1628 = vrot.slane %v1230, 7
  %v1629 = vrot.slane %v1231, 7
  %v1632 = vmul.f32 %v1570, %v1628
  %v1633 = vmul.f32 %v1585, %v1629
  %v1634 = vmul.f32 %v1532, %v1586
  %v1635 = vmul.f32 %v1547, %v1587
  %v1636 = vadd.f32 %v1632, %v1634
  %v1637 = vadd.f32 %v1633, %v1635
  %v1638 = vtanh.pop %v1636
  %v1639 = vtanh.pop %v1637
  %v1640 = vmul.f32 %v1610, %v1638
  %v1641 = vmul.f32 %v1625, %v1639
  %v1642 = vpack.c.bf16 %v1640, %v1640
  %v1643 = vpack.c.bf16 %v1641, %v1641
  %v1644 = vpack.c.bf16 %v1417, %v1417
  %1645 = vmatpush.bf16.msra.mxu0 %v652
  %1646 = vmatpush.bf16.msra.mxu0 %v648
  %1647 = vmatpush.bf16.msra.mxu0 %v644
  %1648 = vmatpush.bf16.msra.mxu0 %v640
  %1649 = vmatpush.bf16.msra.mxu0 %v636
  %1650 = vmatpush.bf16.msra.mxu0 %v632
  %1651 = vmatpush.bf16.msra.mxu0 %v628
  %1652 = vmatpush.bf16.msra.mxu0 %v624
  %1653 = vmatmul.bf16.gmra.mxu0 %v1644
  %v1654 = vpop.f32.mrf.mxu0
  %v1655 = vadd.f32 0.0, %v1654
  %v1656 = vpop.f32.mrf.mxu0
  %1657 = vdwg.mxu0
  %1658 = vmatpush.bf16.msra.mxu0 %v653
  %1659 = vmatpush.bf16.msra.mxu0 %v649
  %1660 = vmatpush.bf16.msra.mxu0 %v645
  %1661 = vmatpush.bf16.msra.mxu0 %v641
  %1662 = vmatpush.bf16.msra.mxu0 %v637
  %1663 = vmatpush.bf16.msra.mxu0 %v633
  %1664 = vmatpush.bf16.msra.mxu0 %v629
  %1665 = vmatpush.bf16.msra.mxu0 %v625
  %1666 = vmatmul.bf16.gmra.mxu0 %v1644
  %v1667 = vpop.f32.mrf.mxu0
  %v1668 = vadd.f32 0.0, %v1667
  %v1669 = vpop.f32.mrf.mxu0
  %1670 = vdwg.mxu0
  %1671 = vmatpush.bf16.msra.mxu0 %v654
  %1672 = vmatpush.bf16.msra.mxu0 %v650
  %1673 = vmatpush.bf16.msra.mxu0 %v646
  %1674 = vmatpush.bf16.msra.mxu0 %v642
  %1675 = vmatpush.bf16.msra.mxu0 %v638
  %1676 = vmatpush.bf16.msra.mxu0 %v634
  %1677 = vmatpush.bf16.msra.mxu0 %v630
  %1678 = vmatpush.bf16.msra.mxu0 %v626
  %1679 = vmatmul.bf16.gmra.mxu0 %v1644
  %v1680 = vpop.f32.mrf.mxu0
  %v1681 = vadd.f32 0.0, %v1680
  %v1682 = vpop.f32.mrf.mxu0
  %1683 = vdwg.mxu0
  %1684 = vmatpush.bf16.msra.mxu0 %v655
  %1685 = vmatpush.bf16.msra.mxu0 %v651
  %1686 = vmatpush.bf16.msra.mxu0 %v647
  %1687 = vmatpush.bf16.msra.mxu0 %v643
  %1688 = vmatpush.bf16.msra.mxu0 %v639
  %1689 = vmatpush.bf16.msra.mxu0 %v635
  %1690 = vmatpush.bf16.msra.mxu0 %v631
  %1691 = vmatpush.bf16.msra.mxu0 %v627
  %1692 = vmatmul.bf16.gmra.mxu0 %v1644
  %v1693 = vpop.f32.mrf.mxu0
  %v1694 = vadd.f32 0.0, %v1693
  %v1695 = vpop.f32.mrf.mxu0
  %1696 = vdwg.mxu0
  %v1699 = vunpack.c.l.b16 %v1642
  %v1700 = vunpack.c.l.b16 %v1643
  %v1701 = vrot.slane %v1699, 2
  %v1702 = vrot.slane %v1700, 1
  %v1703 = vsel %vm745, %v1702, %v1701
  %v1704 = vpack.c.b16 %v1703, %v1703
  %1706 = vmatpush.bf16.msra.mxu0 %v873
  %1707 = vmatpush.bf16.msra.mxu0 %v869
  %1708 = vmatpush.bf16.msra.mxu0 %v865
  %1709 = vmatpush.bf16.msra.mxu0 %v861
  %1710 = vmatpush.bf16.msra.mxu0 %v857
  %1711 = vmatpush.bf16.msra.mxu0 %v853
  %1712 = vmatpush.bf16.msra.mxu0 %v849
  %1713 = vmatpush.bf16.msra.mxu0 %v845
  %1714 = vmatmul.bf16.gmra.mxu0 %v1704
  %v1715 = vpop.f32.mrf.mxu0
  %v1716 = vadd.f32 %v1655, %v1715
  %v1717 = vpop.f32.mrf.mxu0
  %1718 = vdwg.mxu0
  %1719 = vmatpush.bf16.msra.mxu0 %v874
  %1720 = vmatpush.bf16.msra.mxu0 %v870
  %1721 = vmatpush.bf16.msra.mxu0 %v866
  %1722 = vmatpush.bf16.msra.mxu0 %v862
  %1723 = vmatpush.bf16.msra.mxu0 %v858
  %1724 = vmatpush.bf16.msra.mxu0 %v854
  %1725 = vmatpush.bf16.msra.mxu0 %v850
  %1726 = vmatpush.bf16.msra.mxu0 %v846
  %1727 = vmatmul.bf16.gmra.mxu0 %v1704
  %v1728 = vpop.f32.mrf.mxu0
  %v1729 = vadd.f32 %v1668, %v1728
  %v1730 = vpop.f32.mrf.mxu0
  %1731 = vdwg.mxu0
  %1732 = vmatpush.bf16.msra.mxu0 %v875
  %1733 = vmatpush.bf16.msra.mxu0 %v871
  %1734 = vmatpush.bf16.msra.mxu0 %v867
  %1735 = vmatpush.bf16.msra.mxu0 %v863
  %1736 = vmatpush.bf16.msra.mxu0 %v859
  %1737 = vmatpush.bf16.msra.mxu0 %v855
  %1738 = vmatpush.bf16.msra.mxu0 %v851
  %1739 = vmatpush.bf16.msra.mxu0 %v847
  %1740 = vmatmul.bf16.gmra.mxu0 %v1704
  %v1741 = vpop.f32.mrf.mxu0
  %v1742 = vadd.f32 %v1681, %v1741
  %v1743 = vpop.f32.mrf.mxu0
  %1744 = vdwg.mxu0
  %1745 = vmatpush.bf16.msra.mxu0 %v876
  %1746 = vmatpush.bf16.msra.mxu0 %v872
  %1747 = vmatpush.bf16.msra.mxu0 %v868
  %1748 = vmatpush.bf16.msra.mxu0 %v864
  %1749 = vmatpush.bf16.msra.mxu0 %v860
  %1750 = vmatpush.bf16.msra.mxu0 %v856
  %1751 = vmatpush.bf16.msra.mxu0 %v852
  %1752 = vmatpush.bf16.msra.mxu0 %v848
  %1753 = vmatmul.bf16.gmra.mxu0 %v1704
  %v1754 = vpop.f32.mrf.mxu0
  %v1755 = vadd.f32 %v1694, %v1754
  %v1756 = vpop.f32.mrf.mxu0
  %1757 = vdwg.mxu0
  %v1758 = vadd.f32 %v1716, %v42
  %v1759 = vadd.f32 %v1729, %v43
  %v1760 = vadd.f32 %v1742, %v44
  %v1761 = vadd.f32 %v1755, %v45
  %v1762 = vxor.u32 %v1758, 2147483648
  %v1763 = vmul.f32 %v1762, 1.442695
  %v1764 = vpow.pop %v1763
  %v1765 = vadd.f32 %v1764, 1.0
  %v1766 = vrcp.pop %v1765
  %v1767 = vmul.f32 %v1765, %v1766
  %v1768 = vsub.f32 1.0, %v1767
  %v1769 = vmul.f32 %v1766, %v1768
  %v1770 = vadd.f32 %v1766, %v1769
  %vm1771 = vweird.f32 %v1765
  %vm1772 = vweird.f32 %v1766
  %vm1773 = vmor %vm1771, %vm1772
  %v1774 = vsel %vm1773, %v1766, %v1770
  %v1775 = vand.u32 2147483647, %v1765
  %vm1776 = vcmp.eq.f32.partialorder %v1775, 8.507059e+37
  %v1777 = vand.u32 %v1765, 2147483648
  %v1778 = vor.u32 1.1754944e-38, %v1777
  %v1779 = vsel %vm1776, %v1778, %v1774
  %v1780 = vmul.f32 1.0, %v1779
  %v1781 = vxor.u32 %v1759, 2147483648
  %v1782 = vmul.f32 %v1781, 1.442695
  %v1783 = vpow.pop %v1782
  %v1784 = vadd.f32 %v1783, 1.0
  %v1785 = vrcp.pop %v1784
  %v1786 = vmul.f32 %v1784, %v1785
  %v1787 = vsub.f32 1.0, %v1786
  %v1788 = vmul.f32 %v1785, %v1787
  %v1789 = vadd.f32 %v1785, %v1788
  %vm1790 = vweird.f32 %v1784
  %vm1791 = vweird.f32 %v1785
  %vm1792 = vmor %vm1790, %vm1791
  %v1793 = vsel %vm1792, %v1785, %v1789
  %v1794 = vand.u32 2147483647, %v1784
  %vm1795 = vcmp.eq.f32.partialorder %v1794, 8.507059e+37
  %v1796 = vand.u32 %v1784, 2147483648
  %v1797 = vor.u32 1.1754944e-38, %v1796
  %v1798 = vsel %vm1795, %v1797, %v1793
  %v1799 = vmul.f32 1.0, %v1798
  %v1800 = vtanh.pop %v1760
  %v1801 = vxor.u32 %v1761, 2147483648
  %v1802 = vmul.f32 %v1801, 1.442695
  %v1803 = vpow.pop %v1802
  %v1804 = vadd.f32 %v1803, 1.0
  %v1805 = vrcp.pop %v1804
  %v1806 = vmul.f32 %v1804, %v1805
  %v1807 = vsub.f32 1.0, %v1806
  %v1808 = vmul.f32 %v1805, %v1807
  %v1809 = vadd.f32 %v1805, %v1808
  %vm1810 = vweird.f32 %v1804
  %vm1811 = vweird.f32 %v1805
  %vm1812 = vmor %vm1810, %vm1811
  %v1813 = vsel %vm1812, %v1805, %v1809
  %v1814 = vand.u32 2147483647, %v1804
  %vm1815 = vcmp.eq.f32.partialorder %v1814, 8.507059e+37
  %v1816 = vand.u32 %v1804, 2147483648
  %v1817 = vor.u32 1.1754944e-38, %v1816
  %v1818 = vsel %vm1815, %v1817, %v1813
  %v1819 = vmul.f32 1.0, %v1818
  %v1820 = vmul.f32 %v1799, %v1415
  %v1821 = vmul.f32 %v1780, %v1800
  %v1822 = vadd.f32 %v1820, %v1821
  %v1823 = vtanh.pop %v1822
  %v1824 = vmul.f32 %v1819, %v1823
  %1825 = vmatpush.bf16.msra.mxu0 %v219
  %1826 = vmatpush.bf16.msra.mxu0 %v215
  %1827 = vmatpush.bf16.msra.mxu0 %v211
  %1828 = vmatpush.bf16.msra.mxu0 %v207
  %1829 = vmatpush.bf16.msra.mxu0 %v203
  %1830 = vmatpush.bf16.msra.mxu0 %v199
  %1831 = vmatpush.bf16.msra.mxu0 %v195
  %1832 = vmatpush.bf16.msra.mxu0 %v191
  %1833 = vmatmul.bf16.gmra.mxu0 %v1704
  %v1834 = vpop.f32.mrf.mxu0
  %v1835 = vadd.f32 0.0, %v1834
  %v1836 = vpop.f32.mrf.mxu0
  %1837 = vdwg.mxu0
  %1838 = vmatpush.bf16.msra.mxu0 %v220
  %1839 = vmatpush.bf16.msra.mxu0 %v216
  %1840 = vmatpush.bf16.msra.mxu0 %v212
  %1841 = vmatpush.bf16.msra.mxu0 %v208
  %1842 = vmatpush.bf16.msra.mxu0 %v204
  %1843 = vmatpush.bf16.msra.mxu0 %v200
  %1844 = vmatpush.bf16.msra.mxu0 %v196
  %1845 = vmatpush.bf16.msra.mxu0 %v192
  %1846 = vmatmul.bf16.gmra.mxu0 %v1704
  %v1847 = vpop.f32.mrf.mxu0
  %v1848 = vadd.f32 0.0, %v1847
  %v1849 = vpop.f32.mrf.mxu0
  %1850 = vdwg.mxu0
  %1851 = vmatpush.bf16.msra.mxu0 %v221
  %1852 = vmatpush.bf16.msra.mxu0 %v217
  %1853 = vmatpush.bf16.msra.mxu0 %v213
  %1854 = vmatpush.bf16.msra.mxu0 %v209
  %1855 = vmatpush.bf16.msra.mxu0 %v205
  %1856 = vmatpush.bf16.msra.mxu0 %v201
  %1857 = vmatpush.bf16.msra.mxu0 %v197
  %1858 = vmatpush.bf16.msra.mxu0 %v193
  %1859 = vmatmul.bf16.gmra.mxu0 %v1704
  %v1860 = vpop.f32.mrf.mxu0
  %v1861 = vadd.f32 0.0, %v1860
  %v1862 = vpop.f32.mrf.mxu0
  %1863 = vdwg.mxu0
  %1864 = vmatpush.bf16.msra.mxu0 %v222
  %1865 = vmatpush.bf16.msra.mxu0 %v218
  %1866 = vmatpush.bf16.msra.mxu0 %v214
  %1867 = vmatpush.bf16.msra.mxu0 %v210
  %1868 = vmatpush.bf16.msra.mxu0 %v206
  %1869 = vmatpush.bf16.msra.mxu0 %v202
  %1870 = vmatpush.bf16.msra.mxu0 %v198
  %1871 = vmatpush.bf16.msra.mxu0 %v194
  %1872 = vmatmul.bf16.gmra.mxu0 %v1704
  %v1873 = vpop.f32.mrf.mxu0
  %v1874 = vadd.f32 0.0, %v1873
  %v1875 = vpop.f32.mrf.mxu0
  %1876 = vdwg.mxu0
  %v1881 = vrot.slane %v1835, 5
  %v1882 = vrot.slane %v1848, 5
  %v1883 = vrot.slane %v1861, 5
  %v1884 = vrot.slane %v1874, 5
  %v1885 = vrot.slane %v1835, 6
  %v1886 = vrot.slane %v1848, 6
  %v1887 = vrot.slane %v1861, 6
  %v1888 = vrot.slane %v1874, 6
  %v1897 = vadd.f32 %v1422, %v1881
  %v1898 = vadd.f32 %v1423, %v1882
  %v1899 = vadd.f32 %v1424, %v1883
  %v1900 = vadd.f32 %v1425, %v1884
  %v1901 = vadd.f32 %v1426, %v1885
  %v1902 = vadd.f32 %v1427, %v1886
  %v1903 = vadd.f32 %v1428, %v1887
  %v1904 = vadd.f32 %v1429, %v1888
  %v1905 = vxor.u32 %v1897, 2147483648
  %v1906 = vxor.u32 %v1901, 2147483648
  %v1907 = vmul.f32 %v1905, 1.442695
  %v1908 = vpow.pop %v1907
  %v1909 = vmul.f32 %v1906, 1.442695
  %v1910 = vpow.pop %v1909
  %v1911 = vadd.f32 %v1908, 1.0
  %v1912 = vadd.f32 %v1910, 1.0
  %v1913 = vrcp.pop %v1911
  %v1914 = vmul.f32 %v1911, %v1913
  %v1915 = vsub.f32 1.0, %v1914
  %v1916 = vmul.f32 %v1913, %v1915
  %v1917 = vadd.f32 %v1913, %v1916
  %vm1918 = vweird.f32 %v1911
  %vm1919 = vweird.f32 %v1913
  %vm1920 = vmor %vm1918, %vm1919
  %v1921 = vsel %vm1920, %v1913, %v1917
  %v1922 = vand.u32 2147483647, %v1911
  %vm1923 = vcmp.eq.f32.partialorder %v1922, 8.507059e+37
  %v1924 = vand.u32 %v1911, 2147483648
  %v1925 = vor.u32 1.1754944e-38, %v1924
  %v1926 = vsel %vm1923, %v1925, %v1921
  %v1927 = vmul.f32 1.0, %v1926
  %v1928 = vrcp.pop %v1912
  %v1929 = vmul.f32 %v1912, %v1928
  %v1930 = vsub.f32 1.0, %v1929
  %v1931 = vmul.f32 %v1928, %v1930
  %v1932 = vadd.f32 %v1928, %v1931
  %vm1933 = vweird.f32 %v1912
  %vm1934 = vweird.f32 %v1928
  %vm1935 = vmor %vm1933, %vm1934
  %v1936 = vsel %vm1935, %v1928, %v1932
  %v1937 = vand.u32 2147483647, %v1912
  %vm1938 = vcmp.eq.f32.partialorder %v1937, 8.507059e+37
  %v1939 = vand.u32 %v1912, 2147483648
  %v1940 = vor.u32 1.1754944e-38, %v1939
  %v1941 = vsel %vm1938, %v1940, %v1936
  %v1942 = vmul.f32 1.0, %v1941
  %v1943 = vxor.u32 %v1898, 2147483648
  %v1944 = vxor.u32 %v1902, 2147483648
  %v1945 = vmul.f32 %v1943, 1.442695
  %v1946 = vpow.pop %v1945
  %v1947 = vmul.f32 %v1944, 1.442695
  %v1948 = vpow.pop %v1947
  %v1949 = vadd.f32 %v1946, 1.0
  %v1950 = vadd.f32 %v1948, 1.0
  %v1951 = vrcp.pop %v1949
  %v1952 = vmul.f32 %v1949, %v1951
  %v1953 = vsub.f32 1.0, %v1952
  %v1954 = vmul.f32 %v1951, %v1953
  %v1955 = vadd.f32 %v1951, %v1954
  %vm1956 = vweird.f32 %v1949
  %vm1957 = vweird.f32 %v1951
  %vm1958 = vmor %vm1956, %vm1957
  %v1959 = vsel %vm1958, %v1951, %v1955
  %v1960 = vand.u32 2147483647, %v1949
  %vm1961 = vcmp.eq.f32.partialorder %v1960, 8.507059e+37
  %v1962 = vand.u32 %v1949, 2147483648
  %v1963 = vor.u32 1.1754944e-38, %v1962
  %v1964 = vsel %vm1961, %v1963, %v1959
  %v1965 = vmul.f32 1.0, %v1964
  %v1966 = vrcp.pop %v1950
  %v1967 = vmul.f32 %v1950, %v1966
  %v1968 = vsub.f32 1.0, %v1967
  %v1969 = vmul.f32 %v1966, %v1968
  %v1970 = vadd.f32 %v1966, %v1969
  %vm1971 = vweird.f32 %v1950
  %vm1972 = vweird.f32 %v1966
  %vm1973 = vmor %vm1971, %vm1972
  %v1974 = vsel %vm1973, %v1966, %v1970
  %v1975 = vand.u32 2147483647, %v1950
  %vm1976 = vcmp.eq.f32.partialorder %v1975, 8.507059e+37
  %v1977 = vand.u32 %v1950, 2147483648
  %v1978 = vor.u32 1.1754944e-38, %v1977
  %v1979 = vsel %vm1976, %v1978, %v1974
  %v1980 = vmul.f32 1.0, %v1979
  %v1981 = vtanh.pop %v1899
  %v1982 = vtanh.pop %v1903
  %v1983 = vxor.u32 %v1900, 2147483648
  %v1984 = vxor.u32 %v1904, 2147483648
  %v1985 = vmul.f32 %v1983, 1.442695
  %v1986 = vpow.pop %v1985
  %v1987 = vmul.f32 %v1984, 1.442695
  %v1988 = vpow.pop %v1987
  %v1989 = vadd.f32 %v1986, 1.0
  %v1990 = vadd.f32 %v1988, 1.0
  %v1991 = vrcp.pop %v1989
  %v1992 = vmul.f32 %v1989, %v1991
  %v1993 = vsub.f32 1.0, %v1992
  %v1994 = vmul.f32 %v1991, %v1993
  %v1995 = vadd.f32 %v1991, %v1994
  %vm1996 = vweird.f32 %v1989
  %vm1997 = vweird.f32 %v1991
  %vm1998 = vmor %vm1996, %vm1997
  %v1999 = vsel %vm1998, %v1991, %v1995
  %v2000 = vand.u32 2147483647, %v1989
  %vm2001 = vcmp.eq.f32.partialorder %v2000, 8.507059e+37
  %v2002 = vand.u32 %v1989, 2147483648
  %v2003 = vor.u32 1.1754944e-38, %v2002
  %v2004 = vsel %vm2001, %v2003, %v1999
  %v2005 = vmul.f32 1.0, %v2004
  %v2006 = vrcp.pop %v1990
  %v2007 = vmul.f32 %v1990, %v2006
  %v2008 = vsub.f32 1.0, %v2007
  %v2009 = vmul.f32 %v2006, %v2008
  %v2010 = vadd.f32 %v2006, %v2009
  %vm2011 = vweird.f32 %v1990
  %vm2012 = vweird.f32 %v2006
  %vm2013 = vmor %vm2011, %vm2012
  %v2014 = vsel %vm2013, %v2006, %v2010
  %v2015 = vand.u32 2147483647, %v1990
  %vm2016 = vcmp.eq.f32.partialorder %v2015, 8.507059e+37
  %v2017 = vand.u32 %v1990, 2147483648
  %v2018 = vor.u32 1.1754944e-38, %v2017
  %v2019 = vsel %vm2016, %v2018, %v2014
  %v2020 = vmul.f32 1.0, %v2019
  %v2023 = vrot.slane %v1636, 7
  %v2024 = vrot.slane %v1637, 7
  %v2027 = vmul.f32 %v1965, %v2023
  %v2028 = vmul.f32 %v1980, %v2024
  %v2029 = vmul.f32 %v1927, %v1981
  %v2030 = vmul.f32 %v1942, %v1982
  %v2031 = vadd.f32 %v2027, %v2029
  %v2032 = vadd.f32 %v2028, %v2030
  %v2033 = vtanh.pop %v2031
  %v2034 = vtanh.pop %v2032
  %v2035 = vmul.f32 %v2005, %v2033
  %v2036 = vmul.f32 %v2020, %v2034
  %v2037 = vpack.c.bf16 %v2035, %v2035
  %v2038 = vpack.c.bf16 %v2036, %v2036
  %v2039 = vpack.c.bf16 %v1824, %v1824
  %2040 = vmatpush.bf16.msra.mxu0 %v652
  %2041 = vmatpush.bf16.msra.mxu0 %v648
  %2042 = vmatpush.bf16.msra.mxu0 %v644
  %2043 = vmatpush.bf16.msra.mxu0 %v640
  %2044 = vmatpush.bf16.msra.mxu0 %v636
  %2045 = vmatpush.bf16.msra.mxu0 %v632
  %2046 = vmatpush.bf16.msra.mxu0 %v628
  %2047 = vmatpush.bf16.msra.mxu0 %v624
  %2048 = vmatmul.bf16.gmra.mxu0 %v2039
  %v2049 = vpop.f32.mrf.mxu0
  %v2050 = vadd.f32 0.0, %v2049
  %v2051 = vpop.f32.mrf.mxu0
  %2052 = vdwg.mxu0
  %2053 = vmatpush.bf16.msra.mxu0 %v653
  %2054 = vmatpush.bf16.msra.mxu0 %v649
  %2055 = vmatpush.bf16.msra.mxu0 %v645
  %2056 = vmatpush.bf16.msra.mxu0 %v641
  %2057 = vmatpush.bf16.msra.mxu0 %v637
  %2058 = vmatpush.bf16.msra.mxu0 %v633
  %2059 = vmatpush.bf16.msra.mxu0 %v629
  %2060 = vmatpush.bf16.msra.mxu0 %v625
  %2061 = vmatmul.bf16.gmra.mxu0 %v2039
  %v2062 = vpop.f32.mrf.mxu0
  %v2063 = vadd.f32 0.0, %v2062
  %v2064 = vpop.f32.mrf.mxu0
  %2065 = vdwg.mxu0
  %2066 = vmatpush.bf16.msra.mxu0 %v654
  %2067 = vmatpush.bf16.msra.mxu0 %v650
  %2068 = vmatpush.bf16.msra.mxu0 %v646
  %2069 = vmatpush.bf16.msra.mxu0 %v642
  %2070 = vmatpush.bf16.msra.mxu0 %v638
  %2071 = vmatpush.bf16.msra.mxu0 %v634
  %2072 = vmatpush.bf16.msra.mxu0 %v630
  %2073 = vmatpush.bf16.msra.mxu0 %v626
  %2074 = vmatmul.bf16.gmra.mxu0 %v2039
  %v2075 = vpop.f32.mrf.mxu0
  %v2076 = vadd.f32 0.0, %v2075
  %v2077 = vpop.f32.mrf.mxu0
  %2078 = vdwg.mxu0
  %2079 = vmatpush.bf16.msra.mxu0 %v655
  %2080 = vmatpush.bf16.msra.mxu0 %v651
  %2081 = vmatpush.bf16.msra.mxu0 %v647
  %2082 = vmatpush.bf16.msra.mxu0 %v643
  %2083 = vmatpush.bf16.msra.mxu0 %v639
  %2084 = vmatpush.bf16.msra.mxu0 %v635
  %2085 = vmatpush.bf16.msra.mxu0 %v631
  %2086 = vmatpush.bf16.msra.mxu0 %v627
  %2087 = vmatmul.bf16.gmra.mxu0 %v2039
  %v2088 = vpop.f32.mrf.mxu0
  %v2089 = vadd.f32 0.0, %v2088
  %v2090 = vpop.f32.mrf.mxu0
  %2091 = vdwg.mxu0
  %v2094 = vunpack.c.l.b16 %v2037
  %v2095 = vunpack.c.l.b16 %v2038
  %v2096 = vrot.slane %v2094, 3
  %v2097 = vrot.slane %v2095, 2
  %v2098 = vsel %vm745, %v2097, %v2096
  %v2099 = vpack.c.b16 %v2098, %v2098
  %2101 = vmatpush.bf16.msra.mxu0 %v873
  %2102 = vmatpush.bf16.msra.mxu0 %v869
  %2103 = vmatpush.bf16.msra.mxu0 %v865
  %2104 = vmatpush.bf16.msra.mxu0 %v861
  %2105 = vmatpush.bf16.msra.mxu0 %v857
  %2106 = vmatpush.bf16.msra.mxu0 %v853
  %2107 = vmatpush.bf16.msra.mxu0 %v849
  %2108 = vmatpush.bf16.msra.mxu0 %v845
  %2109 = vmatmul.bf16.gmra.mxu0 %v2099
  %v2110 = vpop.f32.mrf.mxu0
  %v2111 = vadd.f32 %v2050, %v2110
  %v2112 = vpop.f32.mrf.mxu0
  %2113 = vdwg.mxu0
  %2114 = vmatpush.bf16.msra.mxu0 %v874
  %2115 = vmatpush.bf16.msra.mxu0 %v870
  %2116 = vmatpush.bf16.msra.mxu0 %v866
  %2117 = vmatpush.bf16.msra.mxu0 %v862
  %2118 = vmatpush.bf16.msra.mxu0 %v858
  %2119 = vmatpush.bf16.msra.mxu0 %v854
  %2120 = vmatpush.bf16.msra.mxu0 %v850
  %2121 = vmatpush.bf16.msra.mxu0 %v846
  %2122 = vmatmul.bf16.gmra.mxu0 %v2099
  %v2123 = vpop.f32.mrf.mxu0
  %v2124 = vadd.f32 %v2063, %v2123
  %v2125 = vpop.f32.mrf.mxu0
  %2126 = vdwg.mxu0
  %2127 = vmatpush.bf16.msra.mxu0 %v875
  %2128 = vmatpush.bf16.msra.mxu0 %v871
  %2129 = vmatpush.bf16.msra.mxu0 %v867
  %2130 = vmatpush.bf16.msra.mxu0 %v863
  %2131 = vmatpush.bf16.msra.mxu0 %v859
  %2132 = vmatpush.bf16.msra.mxu0 %v855
  %2133 = vmatpush.bf16.msra.mxu0 %v851
  %2134 = vmatpush.bf16.msra.mxu0 %v847
  %2135 = vmatmul.bf16.gmra.mxu0 %v2099
  %v2136 = vpop.f32.mrf.mxu0
  %v2137 = vadd.f32 %v2076, %v2136
  %v2138 = vpop.f32.mrf.mxu0
  %2139 = vdwg.mxu0
  %2140 = vmatpush.bf16.msra.mxu0 %v876
  %2141 = vmatpush.bf16.msra.mxu0 %v872
  %2142 = vmatpush.bf16.msra.mxu0 %v868
  %2143 = vmatpush.bf16.msra.mxu0 %v864
  %2144 = vmatpush.bf16.msra.mxu0 %v860
  %2145 = vmatpush.bf16.msra.mxu0 %v856
  %2146 = vmatpush.bf16.msra.mxu0 %v852
  %2147 = vmatpush.bf16.msra.mxu0 %v848
  %2148 = vmatmul.bf16.gmra.mxu0 %v2099
  %v2149 = vpop.f32.mrf.mxu0
  %v2150 = vadd.f32 %v2089, %v2149
  %v2151 = vpop.f32.mrf.mxu0
  %2152 = vdwg.mxu0
  %v2153 = vadd.f32 %v2111, %v42
  %v2154 = vadd.f32 %v2124, %v43
  %v2155 = vadd.f32 %v2137, %v44
  %v2156 = vadd.f32 %v2150, %v45
  %v2157 = vxor.u32 %v2153, 2147483648
  %v2158 = vmul.f32 %v2157, 1.442695
  %v2159 = vpow.pop %v2158
  %v2160 = vadd.f32 %v2159, 1.0
  %v2161 = vrcp.pop %v2160
  %v2162 = vmul.f32 %v2160, %v2161
  %v2163 = vsub.f32 1.0, %v2162
  %v2164 = vmul.f32 %v2161, %v2163
  %v2165 = vadd.f32 %v2161, %v2164
  %vm2166 = vweird.f32 %v2160
  %vm2167 = vweird.f32 %v2161
  %vm2168 = vmor %vm2166, %vm2167
  %v2169 = vsel %vm2168, %v2161, %v2165
  %v2170 = vand.u32 2147483647, %v2160
  %vm2171 = vcmp.eq.f32.partialorder %v2170, 8.507059e+37
  %v2172 = vand.u32 %v2160, 2147483648
  %v2173 = vor.u32 1.1754944e-38, %v2172
  %v2174 = vsel %vm2171, %v2173, %v2169
  %v2175 = vmul.f32 1.0, %v2174
  %v2176 = vxor.u32 %v2154, 2147483648
  %v2177 = vmul.f32 %v2176, 1.442695
  %v2178 = vpow.pop %v2177
  %v2179 = vadd.f32 %v2178, 1.0
  %v2180 = vrcp.pop %v2179
  %v2181 = vmul.f32 %v2179, %v2180
  %v2182 = vsub.f32 1.0, %v2181
  %v2183 = vmul.f32 %v2180, %v2182
  %v2184 = vadd.f32 %v2180, %v2183
  %vm2185 = vweird.f32 %v2179
  %vm2186 = vweird.f32 %v2180
  %vm2187 = vmor %vm2185, %vm2186
  %v2188 = vsel %vm2187, %v2180, %v2184
  %v2189 = vand.u32 2147483647, %v2179
  %vm2190 = vcmp.eq.f32.partialorder %v2189, 8.507059e+37
  %v2191 = vand.u32 %v2179, 2147483648
  %v2192 = vor.u32 1.1754944e-38, %v2191
  %v2193 = vsel %vm2190, %v2192, %v2188
  %v2194 = vmul.f32 1.0, %v2193
  %v2195 = vtanh.pop %v2155
  %v2196 = vxor.u32 %v2156, 2147483648
  %v2197 = vmul.f32 %v2196, 1.442695
  %v2198 = vpow.pop %v2197
  %v2199 = vadd.f32 %v2198, 1.0
  %v2200 = vrcp.pop %v2199
  %v2201 = vmul.f32 %v2199, %v2200
  %v2202 = vsub.f32 1.0, %v2201
  %v2203 = vmul.f32 %v2200, %v2202
  %v2204 = vadd.f32 %v2200, %v2203
  %vm2205 = vweird.f32 %v2199
  %vm2206 = vweird.f32 %v2200
  %vm2207 = vmor %vm2205, %vm2206
  %v2208 = vsel %vm2207, %v2200, %v2204
  %v2209 = vand.u32 2147483647, %v2199
  %vm2210 = vcmp.eq.f32.partialorder %v2209, 8.507059e+37
  %v2211 = vand.u32 %v2199, 2147483648
  %v2212 = vor.u32 1.1754944e-38, %v2211
  %v2213 = vsel %vm2210, %v2212, %v2208
  %v2214 = vmul.f32 1.0, %v2213
  %v2215 = vmul.f32 %v2194, %v1822
  %v2216 = vmul.f32 %v2175, %v2195
  %v2217 = vadd.f32 %v2215, %v2216
  %v2218 = vtanh.pop %v2217
  %v2219 = vmul.f32 %v2214, %v2218
  %v2220 = vld [vmem:[%s0] sm:$0x44]
  %v2221 = vld [vmem:[%s0 + $0x8] sm:$0x44]
  %v2222 = vld [vmem:[%s0 + $0x10] sm:$0x44]
  %v2223 = vld [vmem:[%s0 + $0x18] sm:$0x44]
  %v2224 = vunpack.c.l.bf16 %v2220
  %v2225 = vunpack.c.h.bf16 %v2220
  %v2226 = vunpack.c.l.bf16 %v2221
  %v2227 = vunpack.c.h.bf16 %v2221
  %v2228 = vunpack.c.l.bf16 %v2222
  %v2229 = vunpack.c.h.bf16 %v2222
  %v2230 = vunpack.c.l.bf16 %v2223
  %v2231 = vunpack.c.h.bf16 %v2223
  %2232 = vmatpush.bf16.msra.mxu0 %v219
  %2233 = vmatpush.bf16.msra.mxu0 %v215
  %2234 = vmatpush.bf16.msra.mxu0 %v211
  %2235 = vmatpush.bf16.msra.mxu0 %v207
  %2236 = vmatpush.bf16.msra.mxu0 %v203
  %2237 = vmatpush.bf16.msra.mxu0 %v199
  %2238 = vmatpush.bf16.msra.mxu0 %v195
  %2239 = vmatpush.bf16.msra.mxu0 %v191
  %2240 = vmatmul.bf16.gmra.mxu0 %v2099
  %v2241 = vpop.f32.mrf.mxu0
  %v2242 = vadd.f32 0.0, %v2241
  %v2243 = vpop.f32.mrf.mxu0
  %2244 = vdwg.mxu0
  %2245 = vmatpush.bf16.msra.mxu0 %v220
  %2246 = vmatpush.bf16.msra.mxu0 %v216
  %2247 = vmatpush.bf16.msra.mxu0 %v212
  %2248 = vmatpush.bf16.msra.mxu0 %v208
  %2249 = vmatpush.bf16.msra.mxu0 %v204
  %2250 = vmatpush.bf16.msra.mxu0 %v200
  %2251 = vmatpush.bf16.msra.mxu0 %v196
  %2252 = vmatpush.bf16.msra.mxu0 %v192
  %2253 = vmatmul.bf16.gmra.mxu0 %v2099
  %v2254 = vpop.f32.mrf.mxu0
  %v2255 = vadd.f32 0.0, %v2254
  %v2256 = vpop.f32.mrf.mxu0
  %2257 = vdwg.mxu0
  %2258 = vmatpush.bf16.msra.mxu0 %v221
  %2259 = vmatpush.bf16.msra.mxu0 %v217
  %2260 = vmatpush.bf16.msra.mxu0 %v213
  %2261 = vmatpush.bf16.msra.mxu0 %v209
  %2262 = vmatpush.bf16.msra.mxu0 %v205
  %2263 = vmatpush.bf16.msra.mxu0 %v201
  %2264 = vmatpush.bf16.msra.mxu0 %v197
  %2265 = vmatpush.bf16.msra.mxu0 %v193
  %2266 = vmatmul.bf16.gmra.mxu0 %v2099
  %v2267 = vpop.f32.mrf.mxu0
  %v2268 = vadd.f32 0.0, %v2267
  %v2269 = vpop.f32.mrf.mxu0
  %2270 = vdwg.mxu0
  %2271 = vmatpush.bf16.msra.mxu0 %v222
  %2272 = vmatpush.bf16.msra.mxu0 %v218
  %2273 = vmatpush.bf16.msra.mxu0 %v214
  %2274 = vmatpush.bf16.msra.mxu0 %v210
  %2275 = vmatpush.bf16.msra.mxu0 %v206
  %2276 = vmatpush.bf16.msra.mxu0 %v202
  %2277 = vmatpush.bf16.msra.mxu0 %v198
  %2278 = vmatpush.bf16.msra.mxu0 %v194
  %2279 = vmatmul.bf16.gmra.mxu0 %v2099
  %v2280 = vpop.f32.mrf.mxu0
  %v2281 = vadd.f32 0.0, %v2280
  %v2282 = vpop.f32.mrf.mxu0
  %2283 = vdwg.mxu0
  %v2288 = vrot.slane %v2242, 4
  %v2289 = vrot.slane %v2255, 4
  %v2290 = vrot.slane %v2268, 4
  %v2291 = vrot.slane %v2281, 4
  %v2292 = vrot.slane %v2242, 5
  %v2293 = vrot.slane %v2255, 5
  %v2294 = vrot.slane %v2268, 5
  %v2295 = vrot.slane %v2281, 5
  %v2304 = vadd.f32 %v2224, %v2288
  %v2305 = vadd.f32 %v2225, %v2289
  %v2306 = vadd.f32 %v2226, %v2290
  %v2307 = vadd.f32 %v2227, %v2291
  %v2308 = vadd.f32 %v2228, %v2292
  %v2309 = vadd.f32 %v2229, %v2293
  %v2310 = vadd.f32 %v2230, %v2294
  %v2311 = vadd.f32 %v2231, %v2295
  %v2312 = vxor.u32 %v2304, 2147483648
  %v2313 = vxor.u32 %v2308, 2147483648
  %v2314 = vmul.f32 %v2312, 1.442695
  %v2315 = vpow.pop %v2314
  %v2316 = vmul.f32 %v2313, 1.442695
  %v2317 = vpow.pop %v2316
  %v2318 = vadd.f32 %v2315, 1.0
  %v2319 = vadd.f32 %v2317, 1.0
  %v2320 = vrcp.pop %v2318
  %v2321 = vmul.f32 %v2318, %v2320
  %v2322 = vsub.f32 1.0, %v2321
  %v2323 = vmul.f32 %v2320, %v2322
  %v2324 = vadd.f32 %v2320, %v2323
  %vm2325 = vweird.f32 %v2318
  %vm2326 = vweird.f32 %v2320
  %vm2327 = vmor %vm2325, %vm2326
  %v2328 = vsel %vm2327, %v2320, %v2324
  %v2329 = vand.u32 2147483647, %v2318
  %vm2330 = vcmp.eq.f32.partialorder %v2329, 8.507059e+37
  %v2331 = vand.u32 %v2318, 2147483648
  %v2332 = vor.u32 1.1754944e-38, %v2331
  %v2333 = vsel %vm2330, %v2332, %v2328
  %v2334 = vmul.f32 1.0, %v2333
  %v2335 = vrcp.pop %v2319
  %v2336 = vmul.f32 %v2319, %v2335
  %v2337 = vsub.f32 1.0, %v2336
  %v2338 = vmul.f32 %v2335, %v2337
  %v2339 = vadd.f32 %v2335, %v2338
  %vm2340 = vweird.f32 %v2319
  %vm2341 = vweird.f32 %v2335
  %vm2342 = vmor %vm2340, %vm2341
  %v2343 = vsel %vm2342, %v2335, %v2339
  %v2344 = vand.u32 2147483647, %v2319
  %vm2345 = vcmp.eq.f32.partialorder %v2344, 8.507059e+37
  %v2346 = vand.u32 %v2319, 2147483648
  %v2347 = vor.u32 1.1754944e-38, %v2346
  %v2348 = vsel %vm2345, %v2347, %v2343
  %v2349 = vmul.f32 1.0, %v2348
  %v2350 = vxor.u32 %v2305, 2147483648
  %v2351 = vxor.u32 %v2309, 2147483648
  %v2352 = vmul.f32 %v2350, 1.442695
  %v2353 = vpow.pop %v2352
  %v2354 = vmul.f32 %v2351, 1.442695
  %v2355 = vpow.pop %v2354
  %v2356 = vadd.f32 %v2353, 1.0
  %v2357 = vadd.f32 %v2355, 1.0
  %v2358 = vrcp.pop %v2356
  %v2359 = vmul.f32 %v2356, %v2358
  %v2360 = vsub.f32 1.0, %v2359
  %v2361 = vmul.f32 %v2358, %v2360
  %v2362 = vadd.f32 %v2358, %v2361
  %vm2363 = vweird.f32 %v2356
  %vm2364 = vweird.f32 %v2358
  %vm2365 = vmor %vm2363, %vm2364
  %v2366 = vsel %vm2365, %v2358, %v2362
  %v2367 = vand.u32 2147483647, %v2356
  %vm2368 = vcmp.eq.f32.partialorder %v2367, 8.507059e+37
  %v2369 = vand.u32 %v2356, 2147483648
  %v2370 = vor.u32 1.1754944e-38, %v2369
  %v2371 = vsel %vm2368, %v2370, %v2366
  %v2372 = vmul.f32 1.0, %v2371
  %v2373 = vrcp.pop %v2357
  %v2374 = vmul.f32 %v2357, %v2373
  %v2375 = vsub.f32 1.0, %v2374
  %v2376 = vmul.f32 %v2373, %v2375
  %v2377 = vadd.f32 %v2373, %v2376
  %vm2378 = vweird.f32 %v2357
  %vm2379 = vweird.f32 %v2373
  %vm2380 = vmor %vm2378, %vm2379
  %v2381 = vsel %vm2380, %v2373, %v2377
  %v2382 = vand.u32 2147483647, %v2357
  %vm2383 = vcmp.eq.f32.partialorder %v2382, 8.507059e+37
  %v2384 = vand.u32 %v2357, 2147483648
  %v2385 = vor.u32 1.1754944e-38, %v2384
  %v2386 = vsel %vm2383, %v2385, %v2381
  %v2387 = vmul.f32 1.0, %v2386
  %v2388 = vtanh.pop %v2306
  %v2389 = vtanh.pop %v2310
  %v2390 = vxor.u32 %v2307, 2147483648
  %v2391 = vxor.u32 %v2311, 2147483648
  %v2392 = vmul.f32 %v2390, 1.442695
  %v2393 = vpow.pop %v2392
  %v2394 = vmul.f32 %v2391, 1.442695
  %v2395 = vpow.pop %v2394
  %v2396 = vadd.f32 %v2393, 1.0
  %v2397 = vadd.f32 %v2395, 1.0
  %v2398 = vrcp.pop %v2396
  %v2399 = vmul.f32 %v2396, %v2398
  %v2400 = vsub.f32 1.0, %v2399
  %v2401 = vmul.f32 %v2398, %v2400
  %v2402 = vadd.f32 %v2398, %v2401
  %vm2403 = vweird.f32 %v2396
  %vm2404 = vweird.f32 %v2398
  %vm2405 = vmor %vm2403, %vm2404
  %v2406 = vsel %vm2405, %v2398, %v2402
  %v2407 = vand.u32 2147483647, %v2396
  %vm2408 = vcmp.eq.f32.partialorder %v2407, 8.507059e+37
  %v2409 = vand.u32 %v2396, 2147483648
  %v2410 = vor.u32 1.1754944e-38, %v2409
  %v2411 = vsel %vm2408, %v2410, %v2406
  %v2412 = vmul.f32 1.0, %v2411
  %v2413 = vrcp.pop %v2397
  %v2414 = vmul.f32 %v2397, %v2413
  %v2415 = vsub.f32 1.0, %v2414
  %v2416 = vmul.f32 %v2413, %v2415
  %v2417 = vadd.f32 %v2413, %v2416
  %vm2418 = vweird.f32 %v2397
  %vm2419 = vweird.f32 %v2413
  %vm2420 = vmor %vm2418, %vm2419
  %v2421 = vsel %vm2420, %v2413, %v2417
  %v2422 = vand.u32 2147483647, %v2397
  %vm2423 = vcmp.eq.f32.partialorder %v2422, 8.507059e+37
  %v2424 = vand.u32 %v2397, 2147483648
  %v2425 = vor.u32 1.1754944e-38, %v2424
  %v2426 = vsel %vm2423, %v2425, %v2421
  %v2427 = vmul.f32 1.0, %v2426
  %v2430 = vrot.slane %v2031, 7
  %v2431 = vrot.slane %v2032, 7
  %v2434 = vmul.f32 %v2372, %v2430
  %v2435 = vmul.f32 %v2387, %v2431
  %v2436 = vmul.f32 %v2334, %v2388
  %v2437 = vmul.f32 %v2349, %v2389
  %v2438 = vadd.f32 %v2434, %v2436
  %v2439 = vadd.f32 %v2435, %v2437
  %v2440 = vtanh.pop %v2438
  %v2441 = vtanh.pop %v2439
  %v2442 = vmul.f32 %v2412, %v2440
  %v2443 = vmul.f32 %v2427, %v2441
  %v2444 = vpack.c.bf16 %v2442, %v2442
  %v2445 = vpack.c.bf16 %v2443, %v2443
  %v2446 = vpack.c.bf16 %v2219, %v2219
  %2447 = vmatpush.bf16.msra.mxu0 %v652
  %2448 = vmatpush.bf16.msra.mxu0 %v648
  %2449 = vmatpush.bf16.msra.mxu0 %v644
  %2450 = vmatpush.bf16.msra.mxu0 %v640
  %2451 = vmatpush.bf16.msra.mxu0 %v636
  %2452 = vmatpush.bf16.msra.mxu0 %v632
  %2453 = vmatpush.bf16.msra.mxu0 %v628
  %2454 = vmatpush.bf16.msra.mxu0 %v624
  %2455 = vmatmul.bf16.gmra.mxu0 %v2446
  %v2456 = vpop.f32.mrf.mxu0
  %v2457 = vadd.f32 0.0, %v2456
  %v2458 = vpop.f32.mrf.mxu0
  %2459 = vdwg.mxu0
  %2460 = vmatpush.bf16.msra.mxu0 %v653
  %2461 = vmatpush.bf16.msra.mxu0 %v649
  %2462 = vmatpush.bf16.msra.mxu0 %v645
  %2463 = vmatpush.bf16.msra.mxu0 %v641
  %2464 = vmatpush.bf16.msra.mxu0 %v637
  %2465 = vmatpush.bf16.msra.mxu0 %v633
  %2466 = vmatpush.bf16.msra.mxu0 %v629
  %2467 = vmatpush.bf16.msra.mxu0 %v625
  %2468 = vmatmul.bf16.gmra.mxu0 %v2446
  %v2469 = vpop.f32.mrf.mxu0
  %v2470 = vadd.f32 0.0, %v2469
  %v2471 = vpop.f32.mrf.mxu0
  %2472 = vdwg.mxu0
  %2473 = vmatpush.bf16.msra.mxu0 %v654
  %2474 = vmatpush.bf16.msra.mxu0 %v650
  %2475 = vmatpush.bf16.msra.mxu0 %v646
  %2476 = vmatpush.bf16.msra.mxu0 %v642
  %2477 = vmatpush.bf16.msra.mxu0 %v638
  %2478 = vmatpush.bf16.msra.mxu0 %v634
  %2479 = vmatpush.bf16.msra.mxu0 %v630
  %2480 = vmatpush.bf16.msra.mxu0 %v626
  %2481 = vmatmul.bf16.gmra.mxu0 %v2446
  %v2482 = vpop.f32.mrf.mxu0
  %v2483 = vadd.f32 0.0, %v2482
  %v2484 = vpop.f32.mrf.mxu0
  %2485 = vdwg.mxu0
  %2486 = vmatpush.bf16.msra.mxu0 %v655
  %2487 = vmatpush.bf16.msra.mxu0 %v651
  %2488 = vmatpush.bf16.msra.mxu0 %v647
  %2489 = vmatpush.bf16.msra.mxu0 %v643
  %2490 = vmatpush.bf16.msra.mxu0 %v639
  %2491 = vmatpush.bf16.msra.mxu0 %v635
  %2492 = vmatpush.bf16.msra.mxu0 %v631
  %2493 = vmatpush.bf16.msra.mxu0 %v627
  %2494 = vmatmul.bf16.gmra.mxu0 %v2446
  %v2495 = vpop.f32.mrf.mxu0
  %v2496 = vadd.f32 0.0, %v2495
  %v2497 = vpop.f32.mrf.mxu0
  %2498 = vdwg.mxu0
  %v2501 = vunpack.c.l.b16 %v2444
  %v2502 = vunpack.c.l.b16 %v2445
  %v2503 = vrot.slane %v2501, 4
  %v2504 = vrot.slane %v2502, 3
  %v2505 = vsel %vm745, %v2504, %v2503
  %v2506 = vpack.c.b16 %v2505, %v2505
  %2508 = vmatpush.bf16.msra.mxu0 %v873
  %2509 = vmatpush.bf16.msra.mxu0 %v869
  %2510 = vmatpush.bf16.msra.mxu0 %v865
  %2511 = vmatpush.bf16.msra.mxu0 %v861
  %2512 = vmatpush.bf16.msra.mxu0 %v857
  %2513 = vmatpush.bf16.msra.mxu0 %v853
  %2514 = vmatpush.bf16.msra.mxu0 %v849
  %2515 = vmatpush.bf16.msra.mxu0 %v845
  %2516 = vmatmul.bf16.gmra.mxu0 %v2506
  %v2517 = vpop.f32.mrf.mxu0
  %v2518 = vadd.f32 %v2457, %v2517
  %v2519 = vpop.f32.mrf.mxu0
  %2520 = vdwg.mxu0
  %2521 = vmatpush.bf16.msra.mxu0 %v874
  %2522 = vmatpush.bf16.msra.mxu0 %v870
  %2523 = vmatpush.bf16.msra.mxu0 %v866
  %2524 = vmatpush.bf16.msra.mxu0 %v862
  %2525 = vmatpush.bf16.msra.mxu0 %v858
  %2526 = vmatpush.bf16.msra.mxu0 %v854
  %2527 = vmatpush.bf16.msra.mxu0 %v850
  %2528 = vmatpush.bf16.msra.mxu0 %v846
  %2529 = vmatmul.bf16.gmra.mxu0 %v2506
  %v2530 = vpop.f32.mrf.mxu0
  %v2531 = vadd.f32 %v2470, %v2530
  %v2532 = vpop.f32.mrf.mxu0
  %2533 = vdwg.mxu0
  %2534 = vmatpush.bf16.msra.mxu0 %v875
  %2535 = vmatpush.bf16.msra.mxu0 %v871
  %2536 = vmatpush.bf16.msra.mxu0 %v867
  %2537 = vmatpush.bf16.msra.mxu0 %v863
  %2538 = vmatpush.bf16.msra.mxu0 %v859
  %2539 = vmatpush.bf16.msra.mxu0 %v855
  %2540 = vmatpush.bf16.msra.mxu0 %v851
  %2541 = vmatpush.bf16.msra.mxu0 %v847
  %2542 = vmatmul.bf16.gmra.mxu0 %v2506
  %v2543 = vpop.f32.mrf.mxu0
  %v2544 = vadd.f32 %v2483, %v2543
  %v2545 = vpop.f32.mrf.mxu0
  %2546 = vdwg.mxu0
  %2547 = vmatpush.bf16.msra.mxu0 %v876
  %2548 = vmatpush.bf16.msra.mxu0 %v872
  %2549 = vmatpush.bf16.msra.mxu0 %v868
  %2550 = vmatpush.bf16.msra.mxu0 %v864
  %2551 = vmatpush.bf16.msra.mxu0 %v860
  %2552 = vmatpush.bf16.msra.mxu0 %v856
  %2553 = vmatpush.bf16.msra.mxu0 %v852
  %2554 = vmatpush.bf16.msra.mxu0 %v848
  %2555 = vmatmul.bf16.gmra.mxu0 %v2506
  %v2556 = vpop.f32.mrf.mxu0
  %v2557 = vadd.f32 %v2496, %v2556
  %v2558 = vpop.f32.mrf.mxu0
  %2559 = vdwg.mxu0
  %v2560 = vadd.f32 %v2518, %v42
  %v2561 = vadd.f32 %v2531, %v43
  %v2562 = vadd.f32 %v2544, %v44
  %v2563 = vadd.f32 %v2557, %v45
  %v2564 = vxor.u32 %v2560, 2147483648
  %v2565 = vmul.f32 %v2564, 1.442695
  %v2566 = vpow.pop %v2565
  %v2567 = vadd.f32 %v2566, 1.0
  %v2568 = vrcp.pop %v2567
  %v2569 = vmul.f32 %v2567, %v2568
  %v2570 = vsub.f32 1.0, %v2569
  %v2571 = vmul.f32 %v2568, %v2570
  %v2572 = vadd.f32 %v2568, %v2571
  %vm2573 = vweird.f32 %v2567
  %vm2574 = vweird.f32 %v2568
  %vm2575 = vmor %vm2573, %vm2574
  %v2576 = vsel %vm2575, %v2568, %v2572
  %v2577 = vand.u32 2147483647, %v2567
  %vm2578 = vcmp.eq.f32.partialorder %v2577, 8.507059e+37
  %v2579 = vand.u32 %v2567, 2147483648
  %v2580 = vor.u32 1.1754944e-38, %v2579
  %v2581 = vsel %vm2578, %v2580, %v2576
  %v2582 = vmul.f32 1.0, %v2581
  %v2583 = vxor.u32 %v2561, 2147483648
  %v2584 = vmul.f32 %v2583, 1.442695
  %v2585 = vpow.pop %v2584
  %v2586 = vadd.f32 %v2585, 1.0
  %v2587 = vrcp.pop %v2586
  %v2588 = vmul.f32 %v2586, %v2587
  %v2589 = vsub.f32 1.0, %v2588
  %v2590 = vmul.f32 %v2587, %v2589
  %v2591 = vadd.f32 %v2587, %v2590
  %vm2592 = vweird.f32 %v2586
  %vm2593 = vweird.f32 %v2587
  %vm2594 = vmor %vm2592, %vm2593
  %v2595 = vsel %vm2594, %v2587, %v2591
  %v2596 = vand.u32 2147483647, %v2586
  %vm2597 = vcmp.eq.f32.partialorder %v2596, 8.507059e+37
  %v2598 = vand.u32 %v2586, 2147483648
  %v2599 = vor.u32 1.1754944e-38, %v2598
  %v2600 = vsel %vm2597, %v2599, %v2595
  %v2601 = vmul.f32 1.0, %v2600
  %v2602 = vtanh.pop %v2562
  %v2603 = vxor.u32 %v2563, 2147483648
  %v2604 = vmul.f32 %v2603, 1.442695
  %v2605 = vpow.pop %v2604
  %v2606 = vadd.f32 %v2605, 1.0
  %v2607 = vrcp.pop %v2606
  %v2608 = vmul.f32 %v2606, %v2607
  %v2609 = vsub.f32 1.0, %v2608
  %v2610 = vmul.f32 %v2607, %v2609
  %v2611 = vadd.f32 %v2607, %v2610
  %vm2612 = vweird.f32 %v2606
  %vm2613 = vweird.f32 %v2607
  %vm2614 = vmor %vm2612, %vm2613
  %v2615 = vsel %vm2614, %v2607, %v2611
  %v2616 = vand.u32 2147483647, %v2606
  %vm2617 = vcmp.eq.f32.partialorder %v2616, 8.507059e+37
  %v2618 = vand.u32 %v2606, 2147483648
  %v2619 = vor.u32 1.1754944e-38, %v2618
  %v2620 = vsel %vm2617, %v2619, %v2615
  %v2621 = vmul.f32 1.0, %v2620
  %v2622 = vmul.f32 %v2601, %v2217
  %v2623 = vmul.f32 %v2582, %v2602
  %v2624 = vadd.f32 %v2622, %v2623
  %v2625 = vtanh.pop %v2624
  %v2626 = vmul.f32 %v2621, %v2625
  %2627 = vmatpush.bf16.msra.mxu0 %v219
  %2628 = vmatpush.bf16.msra.mxu0 %v215
  %2629 = vmatpush.bf16.msra.mxu0 %v211
  %2630 = vmatpush.bf16.msra.mxu0 %v207
  %2631 = vmatpush.bf16.msra.mxu0 %v203
  %2632 = vmatpush.bf16.msra.mxu0 %v199
  %2633 = vmatpush.bf16.msra.mxu0 %v195
  %2634 = vmatpush.bf16.msra.mxu0 %v191
  %2635 = vmatmul.bf16.gmra.mxu0 %v2506
  %v2636 = vpop.f32.mrf.mxu0
  %v2637 = vadd.f32 0.0, %v2636
  %v2638 = vpop.f32.mrf.mxu0
  %2639 = vdwg.mxu0
  %2640 = vmatpush.bf16.msra.mxu0 %v220
  %2641 = vmatpush.bf16.msra.mxu0 %v216
  %2642 = vmatpush.bf16.msra.mxu0 %v212
  %2643 = vmatpush.bf16.msra.mxu0 %v208
  %2644 = vmatpush.bf16.msra.mxu0 %v204
  %2645 = vmatpush.bf16.msra.mxu0 %v200
  %2646 = vmatpush.bf16.msra.mxu0 %v196
  %2647 = vmatpush.bf16.msra.mxu0 %v192
  %2648 = vmatmul.bf16.gmra.mxu0 %v2506
  %v2649 = vpop.f32.mrf.mxu0
  %v2650 = vadd.f32 0.0, %v2649
  %v2651 = vpop.f32.mrf.mxu0
  %2652 = vdwg.mxu0
  %2653 = vmatpush.bf16.msra.mxu0 %v221
  %2654 = vmatpush.bf16.msra.mxu0 %v217
  %2655 = vmatpush.bf16.msra.mxu0 %v213
  %2656 = vmatpush.bf16.msra.mxu0 %v209
  %2657 = vmatpush.bf16.msra.mxu0 %v205
  %2658 = vmatpush.bf16.msra.mxu0 %v201
  %2659 = vmatpush.bf16.msra.mxu0 %v197
  %2660 = vmatpush.bf16.msra.mxu0 %v193
  %2661 = vmatmul.bf16.gmra.mxu0 %v2506
  %v2662 = vpop.f32.mrf.mxu0
  %v2663 = vadd.f32 0.0, %v2662
  %v2664 = vpop.f32.mrf.mxu0
  %2665 = vdwg.mxu0
  %2666 = vmatpush.bf16.msra.mxu0 %v222
  %2667 = vmatpush.bf16.msra.mxu0 %v218
  %2668 = vmatpush.bf16.msra.mxu0 %v214
  %2669 = vmatpush.bf16.msra.mxu0 %v210
  %2670 = vmatpush.bf16.msra.mxu0 %v206
  %2671 = vmatpush.bf16.msra.mxu0 %v202
  %2672 = vmatpush.bf16.msra.mxu0 %v198
  %2673 = vmatpush.bf16.msra.mxu0 %v194
  %2674 = vmatmul.bf16.gmra.mxu0 %v2506
  %v2675 = vpop.f32.mrf.mxu0
  %v2676 = vadd.f32 0.0, %v2675
  %v2677 = vpop.f32.mrf.mxu0
  %2678 = vdwg.mxu0
  %v2683 = vrot.slane %v2637, 3
  %v2684 = vrot.slane %v2650, 3
  %v2685 = vrot.slane %v2663, 3
  %v2686 = vrot.slane %v2676, 3
  %v2687 = vrot.slane %v2637, 4
  %v2688 = vrot.slane %v2650, 4
  %v2689 = vrot.slane %v2663, 4
  %v2690 = vrot.slane %v2676, 4
  %v2699 = vadd.f32 %v2224, %v2683
  %v2700 = vadd.f32 %v2225, %v2684
  %v2701 = vadd.f32 %v2226, %v2685
  %v2702 = vadd.f32 %v2227, %v2686
  %v2703 = vadd.f32 %v2228, %v2687
  %v2704 = vadd.f32 %v2229, %v2688
  %v2705 = vadd.f32 %v2230, %v2689
  %v2706 = vadd.f32 %v2231, %v2690
  %v2707 = vxor.u32 %v2699, 2147483648
  %v2708 = vxor.u32 %v2703, 2147483648
  %v2709 = vmul.f32 %v2707, 1.442695
  %v2710 = vpow.pop %v2709
  %v2711 = vmul.f32 %v2708, 1.442695
  %v2712 = vpow.pop %v2711
  %v2713 = vadd.f32 %v2710, 1.0
  %v2714 = vadd.f32 %v2712, 1.0
  %v2715 = vrcp.pop %v2713
  %v2716 = vmul.f32 %v2713, %v2715
  %v2717 = vsub.f32 1.0, %v2716
  %v2718 = vmul.f32 %v2715, %v2717
  %v2719 = vadd.f32 %v2715, %v2718
  %vm2720 = vweird.f32 %v2713
  %vm2721 = vweird.f32 %v2715
  %vm2722 = vmor %vm2720, %vm2721
  %v2723 = vsel %vm2722, %v2715, %v2719
  %v2724 = vand.u32 2147483647, %v2713
  %vm2725 = vcmp.eq.f32.partialorder %v2724, 8.507059e+37
  %v2726 = vand.u32 %v2713, 2147483648
  %v2727 = vor.u32 1.1754944e-38, %v2726
  %v2728 = vsel %vm2725, %v2727, %v2723
  %v2729 = vmul.f32 1.0, %v2728
  %v2730 = vrcp.pop %v2714
  %v2731 = vmul.f32 %v2714, %v2730
  %v2732 = vsub.f32 1.0, %v2731
  %v2733 = vmul.f32 %v2730, %v2732
  %v2734 = vadd.f32 %v2730, %v2733
  %vm2735 = vweird.f32 %v2714
  %vm2736 = vweird.f32 %v2730
  %vm2737 = vmor %vm2735, %vm2736
  %v2738 = vsel %vm2737, %v2730, %v2734
  %v2739 = vand.u32 2147483647, %v2714
  %vm2740 = vcmp.eq.f32.partialorder %v2739, 8.507059e+37
  %v2741 = vand.u32 %v2714, 2147483648
  %v2742 = vor.u32 1.1754944e-38, %v2741
  %v2743 = vsel %vm2740, %v2742, %v2738
  %v2744 = vmul.f32 1.0, %v2743
  %v2745 = vxor.u32 %v2700, 2147483648
  %v2746 = vxor.u32 %v2704, 2147483648
  %v2747 = vmul.f32 %v2745, 1.442695
  %v2748 = vpow.pop %v2747
  %v2749 = vmul.f32 %v2746, 1.442695
  %v2750 = vpow.pop %v2749
  %v2751 = vadd.f32 %v2748, 1.0
  %v2752 = vadd.f32 %v2750, 1.0
  %v2753 = vrcp.pop %v2751
  %v2754 = vmul.f32 %v2751, %v2753
  %v2755 = vsub.f32 1.0, %v2754
  %v2756 = vmul.f32 %v2753, %v2755
  %v2757 = vadd.f32 %v2753, %v2756
  %vm2758 = vweird.f32 %v2751
  %vm2759 = vweird.f32 %v2753
  %vm2760 = vmor %vm2758, %vm2759
  %v2761 = vsel %vm2760, %v2753, %v2757
  %v2762 = vand.u32 2147483647, %v2751
  %vm2763 = vcmp.eq.f32.partialorder %v2762, 8.507059e+37
  %v2764 = vand.u32 %v2751, 2147483648
  %v2765 = vor.u32 1.1754944e-38, %v2764
  %v2766 = vsel %vm2763, %v2765, %v2761
  %v2767 = vmul.f32 1.0, %v2766
  %v2768 = vrcp.pop %v2752
  %v2769 = vmul.f32 %v2752, %v2768
  %v2770 = vsub.f32 1.0, %v2769
  %v2771 = vmul.f32 %v2768, %v2770
  %v2772 = vadd.f32 %v2768, %v2771
  %vm2773 = vweird.f32 %v2752
  %vm2774 = vweird.f32 %v2768
  %vm2775 = vmor %vm2773, %vm2774
  %v2776 = vsel %vm2775, %v2768, %v2772
  %v2777 = vand.u32 2147483647, %v2752
  %vm2778 = vcmp.eq.f32.partialorder %v2777, 8.507059e+37
  %v2779 = vand.u32 %v2752, 2147483648
  %v2780 = vor.u32 1.1754944e-38, %v2779
  %v2781 = vsel %vm2778, %v2780, %v2776
  %v2782 = vmul.f32 1.0, %v2781
  %v2783 = vtanh.pop %v2701
  %v2784 = vtanh.pop %v2705
  %v2785 = vxor.u32 %v2702, 2147483648
  %v2786 = vxor.u32 %v2706, 2147483648
  %v2787 = vmul.f32 %v2785, 1.442695
  %v2788 = vpow.pop %v2787
  %v2789 = vmul.f32 %v2786, 1.442695
  %v2790 = vpow.pop %v2789
  %v2791 = vadd.f32 %v2788, 1.0
  %v2792 = vadd.f32 %v2790, 1.0
  %v2793 = vrcp.pop %v2791
  %v2794 = vmul.f32 %v2791, %v2793
  %v2795 = vsub.f32 1.0, %v2794
  %v2796 = vmul.f32 %v2793, %v2795
  %v2797 = vadd.f32 %v2793, %v2796
  %vm2798 = vweird.f32 %v2791
  %vm2799 = vweird.f32 %v2793
  %vm2800 = vmor %vm2798, %vm2799
  %v2801 = vsel %vm2800, %v2793, %v2797
  %v2802 = vand.u32 2147483647, %v2791
  %vm2803 = vcmp.eq.f32.partialorder %v2802, 8.507059e+37
  %v2804 = vand.u32 %v2791, 2147483648
  %v2805 = vor.u32 1.1754944e-38, %v2804
  %v2806 = vsel %vm2803, %v2805, %v2801
  %v2807 = vmul.f32 1.0, %v2806
  %v2808 = vrcp.pop %v2792
  %v2809 = vmul.f32 %v2792, %v2808
  %v2810 = vsub.f32 1.0, %v2809
  %v2811 = vmul.f32 %v2808, %v2810
  %v2812 = vadd.f32 %v2808, %v2811
  %vm2813 = vweird.f32 %v2792
  %vm2814 = vweird.f32 %v2808
  %vm2815 = vmor %vm2813, %vm2814
  %v2816 = vsel %vm2815, %v2808, %v2812
  %v2817 = vand.u32 2147483647, %v2792
  %vm2818 = vcmp.eq.f32.partialorder %v2817, 8.507059e+37
  %v2819 = vand.u32 %v2792, 2147483648
  %v2820 = vor.u32 1.1754944e-38, %v2819
  %v2821 = vsel %vm2818, %v2820, %v2816
  %v2822 = vmul.f32 1.0, %v2821
  %v2825 = vrot.slane %v2438, 7
  %v2826 = vrot.slane %v2439, 7
  %v2829 = vmul.f32 %v2767, %v2825
  %v2830 = vmul.f32 %v2782, %v2826
  %v2831 = vmul.f32 %v2729, %v2783
  %v2832 = vmul.f32 %v2744, %v2784
  %v2833 = vadd.f32 %v2829, %v2831
  %v2834 = vadd.f32 %v2830, %v2832
  %v2835 = vtanh.pop %v2833
  %v2836 = vtanh.pop %v2834
  %v2837 = vmul.f32 %v2807, %v2835
  %v2838 = vmul.f32 %v2822, %v2836
  %v2839 = vpack.c.bf16 %v2837, %v2837
  %v2840 = vpack.c.bf16 %v2838, %v2838
  %v2841 = vpack.c.bf16 %v2626, %v2626
  %2842 = vmatpush.bf16.msra.mxu0 %v652
  %2843 = vmatpush.bf16.msra.mxu0 %v648
  %2844 = vmatpush.bf16.msra.mxu0 %v644
  %2845 = vmatpush.bf16.msra.mxu0 %v640
  %2846 = vmatpush.bf16.msra.mxu0 %v636
  %2847 = vmatpush.bf16.msra.mxu0 %v632
  %2848 = vmatpush.bf16.msra.mxu0 %v628
  %2849 = vmatpush.bf16.msra.mxu0 %v624
  %2850 = vmatmul.bf16.gmra.mxu0 %v2841
  %v2851 = vpop.f32.mrf.mxu0
  %v2852 = vadd.f32 0.0, %v2851
  %v2853 = vpop.f32.mrf.mxu0
  %2854 = vdwg.mxu0
  %2855 = vmatpush.bf16.msra.mxu0 %v653
  %2856 = vmatpush.bf16.msra.mxu0 %v649
  %2857 = vmatpush.bf16.msra.mxu0 %v645
  %2858 = vmatpush.bf16.msra.mxu0 %v641
  %2859 = vmatpush.bf16.msra.mxu0 %v637
  %2860 = vmatpush.bf16.msra.mxu0 %v633
  %2861 = vmatpush.bf16.msra.mxu0 %v629
  %2862 = vmatpush.bf16.msra.mxu0 %v625
  %2863 = vmatmul.bf16.gmra.mxu0 %v2841
  %v2864 = vpop.f32.mrf.mxu0
  %v2865 = vadd.f32 0.0, %v2864
  %v2866 = vpop.f32.mrf.mxu0
  %2867 = vdwg.mxu0
  %2868 = vmatpush.bf16.msra.mxu0 %v654
  %2869 = vmatpush.bf16.msra.mxu0 %v650
  %2870 = vmatpush.bf16.msra.mxu0 %v646
  %2871 = vmatpush.bf16.msra.mxu0 %v642
  %2872 = vmatpush.bf16.msra.mxu0 %v638
  %2873 = vmatpush.bf16.msra.mxu0 %v634
  %2874 = vmatpush.bf16.msra.mxu0 %v630
  %2875 = vmatpush.bf16.msra.mxu0 %v626
  %2876 = vmatmul.bf16.gmra.mxu0 %v2841
  %v2877 = vpop.f32.mrf.mxu0
  %v2878 = vadd.f32 0.0, %v2877
  %v2879 = vpop.f32.mrf.mxu0
  %2880 = vdwg.mxu0
  %2881 = vmatpush.bf16.msra.mxu0 %v655
  %2882 = vmatpush.bf16.msra.mxu0 %v651
  %2883 = vmatpush.bf16.msra.mxu0 %v647
  %2884 = vmatpush.bf16.msra.mxu0 %v643
  %2885 = vmatpush.bf16.msra.mxu0 %v639
  %2886 = vmatpush.bf16.msra.mxu0 %v635
  %2887 = vmatpush.bf16.msra.mxu0 %v631
  %2888 = vmatpush.bf16.msra.mxu0 %v627
  %2889 = vmatmul.bf16.gmra.mxu0 %v2841
  %v2890 = vpop.f32.mrf.mxu0
  %v2891 = vadd.f32 0.0, %v2890
  %v2892 = vpop.f32.mrf.mxu0
  %2893 = vdwg.mxu0
  %v2896 = vunpack.c.l.b16 %v2839
  %v2897 = vunpack.c.l.b16 %v2840
  %v2898 = vrot.slane %v2896, 5
  %v2899 = vrot.slane %v2897, 4
  %v2900 = vsel %vm745, %v2899, %v2898
  %v2901 = vpack.c.b16 %v2900, %v2900
  %2903 = vmatpush.bf16.msra.mxu0 %v873
  %2904 = vmatpush.bf16.msra.mxu0 %v869
  %2905 = vmatpush.bf16.msra.mxu0 %v865
  %2906 = vmatpush.bf16.msra.mxu0 %v861
  %2907 = vmatpush.bf16.msra.mxu0 %v857
  %2908 = vmatpush.bf16.msra.mxu0 %v853
  %2909 = vmatpush.bf16.msra.mxu0 %v849
  %2910 = vmatpush.bf16.msra.mxu0 %v845
  %2911 = vmatmul.bf16.gmra.mxu0 %v2901
  %v2912 = vpop.f32.mrf.mxu0
  %v2913 = vadd.f32 %v2852, %v2912
  %v2914 = vpop.f32.mrf.mxu0
  %2915 = vdwg.mxu0
  %2916 = vmatpush.bf16.msra.mxu0 %v874
  %2917 = vmatpush.bf16.msra.mxu0 %v870
  %2918 = vmatpush.bf16.msra.mxu0 %v866
  %2919 = vmatpush.bf16.msra.mxu0 %v862
  %2920 = vmatpush.bf16.msra.mxu0 %v858
  %2921 = vmatpush.bf16.msra.mxu0 %v854
  %2922 = vmatpush.bf16.msra.mxu0 %v850
  %2923 = vmatpush.bf16.msra.mxu0 %v846
  %2924 = vmatmul.bf16.gmra.mxu0 %v2901
  %v2925 = vpop.f32.mrf.mxu0
  %v2926 = vadd.f32 %v2865, %v2925
  %v2927 = vpop.f32.mrf.mxu0
  %2928 = vdwg.mxu0
  %2929 = vmatpush.bf16.msra.mxu0 %v875
  %2930 = vmatpush.bf16.msra.mxu0 %v871
  %2931 = vmatpush.bf16.msra.mxu0 %v867
  %2932 = vmatpush.bf16.msra.mxu0 %v863
  %2933 = vmatpush.bf16.msra.mxu0 %v859
  %2934 = vmatpush.bf16.msra.mxu0 %v855
  %2935 = vmatpush.bf16.msra.mxu0 %v851
  %2936 = vmatpush.bf16.msra.mxu0 %v847
  %2937 = vmatmul.bf16.gmra.mxu0 %v2901
  %v2938 = vpop.f32.mrf.mxu0
  %v2939 = vadd.f32 %v2878, %v2938
  %v2940 = vpop.f32.mrf.mxu0
  %2941 = vdwg.mxu0
  %2942 = vmatpush.bf16.msra.mxu0 %v876
  %2943 = vmatpush.bf16.msra.mxu0 %v872
  %2944 = vmatpush.bf16.msra.mxu0 %v868
  %2945 = vmatpush.bf16.msra.mxu0 %v864
  %2946 = vmatpush.bf16.msra.mxu0 %v860
  %2947 = vmatpush.bf16.msra.mxu0 %v856
  %2948 = vmatpush.bf16.msra.mxu0 %v852
  %2949 = vmatpush.bf16.msra.mxu0 %v848
  %2950 = vmatmul.bf16.gmra.mxu0 %v2901
  %v2951 = vpop.f32.mrf.mxu0
  %v2952 = vadd.f32 %v2891, %v2951
  %v2953 = vpop.f32.mrf.mxu0
  %2954 = vdwg.mxu0
  %v2955 = vadd.f32 %v2913, %v42
  %v2956 = vadd.f32 %v2926, %v43
  %v2957 = vadd.f32 %v2939, %v44
  %v2958 = vadd.f32 %v2952, %v45
  %v2959 = vxor.u32 %v2955, 2147483648
  %v2960 = vmul.f32 %v2959, 1.442695
  %v2961 = vpow.pop %v2960
  %v2962 = vadd.f32 %v2961, 1.0
  %v2963 = vrcp.pop %v2962
  %v2964 = vmul.f32 %v2962, %v2963
  %v2965 = vsub.f32 1.0, %v2964
  %v2966 = vmul.f32 %v2963, %v2965
  %v2967 = vadd.f32 %v2963, %v2966
  %vm2968 = vweird.f32 %v2962
  %vm2969 = vweird.f32 %v2963
  %vm2970 = vmor %vm2968, %vm2969
  %v2971 = vsel %vm2970, %v2963, %v2967
  %v2972 = vand.u32 2147483647, %v2962
  %vm2973 = vcmp.eq.f32.partialorder %v2972, 8.507059e+37
  %v2974 = vand.u32 %v2962, 2147483648
  %v2975 = vor.u32 1.1754944e-38, %v2974
  %v2976 = vsel %vm2973, %v2975, %v2971
  %v2977 = vmul.f32 1.0, %v2976
  %v2978 = vxor.u32 %v2956, 2147483648
  %v2979 = vmul.f32 %v2978, 1.442695
  %v2980 = vpow.pop %v2979
  %v2981 = vadd.f32 %v2980, 1.0
  %v2982 = vrcp.pop %v2981
  %v2983 = vmul.f32 %v2981, %v2982
  %v2984 = vsub.f32 1.0, %v2983
  %v2985 = vmul.f32 %v2982, %v2984
  %v2986 = vadd.f32 %v2982, %v2985
  %vm2987 = vweird.f32 %v2981
  %vm2988 = vweird.f32 %v2982
  %vm2989 = vmor %vm2987, %vm2988
  %v2990 = vsel %vm2989, %v2982, %v2986
  %v2991 = vand.u32 2147483647, %v2981
  %vm2992 = vcmp.eq.f32.partialorder %v2991, 8.507059e+37
  %v2993 = vand.u32 %v2981, 2147483648
  %v2994 = vor.u32 1.1754944e-38, %v2993
  %v2995 = vsel %vm2992, %v2994, %v2990
  %v2996 = vmul.f32 1.0, %v2995
  %v2997 = vtanh.pop %v2957
  %v2998 = vxor.u32 %v2958, 2147483648
  %v2999 = vmul.f32 %v2998, 1.442695
  %v3000 = vpow.pop %v2999
  %v3001 = vadd.f32 %v3000, 1.0
  %v3002 = vrcp.pop %v3001
  %v3003 = vmul.f32 %v3001, %v3002
  %v3004 = vsub.f32 1.0, %v3003
  %v3005 = vmul.f32 %v3002, %v3004
  %v3006 = vadd.f32 %v3002, %v3005
  %vm3007 = vweird.f32 %v3001
  %vm3008 = vweird.f32 %v3002
  %vm3009 = vmor %vm3007, %vm3008
  %v3010 = vsel %vm3009, %v3002, %v3006
  %v3011 = vand.u32 2147483647, %v3001
  %vm3012 = vcmp.eq.f32.partialorder %v3011, 8.507059e+37
  %v3013 = vand.u32 %v3001, 2147483648
  %v3014 = vor.u32 1.1754944e-38, %v3013
  %v3015 = vsel %vm3012, %v3014, %v3010
  %v3016 = vmul.f32 1.0, %v3015
  %v3017 = vmul.f32 %v2996, %v2624
  %v3018 = vmul.f32 %v2977, %v2997
  %v3019 = vadd.f32 %v3017, %v3018
  %v3020 = vtanh.pop %v3019
  %v3021 = vmul.f32 %v3016, %v3020
  %v3022 = vld [vmem:[%s0] sm:$0x88]
  %v3023 = vld [vmem:[%s0 + $0x8] sm:$0x88]
  %v3024 = vld [vmem:[%s0 + $0x10] sm:$0x88]
  %v3025 = vld [vmem:[%s0 + $0x18] sm:$0x88]
  %v3026 = vunpack.c.l.bf16 %v3022
  %v3027 = vunpack.c.h.bf16 %v3022
  %v3028 = vunpack.c.l.bf16 %v3023
  %v3029 = vunpack.c.h.bf16 %v3023
  %v3030 = vunpack.c.l.bf16 %v3024
  %v3031 = vunpack.c.h.bf16 %v3024
  %v3032 = vunpack.c.l.bf16 %v3025
  %v3033 = vunpack.c.h.bf16 %v3025
  %3034 = vmatpush.bf16.msra.mxu0 %v219
  %3035 = vmatpush.bf16.msra.mxu0 %v215
  %3036 = vmatpush.bf16.msra.mxu0 %v211
  %3037 = vmatpush.bf16.msra.mxu0 %v207
  %3038 = vmatpush.bf16.msra.mxu0 %v203
  %3039 = vmatpush.bf16.msra.mxu0 %v199
  %3040 = vmatpush.bf16.msra.mxu0 %v195
  %3041 = vmatpush.bf16.msra.mxu0 %v191
  %3042 = vmatmul.bf16.gmra.mxu0 %v2901
  %v3043 = vpop.f32.mrf.mxu0
  %v3044 = vadd.f32 0.0, %v3043
  %v3045 = vpop.f32.mrf.mxu0
  %3046 = vdwg.mxu0
  %3047 = vmatpush.bf16.msra.mxu0 %v220
  %3048 = vmatpush.bf16.msra.mxu0 %v216
  %3049 = vmatpush.bf16.msra.mxu0 %v212
  %3050 = vmatpush.bf16.msra.mxu0 %v208
  %3051 = vmatpush.bf16.msra.mxu0 %v204
  %3052 = vmatpush.bf16.msra.mxu0 %v200
  %3053 = vmatpush.bf16.msra.mxu0 %v196
  %3054 = vmatpush.bf16.msra.mxu0 %v192
  %3055 = vmatmul.bf16.gmra.mxu0 %v2901
  %v3056 = vpop.f32.mrf.mxu0
  %v3057 = vadd.f32 0.0, %v3056
  %v3058 = vpop.f32.mrf.mxu0
  %3059 = vdwg.mxu0
  %3060 = vmatpush.bf16.msra.mxu0 %v221
  %3061 = vmatpush.bf16.msra.mxu0 %v217
  %3062 = vmatpush.bf16.msra.mxu0 %v213
  %3063 = vmatpush.bf16.msra.mxu0 %v209
  %3064 = vmatpush.bf16.msra.mxu0 %v205
  %3065 = vmatpush.bf16.msra.mxu0 %v201
  %3066 = vmatpush.bf16.msra.mxu0 %v197
  %3067 = vmatpush.bf16.msra.mxu0 %v193
  %3068 = vmatmul.bf16.gmra.mxu0 %v2901
  %v3069 = vpop.f32.mrf.mxu0
  %v3070 = vadd.f32 0.0, %v3069
  %v3071 = vpop.f32.mrf.mxu0
  %3072 = vdwg.mxu0
  %3073 = vmatpush.bf16.msra.mxu0 %v222
  %3074 = vmatpush.bf16.msra.mxu0 %v218
  %3075 = vmatpush.bf16.msra.mxu0 %v214
  %3076 = vmatpush.bf16.msra.mxu0 %v210
  %3077 = vmatpush.bf16.msra.mxu0 %v206
  %3078 = vmatpush.bf16.msra.mxu0 %v202
  %3079 = vmatpush.bf16.msra.mxu0 %v198
  %3080 = vmatpush.bf16.msra.mxu0 %v194
  %3081 = vmatmul.bf16.gmra.mxu0 %v2901
  %v3082 = vpop.f32.mrf.mxu0
  %v3083 = vadd.f32 0.0, %v3082
  %v3084 = vpop.f32.mrf.mxu0
  %3085 = vdwg.mxu0
  %v3090 = vrot.slane %v3044, 2
  %v3091 = vrot.slane %v3057, 2
  %v3092 = vrot.slane %v3070, 2
  %v3093 = vrot.slane %v3083, 2
  %v3094 = vrot.slane %v3044, 3
  %v3095 = vrot.slane %v3057, 3
  %v3096 = vrot.slane %v3070, 3
  %v3097 = vrot.slane %v3083, 3
  %v3106 = vadd.f32 %v3026, %v3090
  %v3107 = vadd.f32 %v3027, %v3091
  %v3108 = vadd.f32 %v3028, %v3092
  %v3109 = vadd.f32 %v3029, %v3093
  %v3110 = vadd.f32 %v3030, %v3094
  %v3111 = vadd.f32 %v3031, %v3095
  %v3112 = vadd.f32 %v3032, %v3096
  %v3113 = vadd.f32 %v3033, %v3097
  %v3114 = vxor.u32 %v3106, 2147483648
  %v3115 = vxor.u32 %v3110, 2147483648
  %v3116 = vmul.f32 %v3114, 1.442695
  %v3117 = vpow.pop %v3116
  %v3118 = vmul.f32 %v3115, 1.442695
  %v3119 = vpow.pop %v3118
  %v3120 = vadd.f32 %v3117, 1.0
  %v3121 = vadd.f32 %v3119, 1.0
  %v3122 = vrcp.pop %v3120
  %v3123 = vmul.f32 %v3120, %v3122
  %v3124 = vsub.f32 1.0, %v3123
  %v3125 = vmul.f32 %v3122, %v3124
  %v3126 = vadd.f32 %v3122, %v3125
  %vm3127 = vweird.f32 %v3120
  %vm3128 = vweird.f32 %v3122
  %vm3129 = vmor %vm3127, %vm3128
  %v3130 = vsel %vm3129, %v3122, %v3126
  %v3131 = vand.u32 2147483647, %v3120
  %vm3132 = vcmp.eq.f32.partialorder %v3131, 8.507059e+37
  %v3133 = vand.u32 %v3120, 2147483648
  %v3134 = vor.u32 1.1754944e-38, %v3133
  %v3135 = vsel %vm3132, %v3134, %v3130
  %v3136 = vmul.f32 1.0, %v3135
  %v3137 = vrcp.pop %v3121
  %v3138 = vmul.f32 %v3121, %v3137
  %v3139 = vsub.f32 1.0, %v3138
  %v3140 = vmul.f32 %v3137, %v3139
  %v3141 = vadd.f32 %v3137, %v3140
  %vm3142 = vweird.f32 %v3121
  %vm3143 = vweird.f32 %v3137
  %vm3144 = vmor %vm3142, %vm3143
  %v3145 = vsel %vm3144, %v3137, %v3141
  %v3146 = vand.u32 2147483647, %v3121
  %vm3147 = vcmp.eq.f32.partialorder %v3146, 8.507059e+37
  %v3148 = vand.u32 %v3121, 2147483648
  %v3149 = vor.u32 1.1754944e-38, %v3148
  %v3150 = vsel %vm3147, %v3149, %v3145
  %v3151 = vmul.f32 1.0, %v3150
  %v3152 = vxor.u32 %v3107, 2147483648
  %v3153 = vxor.u32 %v3111, 2147483648
  %v3154 = vmul.f32 %v3152, 1.442695
  %v3155 = vpow.pop %v3154
  %v3156 = vmul.f32 %v3153, 1.442695
  %v3157 = vpow.pop %v3156
  %v3158 = vadd.f32 %v3155, 1.0
  %v3159 = vadd.f32 %v3157, 1.0
  %v3160 = vrcp.pop %v3158
  %v3161 = vmul.f32 %v3158, %v3160
  %v3162 = vsub.f32 1.0, %v3161
  %v3163 = vmul.f32 %v3160, %v3162
  %v3164 = vadd.f32 %v3160, %v3163
  %vm3165 = vweird.f32 %v3158
  %vm3166 = vweird.f32 %v3160
  %vm3167 = vmor %vm3165, %vm3166
  %v3168 = vsel %vm3167, %v3160, %v3164
  %v3169 = vand.u32 2147483647, %v3158
  %vm3170 = vcmp.eq.f32.partialorder %v3169, 8.507059e+37
  %v3171 = vand.u32 %v3158, 2147483648
  %v3172 = vor.u32 1.1754944e-38, %v3171
  %v3173 = vsel %vm3170, %v3172, %v3168
  %v3174 = vmul.f32 1.0, %v3173
  %v3175 = vrcp.pop %v3159
  %v3176 = vmul.f32 %v3159, %v3175
  %v3177 = vsub.f32 1.0, %v3176
  %v3178 = vmul.f32 %v3175, %v3177
  %v3179 = vadd.f32 %v3175, %v3178
  %vm3180 = vweird.f32 %v3159
  %vm3181 = vweird.f32 %v3175
  %vm3182 = vmor %vm3180, %vm3181
  %v3183 = vsel %vm3182, %v3175, %v3179
  %v3184 = vand.u32 2147483647, %v3159
  %vm3185 = vcmp.eq.f32.partialorder %v3184, 8.507059e+37
  %v3186 = vand.u32 %v3159, 2147483648
  %v3187 = vor.u32 1.1754944e-38, %v3186
  %v3188 = vsel %vm3185, %v3187, %v3183
  %v3189 = vmul.f32 1.0, %v3188
  %v3190 = vtanh.pop %v3108
  %v3191 = vtanh.pop %v3112
  %v3192 = vxor.u32 %v3109, 2147483648
  %v3193 = vxor.u32 %v3113, 2147483648
  %v3194 = vmul.f32 %v3192, 1.442695
  %v3195 = vpow.pop %v3194
  %v3196 = vmul.f32 %v3193, 1.442695
  %v3197 = vpow.pop %v3196
  %v3198 = vadd.f32 %v3195, 1.0
  %v3199 = vadd.f32 %v3197, 1.0
  %v3200 = vrcp.pop %v3198
  %v3201 = vmul.f32 %v3198, %v3200
  %v3202 = vsub.f32 1.0, %v3201
  %v3203 = vmul.f32 %v3200, %v3202
  %v3204 = vadd.f32 %v3200, %v3203
  %vm3205 = vweird.f32 %v3198
  %vm3206 = vweird.f32 %v3200
  %vm3207 = vmor %vm3205, %vm3206
  %v3208 = vsel %vm3207, %v3200, %v3204
  %v3209 = vand.u32 2147483647, %v3198
  %vm3210 = vcmp.eq.f32.partialorder %v3209, 8.507059e+37
  %v3211 = vand.u32 %v3198, 2147483648
  %v3212 = vor.u32 1.1754944e-38, %v3211
  %v3213 = vsel %vm3210, %v3212, %v3208
  %v3214 = vmul.f32 1.0, %v3213
  %v3215 = vrcp.pop %v3199
  %v3216 = vmul.f32 %v3199, %v3215
  %v3217 = vsub.f32 1.0, %v3216
  %v3218 = vmul.f32 %v3215, %v3217
  %v3219 = vadd.f32 %v3215, %v3218
  %vm3220 = vweird.f32 %v3199
  %vm3221 = vweird.f32 %v3215
  %vm3222 = vmor %vm3220, %vm3221
  %v3223 = vsel %vm3222, %v3215, %v3219
  %v3224 = vand.u32 2147483647, %v3199
  %vm3225 = vcmp.eq.f32.partialorder %v3224, 8.507059e+37
  %v3226 = vand.u32 %v3199, 2147483648
  %v3227 = vor.u32 1.1754944e-38, %v3226
  %v3228 = vsel %vm3225, %v3227, %v3223
  %v3229 = vmul.f32 1.0, %v3228
  %v3232 = vrot.slane %v2833, 7
  %v3233 = vrot.slane %v2834, 7
  %v3236 = vmul.f32 %v3174, %v3232
  %v3237 = vmul.f32 %v3189, %v3233
  %v3238 = vmul.f32 %v3136, %v3190
  %v3239 = vmul.f32 %v3151, %v3191
  %v3240 = vadd.f32 %v3236, %v3238
  %v3241 = vadd.f32 %v3237, %v3239
  %v3242 = vtanh.pop %v3240
  %v3243 = vtanh.pop %v3241
  %v3244 = vmul.f32 %v3214, %v3242
  %v3245 = vmul.f32 %v3229, %v3243
  %v3246 = vpack.c.bf16 %v3244, %v3244
  %v3247 = vpack.c.bf16 %v3245, %v3245
  %v3248 = vpack.c.bf16 %v3021, %v3021
  %3249 = vmatpush.bf16.msra.mxu0 %v652
  %3250 = vmatpush.bf16.msra.mxu0 %v648
  %3251 = vmatpush.bf16.msra.mxu0 %v644
  %3252 = vmatpush.bf16.msra.mxu0 %v640
  %3253 = vmatpush.bf16.msra.mxu0 %v636
  %3254 = vmatpush.bf16.msra.mxu0 %v632
  %3255 = vmatpush.bf16.msra.mxu0 %v628
  %3256 = vmatpush.bf16.msra.mxu0 %v624
  %3257 = vmatmul.bf16.gmra.mxu0 %v3248
  %v3258 = vpop.f32.mrf.mxu0
  %v3259 = vadd.f32 0.0, %v3258
  %v3260 = vpop.f32.mrf.mxu0
  %3261 = vdwg.mxu0
  %3262 = vmatpush.bf16.msra.mxu0 %v653
  %3263 = vmatpush.bf16.msra.mxu0 %v649
  %3264 = vmatpush.bf16.msra.mxu0 %v645
  %3265 = vmatpush.bf16.msra.mxu0 %v641
  %3266 = vmatpush.bf16.msra.mxu0 %v637
  %3267 = vmatpush.bf16.msra.mxu0 %v633
  %3268 = vmatpush.bf16.msra.mxu0 %v629
  %3269 = vmatpush.bf16.msra.mxu0 %v625
  %3270 = vmatmul.bf16.gmra.mxu0 %v3248
  %v3271 = vpop.f32.mrf.mxu0
  %v3272 = vadd.f32 0.0, %v3271
  %v3273 = vpop.f32.mrf.mxu0
  %3274 = vdwg.mxu0
  %3275 = vmatpush.bf16.msra.mxu0 %v654
  %3276 = vmatpush.bf16.msra.mxu0 %v650
  %3277 = vmatpush.bf16.msra.mxu0 %v646
  %3278 = vmatpush.bf16.msra.mxu0 %v642
  %3279 = vmatpush.bf16.msra.mxu0 %v638
  %3280 = vmatpush.bf16.msra.mxu0 %v634
  %3281 = vmatpush.bf16.msra.mxu0 %v630
  %3282 = vmatpush.bf16.msra.mxu0 %v626
  %3283 = vmatmul.bf16.gmra.mxu0 %v3248
  %v3284 = vpop.f32.mrf.mxu0
  %v3285 = vadd.f32 0.0, %v3284
  %v3286 = vpop.f32.mrf.mxu0
  %3287 = vdwg.mxu0
  %3288 = vmatpush.bf16.msra.mxu0 %v655
  %3289 = vmatpush.bf16.msra.mxu0 %v651
  %3290 = vmatpush.bf16.msra.mxu0 %v647
  %3291 = vmatpush.bf16.msra.mxu0 %v643
  %3292 = vmatpush.bf16.msra.mxu0 %v639
  %3293 = vmatpush.bf16.msra.mxu0 %v635
  %3294 = vmatpush.bf16.msra.mxu0 %v631
  %3295 = vmatpush.bf16.msra.mxu0 %v627
  %3296 = vmatmul.bf16.gmra.mxu0 %v3248
  %v3297 = vpop.f32.mrf.mxu0
  %v3298 = vadd.f32 0.0, %v3297
  %v3299 = vpop.f32.mrf.mxu0
  %3300 = vdwg.mxu0
  %v3303 = vunpack.c.l.b16 %v3246
  %v3304 = vunpack.c.l.b16 %v3247
  %v3305 = vrot.slane %v3303, 6
  %v3306 = vrot.slane %v3304, 5
  %v3307 = vsel %vm745, %v3306, %v3305
  %v3308 = vpack.c.b16 %v3307, %v3307
  %3310 = vmatpush.bf16.msra.mxu0 %v873
  %3311 = vmatpush.bf16.msra.mxu0 %v869
  %3312 = vmatpush.bf16.msra.mxu0 %v865
  %3313 = vmatpush.bf16.msra.mxu0 %v861
  %3314 = vmatpush.bf16.msra.mxu0 %v857
  %3315 = vmatpush.bf16.msra.mxu0 %v853
  %3316 = vmatpush.bf16.msra.mxu0 %v849
  %3317 = vmatpush.bf16.msra.mxu0 %v845
  %3318 = vmatmul.bf16.gmra.mxu0 %v3308
  %v3319 = vpop.f32.mrf.mxu0
  %v3320 = vadd.f32 %v3259, %v3319
  %v3321 = vpop.f32.mrf.mxu0
  %3322 = vdwg.mxu0
  %3323 = vmatpush.bf16.msra.mxu0 %v874
  %3324 = vmatpush.bf16.msra.mxu0 %v870
  %3325 = vmatpush.bf16.msra.mxu0 %v866
  %3326 = vmatpush.bf16.msra.mxu0 %v862
  %3327 = vmatpush.bf16.msra.mxu0 %v858
  %3328 = vmatpush.bf16.msra.mxu0 %v854
  %3329 = vmatpush.bf16.msra.mxu0 %v850
  %3330 = vmatpush.bf16.msra.mxu0 %v846
  %3331 = vmatmul.bf16.gmra.mxu0 %v3308
  %v3332 = vpop.f32.mrf.mxu0
  %v3333 = vadd.f32 %v3272, %v3332
  %v3334 = vpop.f32.mrf.mxu0
  %3335 = vdwg.mxu0
  %3336 = vmatpush.bf16.msra.mxu0 %v875
  %3337 = vmatpush.bf16.msra.mxu0 %v871
  %3338 = vmatpush.bf16.msra.mxu0 %v867
  %3339 = vmatpush.bf16.msra.mxu0 %v863
  %3340 = vmatpush.bf16.msra.mxu0 %v859
  %3341 = vmatpush.bf16.msra.mxu0 %v855
  %3342 = vmatpush.bf16.msra.mxu0 %v851
  %3343 = vmatpush.bf16.msra.mxu0 %v847
  %3344 = vmatmul.bf16.gmra.mxu0 %v3308
  %v3345 = vpop.f32.mrf.mxu0
  %v3346 = vadd.f32 %v3285, %v3345
  %v3347 = vpop.f32.mrf.mxu0
  %3348 = vdwg.mxu0
  %3349 = vmatpush.bf16.msra.mxu0 %v876
  %3350 = vmatpush.bf16.msra.mxu0 %v872
  %3351 = vmatpush.bf16.msra.mxu0 %v868
  %3352 = vmatpush.bf16.msra.mxu0 %v864
  %3353 = vmatpush.bf16.msra.mxu0 %v860
  %3354 = vmatpush.bf16.msra.mxu0 %v856
  %3355 = vmatpush.bf16.msra.mxu0 %v852
  %3356 = vmatpush.bf16.msra.mxu0 %v848
  %3357 = vmatmul.bf16.gmra.mxu0 %v3308
  %v3358 = vpop.f32.mrf.mxu0
  %v3359 = vadd.f32 %v3298, %v3358
  %v3360 = vpop.f32.mrf.mxu0
  %3361 = vdwg.mxu0
  %v3362 = vadd.f32 %v3320, %v42
  %v3363 = vadd.f32 %v3333, %v43
  %v3364 = vadd.f32 %v3346, %v44
  %v3365 = vadd.f32 %v3359, %v45
  %v3366 = vxor.u32 %v3362, 2147483648
  %v3367 = vmul.f32 %v3366, 1.442695
  %v3368 = vpow.pop %v3367
  %v3369 = vadd.f32 %v3368, 1.0
  %v3370 = vrcp.pop %v3369
  %v3371 = vmul.f32 %v3369, %v3370
  %v3372 = vsub.f32 1.0, %v3371
  %v3373 = vmul.f32 %v3370, %v3372
  %v3374 = vadd.f32 %v3370, %v3373
  %vm3375 = vweird.f32 %v3369
  %vm3376 = vweird.f32 %v3370
  %vm3377 = vmor %vm3375, %vm3376
  %v3378 = vsel %vm3377, %v3370, %v3374
  %v3379 = vand.u32 2147483647, %v3369
  %vm3380 = vcmp.eq.f32.partialorder %v3379, 8.507059e+37
  %v3381 = vand.u32 %v3369, 2147483648
  %v3382 = vor.u32 1.1754944e-38, %v3381
  %v3383 = vsel %vm3380, %v3382, %v3378
  %v3384 = vmul.f32 1.0, %v3383
  %v3385 = vxor.u32 %v3363, 2147483648
  %v3386 = vmul.f32 %v3385, 1.442695
  %v3387 = vpow.pop %v3386
  %v3388 = vadd.f32 %v3387, 1.0
  %v3389 = vrcp.pop %v3388
  %v3390 = vmul.f32 %v3388, %v3389
  %v3391 = vsub.f32 1.0, %v3390
  %v3392 = vmul.f32 %v3389, %v3391
  %v3393 = vadd.f32 %v3389, %v3392
  %vm3394 = vweird.f32 %v3388
  %vm3395 = vweird.f32 %v3389
  %vm3396 = vmor %vm3394, %vm3395
  %v3397 = vsel %vm3396, %v3389, %v3393
  %v3398 = vand.u32 2147483647, %v3388
  %vm3399 = vcmp.eq.f32.partialorder %v3398, 8.507059e+37
  %v3400 = vand.u32 %v3388, 2147483648
  %v3401 = vor.u32 1.1754944e-38, %v3400
  %v3402 = vsel %vm3399, %v3401, %v3397
  %v3403 = vmul.f32 1.0, %v3402
  %v3404 = vtanh.pop %v3364
  %v3405 = vxor.u32 %v3365, 2147483648
  %v3406 = vmul.f32 %v3405, 1.442695
  %v3407 = vpow.pop %v3406
  %v3408 = vadd.f32 %v3407, 1.0
  %v3409 = vrcp.pop %v3408
  %v3410 = vmul.f32 %v3408, %v3409
  %v3411 = vsub.f32 1.0, %v3410
  %v3412 = vmul.f32 %v3409, %v3411
  %v3413 = vadd.f32 %v3409, %v3412
  %vm3414 = vweird.f32 %v3408
  %vm3415 = vweird.f32 %v3409
  %vm3416 = vmor %vm3414, %vm3415
  %v3417 = vsel %vm3416, %v3409, %v3413
  %v3418 = vand.u32 2147483647, %v3408
  %vm3419 = vcmp.eq.f32.partialorder %v3418, 8.507059e+37
  %v3420 = vand.u32 %v3408, 2147483648
  %v3421 = vor.u32 1.1754944e-38, %v3420
  %v3422 = vsel %vm3419, %v3421, %v3417
  %v3423 = vmul.f32 1.0, %v3422
  %v3424 = vmul.f32 %v3403, %v3019
  %v3425 = vmul.f32 %v3384, %v3404
  %v3426 = vadd.f32 %v3424, %v3425
  %v3427 = vtanh.pop %v3426
  %v3428 = vmul.f32 %v3423, %v3427
  %3429 = vmatpush.bf16.msra.mxu0 %v219
  %3430 = vmatpush.bf16.msra.mxu0 %v215
  %3431 = vmatpush.bf16.msra.mxu0 %v211
  %3432 = vmatpush.bf16.msra.mxu0 %v207
  %3433 = vmatpush.bf16.msra.mxu0 %v203
  %3434 = vmatpush.bf16.msra.mxu0 %v199
  %3435 = vmatpush.bf16.msra.mxu0 %v195
  %3436 = vmatpush.bf16.msra.mxu0 %v191
  %3437 = vmatmul.bf16.gmra.mxu0 %v3308
  %v3438 = vpop.f32.mrf.mxu0
  %v3439 = vadd.f32 0.0, %v3438
  %v3440 = vpop.f32.mrf.mxu0
  %3441 = vdwg.mxu0
  %3442 = vmatpush.bf16.msra.mxu0 %v220
  %3443 = vmatpush.bf16.msra.mxu0 %v216
  %3444 = vmatpush.bf16.msra.mxu0 %v212
  %3445 = vmatpush.bf16.msra.mxu0 %v208
  %3446 = vmatpush.bf16.msra.mxu0 %v204
  %3447 = vmatpush.bf16.msra.mxu0 %v200
  %3448 = vmatpush.bf16.msra.mxu0 %v196
  %3449 = vmatpush.bf16.msra.mxu0 %v192
  %3450 = vmatmul.bf16.gmra.mxu0 %v3308
  %v3451 = vpop.f32.mrf.mxu0
  %v3452 = vadd.f32 0.0, %v3451
  %v3453 = vpop.f32.mrf.mxu0
  %3454 = vdwg.mxu0
  %3455 = vmatpush.bf16.msra.mxu0 %v221
  %3456 = vmatpush.bf16.msra.mxu0 %v217
  %3457 = vmatpush.bf16.msra.mxu0 %v213
  %3458 = vmatpush.bf16.msra.mxu0 %v209
  %3459 = vmatpush.bf16.msra.mxu0 %v205
  %3460 = vmatpush.bf16.msra.mxu0 %v201
  %3461 = vmatpush.bf16.msra.mxu0 %v197
  %3462 = vmatpush.bf16.msra.mxu0 %v193
  %3463 = vmatmul.bf16.gmra.mxu0 %v3308
  %v3464 = vpop.f32.mrf.mxu0
  %v3465 = vadd.f32 0.0, %v3464
  %v3466 = vpop.f32.mrf.mxu0
  %3467 = vdwg.mxu0
  %3468 = vmatpush.bf16.msra.mxu0 %v222
  %3469 = vmatpush.bf16.msra.mxu0 %v218
  %3470 = vmatpush.bf16.msra.mxu0 %v214
  %3471 = vmatpush.bf16.msra.mxu0 %v210
  %3472 = vmatpush.bf16.msra.mxu0 %v206
  %3473 = vmatpush.bf16.msra.mxu0 %v202
  %3474 = vmatpush.bf16.msra.mxu0 %v198
  %3475 = vmatpush.bf16.msra.mxu0 %v194
  %3476 = vmatmul.bf16.gmra.mxu0 %v3308
  %v3477 = vpop.f32.mrf.mxu0
  %v3478 = vadd.f32 0.0, %v3477
  %v3479 = vpop.f32.mrf.mxu0
  %3480 = vdwg.mxu0
  %v3485 = vrot.slane %v3439, 1
  %v3486 = vrot.slane %v3452, 1
  %v3487 = vrot.slane %v3465, 1
  %v3488 = vrot.slane %v3478, 1
  %v3489 = vrot.slane %v3439, 2
  %v3490 = vrot.slane %v3452, 2
  %v3491 = vrot.slane %v3465, 2
  %v3492 = vrot.slane %v3478, 2
  %v3501 = vadd.f32 %v3026, %v3485
  %v3502 = vadd.f32 %v3027, %v3486
  %v3503 = vadd.f32 %v3028, %v3487
  %v3504 = vadd.f32 %v3029, %v3488
  %v3505 = vadd.f32 %v3030, %v3489
  %v3506 = vadd.f32 %v3031, %v3490
  %v3507 = vadd.f32 %v3032, %v3491
  %v3508 = vadd.f32 %v3033, %v3492
  %v3509 = vxor.u32 %v3501, 2147483648
  %v3510 = vxor.u32 %v3505, 2147483648
  %v3511 = vmul.f32 %v3509, 1.442695
  %v3512 = vpow.pop %v3511
  %v3513 = vmul.f32 %v3510, 1.442695
  %v3514 = vpow.pop %v3513
  %v3515 = vadd.f32 %v3512, 1.0
  %v3516 = vadd.f32 %v3514, 1.0
  %v3517 = vrcp.pop %v3515
  %v3518 = vmul.f32 %v3515, %v3517
  %v3519 = vsub.f32 1.0, %v3518
  %v3520 = vmul.f32 %v3517, %v3519
  %v3521 = vadd.f32 %v3517, %v3520
  %vm3522 = vweird.f32 %v3515
  %vm3523 = vweird.f32 %v3517
  %vm3524 = vmor %vm3522, %vm3523
  %v3525 = vsel %vm3524, %v3517, %v3521
  %v3526 = vand.u32 2147483647, %v3515
  %vm3527 = vcmp.eq.f32.partialorder %v3526, 8.507059e+37
  %v3528 = vand.u32 %v3515, 2147483648
  %v3529 = vor.u32 1.1754944e-38, %v3528
  %v3530 = vsel %vm3527, %v3529, %v3525
  %v3531 = vmul.f32 1.0, %v3530
  %v3532 = vrcp.pop %v3516
  %v3533 = vmul.f32 %v3516, %v3532
  %v3534 = vsub.f32 1.0, %v3533
  %v3535 = vmul.f32 %v3532, %v3534
  %v3536 = vadd.f32 %v3532, %v3535
  %vm3537 = vweird.f32 %v3516
  %vm3538 = vweird.f32 %v3532
  %vm3539 = vmor %vm3537, %vm3538
  %v3540 = vsel %vm3539, %v3532, %v3536
  %v3541 = vand.u32 2147483647, %v3516
  %vm3542 = vcmp.eq.f32.partialorder %v3541, 8.507059e+37
  %v3543 = vand.u32 %v3516, 2147483648
  %v3544 = vor.u32 1.1754944e-38, %v3543
  %v3545 = vsel %vm3542, %v3544, %v3540
  %v3546 = vmul.f32 1.0, %v3545
  %v3547 = vxor.u32 %v3502, 2147483648
  %v3548 = vxor.u32 %v3506, 2147483648
  %v3549 = vmul.f32 %v3547, 1.442695
  %v3550 = vpow.pop %v3549
  %v3551 = vmul.f32 %v3548, 1.442695
  %v3552 = vpow.pop %v3551
  %v3553 = vadd.f32 %v3550, 1.0
  %v3554 = vadd.f32 %v3552, 1.0
  %v3555 = vrcp.pop %v3553
  %v3556 = vmul.f32 %v3553, %v3555
  %v3557 = vsub.f32 1.0, %v3556
  %v3558 = vmul.f32 %v3555, %v3557
  %v3559 = vadd.f32 %v3555, %v3558
  %vm3560 = vweird.f32 %v3553
  %vm3561 = vweird.f32 %v3555
  %vm3562 = vmor %vm3560, %vm3561
  %v3563 = vsel %vm3562, %v3555, %v3559
  %v3564 = vand.u32 2147483647, %v3553
  %vm3565 = vcmp.eq.f32.partialorder %v3564, 8.507059e+37
  %v3566 = vand.u32 %v3553, 2147483648
  %v3567 = vor.u32 1.1754944e-38, %v3566
  %v3568 = vsel %vm3565, %v3567, %v3563
  %v3569 = vmul.f32 1.0, %v3568
  %v3570 = vrcp.pop %v3554
  %v3571 = vmul.f32 %v3554, %v3570
  %v3572 = vsub.f32 1.0, %v3571
  %v3573 = vmul.f32 %v3570, %v3572
  %v3574 = vadd.f32 %v3570, %v3573
  %vm3575 = vweird.f32 %v3554
  %vm3576 = vweird.f32 %v3570
  %vm3577 = vmor %vm3575, %vm3576
  %v3578 = vsel %vm3577, %v3570, %v3574
  %v3579 = vand.u32 2147483647, %v3554
  %vm3580 = vcmp.eq.f32.partialorder %v3579, 8.507059e+37
  %v3581 = vand.u32 %v3554, 2147483648
  %v3582 = vor.u32 1.1754944e-38, %v3581
  %v3583 = vsel %vm3580, %v3582, %v3578
  %v3584 = vmul.f32 1.0, %v3583
  %v3585 = vtanh.pop %v3503
  %v3586 = vtanh.pop %v3507
  %v3587 = vxor.u32 %v3504, 2147483648
  %v3588 = vxor.u32 %v3508, 2147483648
  %v3589 = vmul.f32 %v3587, 1.442695
  %v3590 = vpow.pop %v3589
  %v3591 = vmul.f32 %v3588, 1.442695
  %v3592 = vpow.pop %v3591
  %v3593 = vadd.f32 %v3590, 1.0
  %v3594 = vadd.f32 %v3592, 1.0
  %v3595 = vrcp.pop %v3593
  %v3596 = vmul.f32 %v3593, %v3595
  %v3597 = vsub.f32 1.0, %v3596
  %v3598 = vmul.f32 %v3595, %v3597
  %v3599 = vadd.f32 %v3595, %v3598
  %vm3600 = vweird.f32 %v3593
  %vm3601 = vweird.f32 %v3595
  %vm3602 = vmor %vm3600, %vm3601
  %v3603 = vsel %vm3602, %v3595, %v3599
  %v3604 = vand.u32 2147483647, %v3593
  %vm3605 = vcmp.eq.f32.partialorder %v3604, 8.507059e+37
  %v3606 = vand.u32 %v3593, 2147483648
  %v3607 = vor.u32 1.1754944e-38, %v3606
  %v3608 = vsel %vm3605, %v3607, %v3603
  %v3609 = vmul.f32 1.0, %v3608
  %v3610 = vrcp.pop %v3594
  %v3611 = vmul.f32 %v3594, %v3610
  %v3612 = vsub.f32 1.0, %v3611
  %v3613 = vmul.f32 %v3610, %v3612
  %v3614 = vadd.f32 %v3610, %v3613
  %vm3615 = vweird.f32 %v3594
  %vm3616 = vweird.f32 %v3610
  %vm3617 = vmor %vm3615, %vm3616
  %v3618 = vsel %vm3617, %v3610, %v3614
  %v3619 = vand.u32 2147483647, %v3594
  %vm3620 = vcmp.eq.f32.partialorder %v3619, 8.507059e+37
  %v3621 = vand.u32 %v3594, 2147483648
  %v3622 = vor.u32 1.1754944e-38, %v3621
  %v3623 = vsel %vm3620, %v3622, %v3618
  %v3624 = vmul.f32 1.0, %v3623
  %v3627 = vrot.slane %v3240, 7
  %v3628 = vrot.slane %v3241, 7
  %v3631 = vmul.f32 %v3569, %v3627
  %v3632 = vmul.f32 %v3584, %v3628
  %v3633 = vmul.f32 %v3531, %v3585
  %v3634 = vmul.f32 %v3546, %v3586
  %v3635 = vadd.f32 %v3631, %v3633
  %v3636 = vadd.f32 %v3632, %v3634
  %v3637 = vtanh.pop %v3635
  %v3638 = vtanh.pop %v3636
  %v3639 = vmul.f32 %v3609, %v3637
  %v3640 = vmul.f32 %v3624, %v3638
  %v3641 = vpack.c.bf16 %v3639, %v3639
  %v3642 = vpack.c.bf16 %v3640, %v3640
  %v3643 = vpack.c.bf16 %v3428, %v3428
  %3644 = vmatpush.bf16.msra.mxu0 %v652
  %3645 = vmatpush.bf16.msra.mxu0 %v648
  %3646 = vmatpush.bf16.msra.mxu0 %v644
  %3647 = vmatpush.bf16.msra.mxu0 %v640
  %3648 = vmatpush.bf16.msra.mxu0 %v636
  %3649 = vmatpush.bf16.msra.mxu0 %v632
  %3650 = vmatpush.bf16.msra.mxu0 %v628
  %3651 = vmatpush.bf16.msra.mxu0 %v624
  %3652 = vmatmul.bf16.gmra.mxu0 %v3643
  %v3653 = vpop.f32.mrf.mxu0
  %v3654 = vadd.f32 0.0, %v3653
  %v3655 = vpop.f32.mrf.mxu0
  %3656 = vdwg.mxu0
  %3657 = vmatpush.bf16.msra.mxu0 %v653
  %3658 = vmatpush.bf16.msra.mxu0 %v649
  %3659 = vmatpush.bf16.msra.mxu0 %v645
  %3660 = vmatpush.bf16.msra.mxu0 %v641
  %3661 = vmatpush.bf16.msra.mxu0 %v637
  %3662 = vmatpush.bf16.msra.mxu0 %v633
  %3663 = vmatpush.bf16.msra.mxu0 %v629
  %3664 = vmatpush.bf16.msra.mxu0 %v625
  %3665 = vmatmul.bf16.gmra.mxu0 %v3643
  %v3666 = vpop.f32.mrf.mxu0
  %v3667 = vadd.f32 0.0, %v3666
  %v3668 = vpop.f32.mrf.mxu0
  %3669 = vdwg.mxu0
  %3670 = vmatpush.bf16.msra.mxu0 %v654
  %3671 = vmatpush.bf16.msra.mxu0 %v650
  %3672 = vmatpush.bf16.msra.mxu0 %v646
  %3673 = vmatpush.bf16.msra.mxu0 %v642
  %3674 = vmatpush.bf16.msra.mxu0 %v638
  %3675 = vmatpush.bf16.msra.mxu0 %v634
  %3676 = vmatpush.bf16.msra.mxu0 %v630
  %3677 = vmatpush.bf16.msra.mxu0 %v626
  %3678 = vmatmul.bf16.gmra.mxu0 %v3643
  %v3679 = vpop.f32.mrf.mxu0
  %v3680 = vadd.f32 0.0, %v3679
  %v3681 = vpop.f32.mrf.mxu0
  %3682 = vdwg.mxu0
  %3683 = vmatpush.bf16.msra.mxu0 %v655
  %3684 = vmatpush.bf16.msra.mxu0 %v651
  %3685 = vmatpush.bf16.msra.mxu0 %v647
  %3686 = vmatpush.bf16.msra.mxu0 %v643
  %3687 = vmatpush.bf16.msra.mxu0 %v639
  %3688 = vmatpush.bf16.msra.mxu0 %v635
  %3689 = vmatpush.bf16.msra.mxu0 %v631
  %3690 = vmatpush.bf16.msra.mxu0 %v627
  %3691 = vmatmul.bf16.gmra.mxu0 %v3643
  %v3692 = vpop.f32.mrf.mxu0
  %v3693 = vadd.f32 0.0, %v3692
  %v3694 = vpop.f32.mrf.mxu0
  %3695 = vdwg.mxu0
  %v3698 = vunpack.c.l.b16 %v3641
  %v3699 = vunpack.c.l.b16 %v3642
  %v3700 = vrot.slane %v3698, 7
  %v3701 = vrot.slane %v3699, 6
  %v3702 = vsel %vm745, %v3701, %v3700
  %v3703 = vpack.c.b16 %v3702, %v3702
  %3705 = vmatpush.bf16.msra.mxu0 %v873
  %3706 = vmatpush.bf16.msra.mxu0 %v869
  %3707 = vmatpush.bf16.msra.mxu0 %v865
  %3708 = vmatpush.bf16.msra.mxu0 %v861
  %3709 = vmatpush.bf16.msra.mxu0 %v857
  %3710 = vmatpush.bf16.msra.mxu0 %v853
  %3711 = vmatpush.bf16.msra.mxu0 %v849
  %3712 = vmatpush.bf16.msra.mxu0 %v845
  %3713 = vmatmul.bf16.gmra.mxu0 %v3703
  %v3714 = vpop.f32.mrf.mxu0
  %v3715 = vadd.f32 %v3654, %v3714
  %v3716 = vpop.f32.mrf.mxu0
  %3717 = vdwg.mxu0
  %3718 = vmatpush.bf16.msra.mxu0 %v874
  %3719 = vmatpush.bf16.msra.mxu0 %v870
  %3720 = vmatpush.bf16.msra.mxu0 %v866
  %3721 = vmatpush.bf16.msra.mxu0 %v862
  %3722 = vmatpush.bf16.msra.mxu0 %v858
  %3723 = vmatpush.bf16.msra.mxu0 %v854
  %3724 = vmatpush.bf16.msra.mxu0 %v850
  %3725 = vmatpush.bf16.msra.mxu0 %v846
  %3726 = vmatmul.bf16.gmra.mxu0 %v3703
  %v3727 = vpop.f32.mrf.mxu0
  %v3728 = vadd.f32 %v3667, %v3727
  %v3729 = vpop.f32.mrf.mxu0
  %3730 = vdwg.mxu0
  %3731 = vmatpush.bf16.msra.mxu0 %v875
  %3732 = vmatpush.bf16.msra.mxu0 %v871
  %3733 = vmatpush.bf16.msra.mxu0 %v867
  %3734 = vmatpush.bf16.msra.mxu0 %v863
  %3735 = vmatpush.bf16.msra.mxu0 %v859
  %3736 = vmatpush.bf16.msra.mxu0 %v855
  %3737 = vmatpush.bf16.msra.mxu0 %v851
  %3738 = vmatpush.bf16.msra.mxu0 %v847
  %3739 = vmatmul.bf16.gmra.mxu0 %v3703
  %v3740 = vpop.f32.mrf.mxu0
  %v3741 = vadd.f32 %v3680, %v3740
  %v3742 = vpop.f32.mrf.mxu0
  %3743 = vdwg.mxu0
  %3744 = vmatpush.bf16.msra.mxu0 %v876
  %3745 = vmatpush.bf16.msra.mxu0 %v872
  %3746 = vmatpush.bf16.msra.mxu0 %v868
  %3747 = vmatpush.bf16.msra.mxu0 %v864
  %3748 = vmatpush.bf16.msra.mxu0 %v860
  %3749 = vmatpush.bf16.msra.mxu0 %v856
  %3750 = vmatpush.bf16.msra.mxu0 %v852
  %3751 = vmatpush.bf16.msra.mxu0 %v848
  %3752 = vmatmul.bf16.gmra.mxu0 %v3703
  %v3753 = vpop.f32.mrf.mxu0
  %v3754 = vadd.f32 %v3693, %v3753
  %v3755 = vpop.f32.mrf.mxu0
  %3756 = vdwg.mxu0
  %v3757 = vadd.f32 %v3715, %v42
  %v3758 = vadd.f32 %v3728, %v43
  %v3759 = vadd.f32 %v3741, %v44
  %v3760 = vadd.f32 %v3754, %v45
  %v3761 = vxor.u32 %v3757, 2147483648
  %v3762 = vmul.f32 %v3761, 1.442695
  %v3763 = vpow.pop %v3762
  %v3764 = vadd.f32 %v3763, 1.0
  %v3765 = vrcp.pop %v3764
  %v3766 = vmul.f32 %v3764, %v3765
  %v3767 = vsub.f32 1.0, %v3766
  %v3768 = vmul.f32 %v3765, %v3767
  %v3769 = vadd.f32 %v3765, %v3768
  %vm3770 = vweird.f32 %v3764
  %vm3771 = vweird.f32 %v3765
  %vm3772 = vmor %vm3770, %vm3771
  %v3773 = vsel %vm3772, %v3765, %v3769
  %v3774 = vand.u32 2147483647, %v3764
  %vm3775 = vcmp.eq.f32.partialorder %v3774, 8.507059e+37
  %v3776 = vand.u32 %v3764, 2147483648
  %v3777 = vor.u32 1.1754944e-38, %v3776
  %v3778 = vsel %vm3775, %v3777, %v3773
  %v3779 = vmul.f32 1.0, %v3778
  %v3780 = vxor.u32 %v3758, 2147483648
  %v3781 = vmul.f32 %v3780, 1.442695
  %v3782 = vpow.pop %v3781
  %v3783 = vadd.f32 %v3782, 1.0
  %v3784 = vrcp.pop %v3783
  %v3785 = vmul.f32 %v3783, %v3784
  %v3786 = vsub.f32 1.0, %v3785
  %v3787 = vmul.f32 %v3784, %v3786
  %v3788 = vadd.f32 %v3784, %v3787
  %vm3789 = vweird.f32 %v3783
  %vm3790 = vweird.f32 %v3784
  %vm3791 = vmor %vm3789, %vm3790
  %v3792 = vsel %vm3791, %v3784, %v3788
  %v3793 = vand.u32 2147483647, %v3783
  %vm3794 = vcmp.eq.f32.partialorder %v3793, 8.507059e+37
  %v3795 = vand.u32 %v3783, 2147483648
  %v3796 = vor.u32 1.1754944e-38, %v3795
  %v3797 = vsel %vm3794, %v3796, %v3792
  %v3798 = vmul.f32 1.0, %v3797
  %v3799 = vtanh.pop %v3759
  %v3800 = vxor.u32 %v3760, 2147483648
  %v3801 = vmul.f32 %v3800, 1.442695
  %v3802 = vpow.pop %v3801
  %v3803 = vadd.f32 %v3802, 1.0
  %v3804 = vrcp.pop %v3803
  %v3805 = vmul.f32 %v3803, %v3804
  %v3806 = vsub.f32 1.0, %v3805
  %v3807 = vmul.f32 %v3804, %v3806
  %v3808 = vadd.f32 %v3804, %v3807
  %vm3809 = vweird.f32 %v3803
  %vm3810 = vweird.f32 %v3804
  %vm3811 = vmor %vm3809, %vm3810
  %v3812 = vsel %vm3811, %v3804, %v3808
  %v3813 = vand.u32 2147483647, %v3803
  %vm3814 = vcmp.eq.f32.partialorder %v3813, 8.507059e+37
  %v3815 = vand.u32 %v3803, 2147483648
  %v3816 = vor.u32 1.1754944e-38, %v3815
  %v3817 = vsel %vm3814, %v3816, %v3812
  %v3818 = vmul.f32 1.0, %v3817
  %v3819 = vmul.f32 %v3798, %v3426
  %v3820 = vmul.f32 %v3779, %v3799
  %v3821 = vadd.f32 %v3819, %v3820
  %v3822 = vtanh.pop %v3821
  %v3823 = vmul.f32 %v3818, %v3822
  %v3826 = vrot.slane %v3640, 7
  %3829 = vst [vmem:[#allocation2 - $0x7] sm:$0x80] %v3639
  %3830 = vst [vmem:[#allocation2 + $0x1] sm:$0x1] %v3826
  %v3833 = vrot.slane %v3636, 7
  %3836 = vst [vmem:[#allocation3 - $0x7] sm:$0x80] %v3635
  %3837 = vst [vmem:[#allocation3 + $0x1] sm:$0x1] %v3833
  %3838 = vst [vmem:[%s35] sm:$0x3] %v3823
  %3839 = vst [vmem:[%s38] sm:$0x3] %v3821
  // Predicated region
  $region34: #{lstm_forward.1} parent=0 // pred_check
    %p3840 = pneg %p26
  $region35: #{lstm_forward.1} parent=0 // pred_check_branch
    %3842 = sbr.rel (%p3840) target = $region37
  $region36: #{lstm_forward.1} parent=0 // pred_region
    %v3843 = vpack.c.bf16 %v3823, %v3823
    %v3844 = vld [vmem:[%s5] sm:$0xf]
    %v3845 = vld [vmem:[%s5 + $0x4] sm:$0xf]
    %v3846 = vld [vmem:[%s5 + $0x8] sm:$0xf]
    %v3847 = vld [vmem:[%s5 + $0xc] sm:$0xf]
    %v3848 = vld [vmem:[%s5 + $0x10] sm:$0xf]
    %v3849 = vld [vmem:[%s5 + $0x14] sm:$0xf]
    %v3850 = vld [vmem:[%s5 + $0x18] sm:$0xf]
    %v3851 = vld [vmem:[%s5 + $0x1c] sm:$0xf]
    %v3852 = vld [vmem:[%s5 + $0x20] sm:$0xf]
    %v3853 = vld [vmem:[%s5 + $0x24] sm:$0xf]
    %v3854 = vld [vmem:[%s5 + $0x28] sm:$0xf]
    %v3855 = vld [vmem:[%s5 + $0x2c] sm:$0xf]
    %v3856 = vld [vmem:[%s5 + $0x30] sm:$0xf]
    %v3857 = vld [vmem:[%s5 + $0x34] sm:$0xf]
    %v3858 = vld [vmem:[%s5 + $0x38] sm:$0xf]
    %v3859 = vld [vmem:[%s5 + $0x3c] sm:$0xf]
    %v3860 = vld [vmem:[%s6] sm:$0x1]
    %v3862 = vperm.slane %v3860, 0
    %v3880 = vunpack.c.l.b16 %v3844
    %v3881 = vunpack.c.l.b16 %v3845
    %v3882 = vunpack.c.l.b16 %v3846
    %v3883 = vunpack.c.l.b16 %v3847
    %v3884 = vunpack.c.l.b16 %v3848
    %v3885 = vunpack.c.l.b16 %v3849
    %v3886 = vunpack.c.l.b16 %v3850
    %v3887 = vunpack.c.l.b16 %v3851
    %v3888 = vunpack.c.l.b16 %v3852
    %v3889 = vunpack.c.l.b16 %v3853
    %v3890 = vunpack.c.l.b16 %v3854
    %v3891 = vunpack.c.l.b16 %v3855
    %v3892 = vunpack.c.l.b16 %v3856
    %v3893 = vunpack.c.l.b16 %v3857
    %v3894 = vunpack.c.l.b16 %v3858
    %v3895 = vunpack.c.l.b16 %v3859
    %v3896 = vpack.c.b16 %v3881, %v3880
    %v3897 = vpack.c.b16 %v3883, %v3882
    %v3898 = vpack.c.b16 %v3885, %v3884
    %v3899 = vpack.c.b16 %v3887, %v3886
    %v3900 = vpack.c.b16 %v3889, %v3888
    %v3901 = vpack.c.b16 %v3891, %v3890
    %v3902 = vpack.c.b16 %v3893, %v3892
    %v3903 = vpack.c.b16 %v3895, %v3894
    %3912 = vmatpush.bf16.msra.mxu0 %v3903
    %3913 = vmatpush.bf16.msra.mxu0 %v3902
    %3914 = vmatpush.bf16.msra.mxu0 %v3901
    %3915 = vmatpush.bf16.msra.mxu0 %v3900
    %3916 = vmatpush.bf16.msra.mxu0 %v3899
    %3917 = vmatpush.bf16.msra.mxu0 %v3898
    %3918 = vmatpush.bf16.msra.mxu0 %v3897
    %3919 = vmatpush.bf16.msra.mxu0 %v3896
    %3920 = vmatmul.bf16.gmra.mxu0 %v3843
    %v3921 = vpop.f32.mrf.mxu0
    %v3922 = vadd.f32 %v3862, %v3921
    %v3923 = vpop.f32.mrf.mxu0
    %3924 = vdwg.mxu0
    %3925 = vst [vmem:[%s7] sm:$0x3] %v3922
  $region37: #{lstm_forward.1} parent=0 // pred_fallthru
    _
  // Predicated region
  $region38: #{lstm_forward.1} parent=0 // pred_check
    _
  $region39: #{lstm_forward.1} parent=0 // pred_check_branch
    %3927 = sbr.rel (0) target = $region41
  $region40: #{lstm_forward.1} parent=0 // pred_region
    _
  $region41: #{lstm_forward.1} parent=0 // pred_fallthru
    _
  // Predicated region
  $region42: #{lstm_forward.1} parent=0 // pred_check
    _
  $region43: #{lstm_forward.1} parent=0 // pred_check_branch
    %3929 = sbr.rel (0) target = $region45
  $region44: #{lstm_forward.1} parent=0 // pred_region
    _
  $region45: #{lstm_forward.1} parent=0 // pred_fallthru
    _

</llo_original>
